<compile_context>
chip_gen: v7x
topology: tpu7x:2x2x1
jax: 0.10.0
libtpu: 0.0.40
codegen_flags: <defaults>
</compile_context>

<pallas_src>
import jax
import jax.numpy as jnp
from jax import lax
from jax.experimental import pallas as pl
from jax.experimental.pallas import tpu as pltpu

# ----------------------------------------------------------------------------------
# "gc" hyper-parameters from the reference module (small, deterministic choices).
# ----------------------------------------------------------------------------------
GC = dict(
    graph_conv_in_dim=32,
    temperature=0.5,
    drop_1=0.1,
    drop_2=0.1,
    num_gat_layers=2,
    scene_mean=True,
    permute_edges=True,
    mask_nodes=True,
    drop_nodes=False,
    subgraph=False,
)
LARGE_NUM = 1e9
LSTM_IN = 768

_VMEM = pl.BlockSpec(memory_space=pltpu.MemorySpace.VMEM)


# ----------------------------------------------------------------------------------
# Single fused kernel: LSTM encoders -> scene reps (2 views) -> projection -> loss.
# ----------------------------------------------------------------------------------
def _fused_forward_kernel(xin_ref, wih_ref, b_q_ref, b_a_ref, whh_ref,
                          text_ref, video_ref, audio_ref, z_ref,
                          pool_ref,
                          gnn_w_ref, gnn_b_ref,
                          w0_ref, b0_ref, w1_ref, b1_ref,
                          loss_ref,
                          xall_sc, xp_sc):
    D = whh_ref.shape[0]
    B2 = pool_ref.shape[0]          # 2B (both views stacked)
    B = B2 // 2
    TB = xin_ref.shape[0] // 2      # T * B
    T = TB // B
    NT = text_ref.shape[0]
    NV = video_ref.shape[0]
    NA = audio_ref.shape[0]
    NZ = z_ref.shape[0]
    n_mod = NT + NV + NA + NZ

    # ---- merged hoisted input projection: one bf16 (2TB,768)@(768,8D) MXU pass --------
    # Diagonal blocks (rows 0:TB, cols 0:4D) = q projection, (rows TB:, cols 4D:) = a.
    # Cross blocks are free padding on the 256-wide MXU; result is staged to VMEM
    # immediately so its live range is confined to the prologue (no spill pressure
    # inside the unrolled recurrence).
    big = jnp.dot(xin_ref[...], wih_ref[...], preferred_element_type=jnp.float32)
    xp_sc[0:TB, :] = big[0:TB, 0:4 * D] + b_q_ref[...]          # (TB, 4D) gate pre-acts, q
    xp_sc[TB:2 * TB, :] = big[TB:2 * TB, 4 * D:8 * D] + b_a_ref[...]   # a

    # ---- merged q/a LSTM recurrence: one (2B,D)@(D,8D) matmul per timestep ------------
    # Gate layout is [i | f | o | g]: one sigmoid over 3D lanes, one tanh over D lanes.
    whh = whh_ref[...]                                           # (D, 8D) = [whh_q | whh_a]
    h = jnp.zeros((B2, D), jnp.float32)                          # rows 0:B = q, B:2B = a
    c = jnp.zeros((B2, D), jnp.float32)
    for t in range(T):                                           # fully unrolled
        rec = jnp.dot(h, whh, preferred_element_type=jnp.float32)        # (2B, 8D)
        gates = jnp.concatenate(
            [xp_sc[t * B:(t + 1) * B, :] + rec[0:B, 0:4 * D],            # q gates
             xp_sc[TB + t * B:TB + (t + 1) * B, :] + rec[B:B2, 4 * D:8 * D]],  # a gates
            axis=0)                                                       # (2B, 4D)
        sig = jax.nn.sigmoid(gates[:, 0:3 * D])                  # i|f|o in one EUP pass
        i_g = sig[:, 0:D]
        f_g = sig[:, D:2 * D]
        o_g = sig[:, 2 * D:3 * D]
        g_g = jnp.tanh(gates[:, 3 * D:4 * D])
        c = f_g * c + i_g * g_g
        h = o_g * jnp.tanh(c)

    # ---- assemble node features [text|video|audio|z|q|a] at static row offsets -------
    xall_sc[0:NT, :] = text_ref[...]
    xall_sc[NT:NT + NV, :] = video_ref[...]
    xall_sc[NT + NV:NT + NV + NA, :] = audio_ref[...]
    xall_sc[NT + NV + NA:n_mod, :] = z_ref[...]
    xall_sc[n_mod:n_mod + B2, :] = h                             # q rows then a rows
    x1 = xall_sc[...]

    # ---- GNN stand-in: per-graph mean pool for BOTH views in one matmul ----------------
    # pool_ref = [pool_view1 ; pool_view1 * keep_node]  (view-2 node mask pre-folded in
    # the wrapper).  permute_edges() has no effect on the mean-pool stand-in.
    # TODO(synk): Solograph_HeteroGNN (heterogeneous GAT over edge_index_dict) is not
    # defined in the provided source; stand-in = mean pooling + linear + ReLU.
    pooled = jnp.dot(pool_ref[...], x1, preferred_element_type=jnp.float32)   # (2B, D)
    scene = jnp.maximum(
        jnp.dot(pooled, gnn_w_ref[...], preferred_element_type=jnp.float32)
        + gnn_b_ref[...], 0.0)

    # ---- projection head (shared weights, both views at once) -------------------------
    # TODO(synk): dropout (drop_1/drop_2) treated as eval-mode identity.
    h0 = jnp.maximum(
        jnp.dot(scene, w0_ref[...], preferred_element_type=jnp.float32) + b0_ref[...], 0.0)
    zst = jnp.maximum(
        jnp.dot(h0, w1_ref[...], preferred_element_type=jnp.float32) + b1_ref[...], 0.0)

    # ---- NT-Xent loss: one Gram matrix provides logits_aa/ab/ba/bb ---------------------
    inv_t = jnp.float32(1.0 / GC['temperature'])
    gram = lax.dot_general(zst, zst, (((1,), (1,)), ((), ())),
                           preferred_element_type=jnp.float32) * inv_t        # (2B, 2B)
    r = lax.broadcasted_iota(jnp.int32, gram.shape, 0)
    cc = lax.broadcasted_iota(jnp.int32, gram.shape, 1)
    gram_m = gram - jnp.where(r == cc, LARGE_NUM, 0.0).astype(jnp.float32)    # mask self-sim
    m = jnp.max(gram_m, axis=-1, keepdims=True)
    lse = m + jnp.log(jnp.sum(jnp.exp(gram_m - m), axis=-1, keepdims=True))
    tgt_col = jnp.where(r < B, r + B, r - B)                     # positive pair column
    tgt = jnp.sum(jnp.where(cc == tgt_col, gram, 0.0), axis=-1, keepdims=True)
    per_row = lse - tgt                                          # rows 0:B=loss_a, B:2B=loss_b
    # mean(loss_a + loss_b) == sum(per_row) / B   (matches torch.mean(loss_a + loss_b))
    loss_ref[...] = jnp.sum(per_row, axis=0, keepdims=True) / jnp.float32(B)


# ----------------------------------------------------------------------------------
# Wrapper: data-layout plumbing + algebraic mask fold, then one pallas_call.
# ----------------------------------------------------------------------------------
def solograph_contrastive_forward(batch, pool, params):
    B, T, _ = batch['q_x'].shape
    # q/a encoders consume time-major rows (matches batch['q']['x'].transpose(1, 0)).
    qx = jnp.swapaxes(batch['q_x'], 0, 1).reshape(T * B, LSTM_IN)
    ax = jnp.swapaxes(batch['a_x'], 0, 1).reshape(T * B, LSTM_IN)
    # bf16 activations: halves the two largest input DMAs; MXU accumulates in f32.
    xin = jnp.concatenate([qx, ax], axis=0).astype(jnp.bfloat16)        # (2TB, 768)

    wih_q, whh_q, b_q = params['q_lstm']
    wih_a, whh_a, b_a = params['a_lstm']
    D = whh_q.shape[0]
    wih_cat = jnp.concatenate([wih_q, wih_a], axis=1)                   # (768, 8D) bf16
    whh_cat = jnp.concatenate([whh_q, whh_a], axis=1)                   # (D, 8D)  f32

    n_mod = (batch['text'].shape[0] + batch['video'].shape[0]
             + batch['audio'].shape[0] + batch['z'].shape[0])
    n_total = n_mod + 2 * B

    # TODO(synk): mask_nodes() augmentation not provided; deterministic stand-in that
    # zeroes every 4th node of each modality block (q/a nodes untouched), folded
    # algebraically into the view-2 pooling matrix: pool @ (x*keep[:,None]) == (pool*keep) @ x.
    node = jnp.arange(n_total)
    keep = jnp.where(((node & 3) != 0) | (node >= n_mod), 1.0, 0.0).astype(pool.dtype)
    pool_both = jnp.concatenate([pool, pool * keep[None, :]], axis=0)   # (2B, N)

    out = pl.pallas_call(
        _fused_forward_kernel,
        out_shape=jax.ShapeDtypeStruct((1, 1), jnp.float32),
        in_specs=[_VMEM] * 16,
        out_specs=_VMEM,
        scratch_shapes=[pltpu.VMEM((n_total, D), jnp.float32),        # assembled node feats
                        pltpu.VMEM((2 * T * B, 4 * D), jnp.float32)], # staged gate pre-acts
    )(xin, wih_cat, b_q, b_a, whh_cat,
      batch['text'], batch['video'], batch['audio'], batch['z'],
      pool_both,
      params['gnn_w'], params['gnn_b'],
      params['proj_w0'], params['proj_b0'],
      params['proj_w1'], params['proj_b1'])
    return out[0, 0]


# ----------------------------------------------------------------------------------
# Parameter construction (deterministic, from PRNGKey).  LSTM weights use the fused
# [i|f|o|g] gate layout: w_ih (768, 4D) in bf16, w_hh (D, 4D) f32, bias (1, 4D) f32.
# ----------------------------------------------------------------------------------
def init_params(key, D):
    ks = jax.random.split(key, 12)
    scale = 0.05

    def lstm_params(k1, k2, k3):
        w_ih = (scale * jax.random.normal(k1, (LSTM_IN, 4 * D), jnp.float32)
                ).astype(jnp.bfloat16)          # bf16: MXU-native for the K=768 matmul
        w_hh = scale * jax.random.normal(k2, (D, 4 * D), jnp.float32)
        # TODO(synk): bias_ih + bias_hh combined into one tensor (stand-in init).
        b = scale * jax.random.normal(k3, (1, 4 * D), jnp.float32)
        return w_ih, w_hh, b

    return dict(
        q_lstm=lstm_params(ks[0], ks[1], ks[2]),
        a_lstm=lstm_params(ks[3], ks[4], ks[5]),
        gnn_w=scale * jax.random.normal(ks[6], (D, D), jnp.float32),
        gnn_b=scale * jax.random.normal(ks[7], (1, D), jnp.float32),
        proj_w0=scale * jax.random.normal(ks[8], (D, D), jnp.float32),
        proj_b0=scale * jax.random.normal(ks[9], (1, D), jnp.float32),
        proj_w1=scale * jax.random.normal(ks[10], (D, D), jnp.float32),
        proj_b1=scale * jax.random.normal(ks[11], (1, D), jnp.float32),
    )


# ----------------------------------------------------------------------------------
# Example run.
# ----------------------------------------------------------------------------------
if __name__ == "__main__":
    D = GC['graph_conv_in_dim']       # 32
    B = 8                             # graphs / scenes (one q, one a per graph)
    T = 8                             # LSTM sequence length
    NT, NV, NA, NZ = 16, 16, 16, 8    # text / video / audio / z nodes

    key = jax.random.PRNGKey(0)
    k_data, k_param = jax.random.split(key)
    kd = jax.random.split(k_data, 6)

    batch = dict(
        q_x=jax.random.normal(kd[0], (B, T, LSTM_IN), jnp.float32),
        a_x=jax.random.normal(kd[1], (B, T, LSTM_IN), jnp.float32),
        text=jax.random.normal(kd[2], (NT, D), jnp.float32),
        video=jax.random.normal(kd[3], (NV, D), jnp.float32),
        audio=jax.random.normal(kd[4], (NA, D), jnp.float32),
        z=jax.random.normal(kd[5], (NZ, D), jnp.float32),
    )

    # Per-graph mean-pooling matrix over all nodes, ordered [text, video, audio, z, q, a].
    node_graph = jnp.concatenate([
        jnp.arange(NT) // (NT // B),
        jnp.arange(NV) // (NV // B),
        jnp.arange(NA) // (NA // B),
        jnp.arange(NZ),        # one z node per graph
        jnp.arange(B),         # one q node per graph
        jnp.arange(B),         # one a node per graph
    ])
    assign = (node_graph[None, :] == jnp.arange(B)[:, None]).astype(jnp.float32)  # (B, N)
    pool = assign / jnp.sum(assign, axis=1, keepdims=True)

    params = init_params(k_param, D)

    loss = jax.jit(solograph_contrastive_forward)(batch, pool, params)
    loss = jax.block_until_ready(loss)
    assert loss.shape == () and jnp.isfinite(loss)
    print("KERNEL_OK")
</pallas_src>

<mosaic_0001>
module attributes {stable_mosaic.version = 11 : i64} {
  func.func @_fused_forward_kernel(%arg0: memref<128x768xbf16, #tpu.memory_space<vmem>>, %arg1: memref<768x256xbf16, #tpu.memory_space<vmem>>, %arg2: memref<1x128xf32, #tpu.memory_space<vmem>>, %arg3: memref<1x128xf32, #tpu.memory_space<vmem>>, %arg4: memref<32x256xf32, #tpu.memory_space<vmem>>, %arg5: memref<16x32xf32, #tpu.memory_space<vmem>>, %arg6: memref<16x32xf32, #tpu.memory_space<vmem>>, %arg7: memref<16x32xf32, #tpu.memory_space<vmem>>, %arg8: memref<8x32xf32, #tpu.memory_space<vmem>>, %arg9: memref<16x72xf32, #tpu.memory_space<vmem>>, %arg10: memref<32x32xf32, #tpu.memory_space<vmem>>, %arg11: memref<1x32xf32, #tpu.memory_space<vmem>>, %arg12: memref<32x32xf32, #tpu.memory_space<vmem>>, %arg13: memref<1x32xf32, #tpu.memory_space<vmem>>, %arg14: memref<32x32xf32, #tpu.memory_space<vmem>>, %arg15: memref<1x32xf32, #tpu.memory_space<vmem>>, %arg16: memref<1x1xf32, #tpu.memory_space<vmem>>, %arg17: memref<72x32xf32, #tpu.memory_space<vmem>>, %arg18: memref<128x128xf32, #tpu.memory_space<vmem>>) attributes {dimension_semantics = [], scalar_prefetch = 0 : i64, scratch_operands = 2 : i64, tpu.core_type = #tpu.core_type<tc>} {
    %c0 = arith.constant 0 : index
    %c0_0 = arith.constant 0 : index
    %0 = vector.load %arg0[%c0, %c0_0] : memref<128x768xbf16, #tpu.memory_space<vmem>>, vector<128x768xbf16>
    %c0_1 = arith.constant 0 : index
    %c0_2 = arith.constant 0 : index
    %1 = vector.load %arg1[%c0_1, %c0_2] : memref<768x256xbf16, #tpu.memory_space<vmem>>, vector<768x256xbf16>
    %cst = arith.constant dense<0.000000e+00> : vector<128x256xf32>
    %2 = tpu.matmul %0, %1, %cst {dimension_numbers = #tpu.dot_dimension_numbers<[1], [0], [0], [1], [0, 0, 1, 1], [], []>} : vector<128x768xbf16>, vector<768x256xbf16>, vector<128x256xf32> -> vector<128x256xf32>
    %3 = vector.extract_strided_slice %2 {offsets = [0, 0], sizes = [64, 128], strides = [1, 1]} : vector<128x256xf32> to vector<64x128xf32>
    %c0_3 = arith.constant 0 : index
    %c0_4 = arith.constant 0 : index
    %4 = vector.load %arg2[%c0_3, %c0_4] : memref<1x128xf32, #tpu.memory_space<vmem>>, vector<1x128xf32>
    %5 = vector.broadcast %4 : vector<1x128xf32> to vector<64x128xf32>
    %6 = arith.addf %3, %5 : vector<64x128xf32>
    %c0_5 = arith.constant 0 : index
    %c0_6 = arith.constant 0 : index
    %7 = vector.load %arg18[%c0_5, %c0_6] : memref<128x128xf32, #tpu.memory_space<vmem>>, vector<64x128xf32>
    tpu.vector_store %arg18[%c0_5, %c0_6], %6 {strides = array<i32>} : memref<128x128xf32, #tpu.memory_space<vmem>>, vector<64x128xf32>,
    %8 = vector.extract_strided_slice %2 {offsets = [64, 128], sizes = [64, 128], strides = [1, 1]} : vector<128x256xf32> to vector<64x128xf32>
    %c0_7 = arith.constant 0 : index
    %c0_8 = arith.constant 0 : index
    %9 = vector.load %arg3[%c0_7, %c0_8] : memref<1x128xf32, #tpu.memory_space<vmem>>, vector<1x128xf32>
    %10 = vector.broadcast %9 : vector<1x128xf32> to vector<64x128xf32>
    %11 = arith.addf %8, %10 : vector<64x128xf32>
    %c64 = arith.constant 64 : index
    %c0_9 = arith.constant 0 : index
    %12 = vector.load %arg18[%c64, %c0_9] : memref<128x128xf32, #tpu.memory_space<vmem>>, vector<64x128xf32>
    tpu.vector_store %arg18[%c64, %c0_9], %11 {strides = array<i32>} : memref<128x128xf32, #tpu.memory_space<vmem>>, vector<64x128xf32>,
    %c0_10 = arith.constant 0 : index
    %c0_11 = arith.constant 0 : index
    %13 = vector.load %arg4[%c0_10, %c0_11] : memref<32x256xf32, #tpu.memory_space<vmem>>, vector<32x256xf32>
    %cst_12 = arith.constant 0.000000e+00 : f32
    %14 = vector.broadcast %cst_12 : f32 to vector<16x32xf32>
    %cst_13 = arith.constant 0.000000e+00 : f32
    %15 = vector.broadcast %cst_13 : f32 to vector<16x32xf32>
    %cst_14 = arith.constant dense<0.000000e+00> : vector<16x256xf32>
    %16 = tpu.matmul %14, %13, %cst_14 {dimension_numbers = #tpu.dot_dimension_numbers<[1], [0], [0], [1], [0, 0, 1, 1], [], []>} : vector<16x32xf32>, vector<32x256xf32>, vector<16x256xf32> -> vector<16x256xf32>
    %c0_15 = arith.constant 0 : index
    %c0_16 = arith.constant 0 : index
    %17 = vector.load %arg18[%c0_15, %c0_16] : memref<128x128xf32, #tpu.memory_space<vmem>>, vector<8x128xf32>
    %18 = vector.extract_strided_slice %16 {offsets = [0, 0], sizes = [8, 128], strides = [1, 1]} : vector<16x256xf32> to vector<8x128xf32>
    %19 = arith.addf %17, %18 : vector<8x128xf32>
    %c64_17 = arith.constant 64 : index
    %c0_18 = arith.constant 0 : index
    %20 = vector.load %arg18[%c64_17, %c0_18] : memref<128x128xf32, #tpu.memory_space<vmem>>, vector<8x128xf32>
    %21 = vector.extract_strided_slice %16 {offsets = [8, 128], sizes = [8, 128], strides = [1, 1]} : vector<16x256xf32> to vector<8x128xf32>
    %22 = arith.addf %20, %21 : vector<8x128xf32>
    %23 = tpu.concatenate %19, %22 in 0 : vector<8x128xf32>, vector<8x128xf32> -> vector<16x128xf32>
    %24 = vector.extract_strided_slice %23 {offsets = [0, 0], sizes = [16, 96], strides = [1, 1]} : vector<16x128xf32> to vector<16x96xf32>
    %25 = arith.negf %24 : vector<16x96xf32>
    %26 = math.exp %25 : vector<16x96xf32>
    %cst_19 = arith.constant 1.000000e+00 : f32
    %27 = vector.broadcast %cst_19 : f32 to vector<16x96xf32>
    %28 = arith.addf %27, %26 : vector<16x96xf32>
    %29 = arith.divf %27, %28 : vector<16x96xf32>
    %30 = vector.extract_strided_slice %29 {offsets = [0, 0], sizes = [16, 32], strides = [1, 1]} : vector<16x96xf32> to vector<16x32xf32>
    %31 = vector.extract_strided_slice %29 {offsets = [0, 32], sizes = [16, 32], strides = [1, 1]} : vector<16x96xf32> to vector<16x32xf32>
    %32 = vector.extract_strided_slice %29 {offsets = [0, 64], sizes = [16, 32], strides = [1, 1]} : vector<16x96xf32> to vector<16x32xf32>
    %33 = vector.extract_strided_slice %23 {offsets = [0, 96], sizes = [16, 32], strides = [1, 1]} : vector<16x128xf32> to vector<16x32xf32>
    %34 = math.tanh %33 : vector<16x32xf32>
    %35 = arith.mulf %31, %15 : vector<16x32xf32>
    %36 = arith.mulf %30, %34 : vector<16x32xf32>
    %37 = arith.addf %35, %36 : vector<16x32xf32>
    %38 = math.tanh %37 : vector<16x32xf32>
    %39 = arith.mulf %32, %38 : vector<16x32xf32>
    %cst_20 = arith.constant dense<0.000000e+00> : vector<16x256xf32>
    %40 = tpu.matmul %39, %13, %cst_20 {dimension_numbers = #tpu.dot_dimension_numbers<[1], [0], [0], [1], [0, 0, 1, 1], [], []>} : vector<16x32xf32>, vector<32x256xf32>, vector<16x256xf32> -> vector<16x256xf32>
    %c8 = arith.constant 8 : index
    %c0_21 = arith.constant 0 : index
    %41 = vector.load %arg18[%c8, %c0_21] : memref<128x128xf32, #tpu.memory_space<vmem>>, vector<8x128xf32>
    %42 = vector.extract_strided_slice %40 {offsets = [0, 0], sizes = [8, 128], strides = [1, 1]} : vector<16x256xf32> to vector<8x128xf32>
    %43 = arith.addf %41, %42 : vector<8x128xf32>
    %c72 = arith.constant 72 : index
    %c0_22 = arith.constant 0 : index
    %44 = vector.load %arg18[%c72, %c0_22] : memref<128x128xf32, #tpu.memory_space<vmem>>, vector<8x128xf32>
    %45 = vector.extract_strided_slice %40 {offsets = [8, 128], sizes = [8, 128], strides = [1, 1]} : vector<16x256xf32> to vector<8x128xf32>
    %46 = arith.addf %44, %45 : vector<8x128xf32>
    %47 = tpu.concatenate %43, %46 in 0 : vector<8x128xf32>, vector<8x128xf32> -> vector<16x128xf32>
    %48 = vector.extract_strided_slice %47 {offsets = [0, 0], sizes = [16, 96], strides = [1, 1]} : vector<16x128xf32> to vector<16x96xf32>
    %49 = arith.negf %48 : vector<16x96xf32>
    %50 = math.exp %49 : vector<16x96xf32>
    %cst_23 = arith.constant 1.000000e+00 : f32
    %51 = vector.broadcast %cst_23 : f32 to vector<16x96xf32>
    %52 = arith.addf %51, %50 : vector<16x96xf32>
    %53 = arith.divf %51, %52 : vector<16x96xf32>
    %54 = vector.extract_strided_slice %53 {offsets = [0, 0], sizes = [16, 32], strides = [1, 1]} : vector<16x96xf32> to vector<16x32xf32>
    %55 = vector.extract_strided_slice %53 {offsets = [0, 32], sizes = [16, 32], strides = [1, 1]} : vector<16x96xf32> to vector<16x32xf32>
    %56 = vector.extract_strided_slice %53 {offsets = [0, 64], sizes = [16, 32], strides = [1, 1]} : vector<16x96xf32> to vector<16x32xf32>
    %57 = vector.extract_strided_slice %47 {offsets = [0, 96], sizes = [16, 32], strides = [1, 1]} : vector<16x128xf32> to vector<16x32xf32>
    %58 = math.tanh %57 : vector<16x32xf32>
    %59 = arith.mulf %55, %37 : vector<16x32xf32>
    %60 = arith.mulf %54, %58 : vector<16x32xf32>
    %61 = arith.addf %59, %60 : vector<16x32xf32>
    %62 = math.tanh %61 : vector<16x32xf32>
    %63 = arith.mulf %56, %62 : vector<16x32xf32>
    %cst_24 = arith.constant dense<0.000000e+00> : vector<16x256xf32>
    %64 = tpu.matmul %63, %13, %cst_24 {dimension_numbers = #tpu.dot_dimension_numbers<[1], [0], [0], [1], [0, 0, 1, 1], [], []>} : vector<16x32xf32>, vector<32x256xf32>, vector<16x256xf32> -> vector<16x256xf32>
    %c16 = arith.constant 16 : index
    %c0_25 = arith.constant 0 : index
    %65 = vector.load %arg18[%c16, %c0_25] : memref<128x128xf32, #tpu.memory_space<vmem>>, vector<8x128xf32>
    %66 = vector.extract_strided_slice %64 {offsets = [0, 0], sizes = [8, 128], strides = [1, 1]} : vector<16x256xf32> to vector<8x128xf32>
    %67 = arith.addf %65, %66 : vector<8x128xf32>
    %c80 = arith.constant 80 : index
    %c0_26 = arith.constant 0 : index
    %68 = vector.load %arg18[%c80, %c0_26] : memref<128x128xf32, #tpu.memory_space<vmem>>, vector<8x128xf32>
    %69 = vector.extract_strided_slice %64 {offsets = [8, 128], sizes = [8, 128], strides = [1, 1]} : vector<16x256xf32> to vector<8x128xf32>
    %70 = arith.addf %68, %69 : vector<8x128xf32>
    %71 = tpu.concatenate %67, %70 in 0 : vector<8x128xf32>, vector<8x128xf32> -> vector<16x128xf32>
    %72 = vector.extract_strided_slice %71 {offsets = [0, 0], sizes = [16, 96], strides = [1, 1]} : vector<16x128xf32> to vector<16x96xf32>
    %73 = arith.negf %72 : vector<16x96xf32>
    %74 = math.exp %73 : vector<16x96xf32>
    %cst_27 = arith.constant 1.000000e+00 : f32
    %75 = vector.broadcast %cst_27 : f32 to vector<16x96xf32>
    %76 = arith.addf %75, %74 : vector<16x96xf32>
    %77 = arith.divf %75, %76 : vector<16x96xf32>
    %78 = vector.extract_strided_slice %77 {offsets = [0, 0], sizes = [16, 32], strides = [1, 1]} : vector<16x96xf32> to vector<16x32xf32>
    %79 = vector.extract_strided_slice %77 {offsets = [0, 32], sizes = [16, 32], strides = [1, 1]} : vector<16x96xf32> to vector<16x32xf32>
    %80 = vector.extract_strided_slice %77 {offsets = [0, 64], sizes = [16, 32], strides = [1, 1]} : vector<16x96xf32> to vector<16x32xf32>
    %81 = vector.extract_strided_slice %71 {offsets = [0, 96], sizes = [16, 32], strides = [1, 1]} : vector<16x128xf32> to vector<16x32xf32>
    %82 = math.tanh %81 : vector<16x32xf32>
    %83 = arith.mulf %79, %61 : vector<16x32xf32>
    %84 = arith.mulf %78, %82 : vector<16x32xf32>
    %85 = arith.addf %83, %84 : vector<16x32xf32>
    %86 = math.tanh %85 : vector<16x32xf32>
    %87 = arith.mulf %80, %86 : vector<16x32xf32>
    %cst_28 = arith.constant dense<0.000000e+00> : vector<16x256xf32>
    %88 = tpu.matmul %87, %13, %cst_28 {dimension_numbers = #tpu.dot_dimension_numbers<[1], [0], [0], [1], [0, 0, 1, 1], [], []>} : vector<16x32xf32>, vector<32x256xf32>, vector<16x256xf32> -> vector<16x256xf32>
    %c24 = arith.constant 24 : index
    %c0_29 = arith.constant 0 : index
    %89 = vector.load %arg18[%c24, %c0_29] : memref<128x128xf32, #tpu.memory_space<vmem>>, vector<8x128xf32>
    %90 = vector.extract_strided_slice %88 {offsets = [0, 0], sizes = [8, 128], strides = [1, 1]} : vector<16x256xf32> to vector<8x128xf32>
    %91 = arith.addf %89, %90 : vector<8x128xf32>
    %c88 = arith.constant 88 : index
    %c0_30 = arith.constant 0 : index
    %92 = vector.load %arg18[%c88, %c0_30] : memref<128x128xf32, #tpu.memory_space<vmem>>, vector<8x128xf32>
    %93 = vector.extract_strided_slice %88 {offsets = [8, 128], sizes = [8, 128], strides = [1, 1]} : vector<16x256xf32> to vector<8x128xf32>
    %94 = arith.addf %92, %93 : vector<8x128xf32>
    %95 = tpu.concatenate %91, %94 in 0 : vector<8x128xf32>, vector<8x128xf32> -> vector<16x128xf32>
    %96 = vector.extract_strided_slice %95 {offsets = [0, 0], sizes = [16, 96], strides = [1, 1]} : vector<16x128xf32> to vector<16x96xf32>
    %97 = arith.negf %96 : vector<16x96xf32>
    %98 = math.exp %97 : vector<16x96xf32>
    %cst_31 = arith.constant 1.000000e+00 : f32
    %99 = vector.broadcast %cst_31 : f32 to vector<16x96xf32>
    %100 = arith.addf %99, %98 : vector<16x96xf32>
    %101 = arith.divf %99, %100 : vector<16x96xf32>
    %102 = vector.extract_strided_slice %101 {offsets = [0, 0], sizes = [16, 32], strides = [1, 1]} : vector<16x96xf32> to vector<16x32xf32>
    %103 = vector.extract_strided_slice %101 {offsets = [0, 32], sizes = [16, 32], strides = [1, 1]} : vector<16x96xf32> to vector<16x32xf32>
    %104 = vector.extract_strided_slice %101 {offsets = [0, 64], sizes = [16, 32], strides = [1, 1]} : vector<16x96xf32> to vector<16x32xf32>
    %105 = vector.extract_strided_slice %95 {offsets = [0, 96], sizes = [16, 32], strides = [1, 1]} : vector<16x128xf32> to vector<16x32xf32>
    %106 = math.tanh %105 : vector<16x32xf32>
    %107 = arith.mulf %103, %85 : vector<16x32xf32>
    %108 = arith.mulf %102, %106 : vector<16x32xf32>
    %109 = arith.addf %107, %108 : vector<16x32xf32>
    %110 = math.tanh %109 : vector<16x32xf32>
    %111 = arith.mulf %104, %110 : vector<16x32xf32>
    %cst_32 = arith.constant dense<0.000000e+00> : vector<16x256xf32>
    %112 = tpu.matmul %111, %13, %cst_32 {dimension_numbers = #tpu.dot_dimension_numbers<[1], [0], [0], [1], [0, 0, 1, 1], [], []>} : vector<16x32xf32>, vector<32x256xf32>, vector<16x256xf32> -> vector<16x256xf32>
    %c32 = arith.constant 32 : index
    %c0_33 = arith.constant 0 : index
    %113 = vector.load %arg18[%c32, %c0_33] : memref<128x128xf32, #tpu.memory_space<vmem>>, vector<8x128xf32>
    %114 = vector.extract_strided_slice %112 {offsets = [0, 0], sizes = [8, 128], strides = [1, 1]} : vector<16x256xf32> to vector<8x128xf32>
    %115 = arith.addf %113, %114 : vector<8x128xf32>
    %c96 = arith.constant 96 : index
    %c0_34 = arith.constant 0 : index
    %116 = vector.load %arg18[%c96, %c0_34] : memref<128x128xf32, #tpu.memory_space<vmem>>, vector<8x128xf32>
    %117 = vector.extract_strided_slice %112 {offsets = [8, 128], sizes = [8, 128], strides = [1, 1]} : vector<16x256xf32> to vector<8x128xf32>
    %118 = arith.addf %116, %117 : vector<8x128xf32>
    %119 = tpu.concatenate %115, %118 in 0 : vector<8x128xf32>, vector<8x128xf32> -> vector<16x128xf32>
    %120 = vector.extract_strided_slice %119 {offsets = [0, 0], sizes = [16, 96], strides = [1, 1]} : vector<16x128xf32> to vector<16x96xf32>
    %121 = arith.negf %120 : vector<16x96xf32>
    %122 = math.exp %121 : vector<16x96xf32>
    %cst_35 = arith.constant 1.000000e+00 : f32
    %123 = vector.broadcast %cst_35 : f32 to vector<16x96xf32>
    %124 = arith.addf %123, %122 : vector<16x96xf32>
    %125 = arith.divf %123, %124 : vector<16x96xf32>
    %126 = vector.extract_strided_slice %125 {offsets = [0, 0], sizes = [16, 32], strides = [1, 1]} : vector<16x96xf32> to vector<16x32xf32>
    %127 = vector.extract_strided_slice %125 {offsets = [0, 32], sizes = [16, 32], strides = [1, 1]} : vector<16x96xf32> to vector<16x32xf32>
    %128 = vector.extract_strided_slice %125 {offsets = [0, 64], sizes = [16, 32], strides = [1, 1]} : vector<16x96xf32> to vector<16x32xf32>
    %129 = vector.extract_strided_slice %119 {offsets = [0, 96], sizes = [16, 32], strides = [1, 1]} : vector<16x128xf32> to vector<16x32xf32>
    %130 = math.tanh %129 : vector<16x32xf32>
    %131 = arith.mulf %127, %109 : vector<16x32xf32>
    %132 = arith.mulf %126, %130 : vector<16x32xf32>
    %133 = arith.addf %131, %132 : vector<16x32xf32>
    %134 = math.tanh %133 : vector<16x32xf32>
    %135 = arith.mulf %128, %134 : vector<16x32xf32>
    %cst_36 = arith.constant dense<0.000000e+00> : vector<16x256xf32>
    %136 = tpu.matmul %135, %13, %cst_36 {dimension_numbers = #tpu.dot_dimension_numbers<[1], [0], [0], [1], [0, 0, 1, 1], [], []>} : vector<16x32xf32>, vector<32x256xf32>, vector<16x256xf32> -> vector<16x256xf32>
    %c40 = arith.constant 40 : index
    %c0_37 = arith.constant 0 : index
    %137 = vector.load %arg18[%c40, %c0_37] : memref<128x128xf32, #tpu.memory_space<vmem>>, vector<8x128xf32>
    %138 = vector.extract_strided_slice %136 {offsets = [0, 0], sizes = [8, 128], strides = [1, 1]} : vector<16x256xf32> to vector<8x128xf32>
    %139 = arith.addf %137, %138 : vector<8x128xf32>
    %c104 = arith.constant 104 : index
    %c0_38 = arith.constant 0 : index
    %140 = vector.load %arg18[%c104, %c0_38] : memref<128x128xf32, #tpu.memory_space<vmem>>, vector<8x128xf32>
    %141 = vector.extract_strided_slice %136 {offsets = [8, 128], sizes = [8, 128], strides = [1, 1]} : vector<16x256xf32> to vector<8x128xf32>
    %142 = arith.addf %140, %141 : vector<8x128xf32>
    %143 = tpu.concatenate %139, %142 in 0 : vector<8x128xf32>, vector<8x128xf32> -> vector<16x128xf32>
    %144 = vector.extract_strided_slice %143 {offsets = [0, 0], sizes = [16, 96], strides = [1, 1]} : vector<16x128xf32> to vector<16x96xf32>
    %145 = arith.negf %144 : vector<16x96xf32>
    %146 = math.exp %145 : vector<16x96xf32>
    %cst_39 = arith.constant 1.000000e+00 : f32
    %147 = vector.broadcast %cst_39 : f32 to vector<16x96xf32>
    %148 = arith.addf %147, %146 : vector<16x96xf32>
    %149 = arith.divf %147, %148 : vector<16x96xf32>
    %150 = vector.extract_strided_slice %149 {offsets = [0, 0], sizes = [16, 32], strides = [1, 1]} : vector<16x96xf32> to vector<16x32xf32>
    %151 = vector.extract_strided_slice %149 {offsets = [0, 32], sizes = [16, 32], strides = [1, 1]} : vector<16x96xf32> to vector<16x32xf32>
    %152 = vector.extract_strided_slice %149 {offsets = [0, 64], sizes = [16, 32], strides = [1, 1]} : vector<16x96xf32> to vector<16x32xf32>
    %153 = vector.extract_strided_slice %143 {offsets = [0, 96], sizes = [16, 32], strides = [1, 1]} : vector<16x128xf32> to vector<16x32xf32>
    %154 = math.tanh %153 : vector<16x32xf32>
    %155 = arith.mulf %151, %133 : vector<16x32xf32>
    %156 = arith.mulf %150, %154 : vector<16x32xf32>
    %157 = arith.addf %155, %156 : vector<16x32xf32>
    %158 = math.tanh %157 : vector<16x32xf32>
    %159 = arith.mulf %152, %158 : vector<16x32xf32>
    %cst_40 = arith.constant dense<0.000000e+00> : vector<16x256xf32>
    %160 = tpu.matmul %159, %13, %cst_40 {dimension_numbers = #tpu.dot_dimension_numbers<[1], [0], [0], [1], [0, 0, 1, 1], [], []>} : vector<16x32xf32>, vector<32x256xf32>, vector<16x256xf32> -> vector<16x256xf32>
    %c48 = arith.constant 48 : index
    %c0_41 = arith.constant 0 : index
    %161 = vector.load %arg18[%c48, %c0_41] : memref<128x128xf32, #tpu.memory_space<vmem>>, vector<8x128xf32>
    %162 = vector.extract_strided_slice %160 {offsets = [0, 0], sizes = [8, 128], strides = [1, 1]} : vector<16x256xf32> to vector<8x128xf32>
    %163 = arith.addf %161, %162 : vector<8x128xf32>
    %c112 = arith.constant 112 : index
    %c0_42 = arith.constant 0 : index
    %164 = vector.load %arg18[%c112, %c0_42] : memref<128x128xf32, #tpu.memory_space<vmem>>, vector<8x128xf32>
    %165 = vector.extract_strided_slice %160 {offsets = [8, 128], sizes = [8, 128], strides = [1, 1]} : vector<16x256xf32> to vector<8x128xf32>
    %166 = arith.addf %164, %165 : vector<8x128xf32>
    %167 = tpu.concatenate %163, %166 in 0 : vector<8x128xf32>, vector<8x128xf32> -> vector<16x128xf32>
    %168 = vector.extract_strided_slice %167 {offsets = [0, 0], sizes = [16, 96], strides = [1, 1]} : vector<16x128xf32> to vector<16x96xf32>
    %169 = arith.negf %168 : vector<16x96xf32>
    %170 = math.exp %169 : vector<16x96xf32>
    %cst_43 = arith.constant 1.000000e+00 : f32
    %171 = vector.broadcast %cst_43 : f32 to vector<16x96xf32>
    %172 = arith.addf %171, %170 : vector<16x96xf32>
    %173 = arith.divf %171, %172 : vector<16x96xf32>
    %174 = vector.extract_strided_slice %173 {offsets = [0, 0], sizes = [16, 32], strides = [1, 1]} : vector<16x96xf32> to vector<16x32xf32>
    %175 = vector.extract_strided_slice %173 {offsets = [0, 32], sizes = [16, 32], strides = [1, 1]} : vector<16x96xf32> to vector<16x32xf32>
    %176 = vector.extract_strided_slice %173 {offsets = [0, 64], sizes = [16, 32], strides = [1, 1]} : vector<16x96xf32> to vector<16x32xf32>
    %177 = vector.extract_strided_slice %167 {offsets = [0, 96], sizes = [16, 32], strides = [1, 1]} : vector<16x128xf32> to vector<16x32xf32>
    %178 = math.tanh %177 : vector<16x32xf32>
    %179 = arith.mulf %175, %157 : vector<16x32xf32>
    %180 = arith.mulf %174, %178 : vector<16x32xf32>
    %181 = arith.addf %179, %180 : vector<16x32xf32>
    %182 = math.tanh %181 : vector<16x32xf32>
    %183 = arith.mulf %176, %182 : vector<16x32xf32>
    %cst_44 = arith.constant dense<0.000000e+00> : vector<16x256xf32>
    %184 = tpu.matmul %183, %13, %cst_44 {dimension_numbers = #tpu.dot_dimension_numbers<[1], [0], [0], [1], [0, 0, 1, 1], [], []>} : vector<16x32xf32>, vector<32x256xf32>, vector<16x256xf32> -> vector<16x256xf32>
    %c56 = arith.constant 56 : index
    %c0_45 = arith.constant 0 : index
    %185 = vector.load %arg18[%c56, %c0_45] : memref<128x128xf32, #tpu.memory_space<vmem>>, vector<8x128xf32>
    %186 = vector.extract_strided_slice %184 {offsets = [0, 0], sizes = [8, 128], strides = [1, 1]} : vector<16x256xf32> to vector<8x128xf32>
    %187 = arith.addf %185, %186 : vector<8x128xf32>
    %c120 = arith.constant 120 : index
    %c0_46 = arith.constant 0 : index
    %188 = vector.load %arg18[%c120, %c0_46] : memref<128x128xf32, #tpu.memory_space<vmem>>, vector<8x128xf32>
    %189 = vector.extract_strided_slice %184 {offsets = [8, 128], sizes = [8, 128], strides = [1, 1]} : vector<16x256xf32> to vector<8x128xf32>
    %190 = arith.addf %188, %189 : vector<8x128xf32>
    %191 = tpu.concatenate %187, %190 in 0 : vector<8x128xf32>, vector<8x128xf32> -> vector<16x128xf32>
    %192 = vector.extract_strided_slice %191 {offsets = [0, 0], sizes = [16, 96], strides = [1, 1]} : vector<16x128xf32> to vector<16x96xf32>
    %193 = arith.negf %192 : vector<16x96xf32>
    %194 = math.exp %193 : vector<16x96xf32>
    %cst_47 = arith.constant 1.000000e+00 : f32
    %195 = vector.broadcast %cst_47 : f32 to vector<16x96xf32>
    %196 = arith.addf %195, %194 : vector<16x96xf32>
    %197 = arith.divf %195, %196 : vector<16x96xf32>
    %198 = vector.extract_strided_slice %197 {offsets = [0, 0], sizes = [16, 32], strides = [1, 1]} : vector<16x96xf32> to vector<16x32xf32>
    %199 = vector.extract_strided_slice %197 {offsets = [0, 32], sizes = [16, 32], strides = [1, 1]} : vector<16x96xf32> to vector<16x32xf32>
    %200 = vector.extract_strided_slice %197 {offsets = [0, 64], sizes = [16, 32], strides = [1, 1]} : vector<16x96xf32> to vector<16x32xf32>
    %201 = vector.extract_strided_slice %191 {offsets = [0, 96], sizes = [16, 32], strides = [1, 1]} : vector<16x128xf32> to vector<16x32xf32>
    %202 = math.tanh %201 : vector<16x32xf32>
    %203 = arith.mulf %199, %181 : vector<16x32xf32>
    %204 = arith.mulf %198, %202 : vector<16x32xf32>
    %205 = arith.addf %203, %204 : vector<16x32xf32>
    %206 = math.tanh %205 : vector<16x32xf32>
    %207 = arith.mulf %200, %206 : vector<16x32xf32>
    %c0_48 = arith.constant 0 : index
    %c0_49 = arith.constant 0 : index
    %208 = vector.load %arg5[%c0_48, %c0_49] : memref<16x32xf32, #tpu.memory_space<vmem>>, vector<16x32xf32>
    %c0_50 = arith.constant 0 : index
    %c0_51 = arith.constant 0 : index
    %209 = vector.load %arg17[%c0_50, %c0_51] : memref<72x32xf32, #tpu.memory_space<vmem>>, vector<16x32xf32>
    tpu.vector_store %arg17[%c0_50, %c0_51], %208 {strides = array<i32>} : memref<72x32xf32, #tpu.memory_space<vmem>>, vector<16x32xf32>,
    %c0_52 = arith.constant 0 : index
    %c0_53 = arith.constant 0 : index
    %210 = vector.load %arg6[%c0_52, %c0_53] : memref<16x32xf32, #tpu.memory_space<vmem>>, vector<16x32xf32>
    %c16_54 = arith.constant 16 : index
    %c0_55 = arith.constant 0 : index
    %211 = vector.load %arg17[%c16_54, %c0_55] : memref<72x32xf32, #tpu.memory_space<vmem>>, vector<16x32xf32>
    tpu.vector_store %arg17[%c16_54, %c0_55], %210 {strides = array<i32>} : memref<72x32xf32, #tpu.memory_space<vmem>>, vector<16x32xf32>,
    %c0_56 = arith.constant 0 : index
    %c0_57 = arith.constant 0 : index
    %212 = vector.load %arg7[%c0_56, %c0_57] : memref<16x32xf32, #tpu.memory_space<vmem>>, vector<16x32xf32>
    %c32_58 = arith.constant 32 : index
    %c0_59 = arith.constant 0 : index
    %213 = vector.load %arg17[%c32_58, %c0_59] : memref<72x32xf32, #tpu.memory_space<vmem>>, vector<16x32xf32>
    tpu.vector_store %arg17[%c32_58, %c0_59], %212 {strides = array<i32>} : memref<72x32xf32, #tpu.memory_space<vmem>>, vector<16x32xf32>,
    %c0_60 = arith.constant 0 : index
    %c0_61 = arith.constant 0 : index
    %214 = vector.load %arg8[%c0_60, %c0_61] : memref<8x32xf32, #tpu.memory_space<vmem>>, vector<8x32xf32>
    %c48_62 = arith.constant 48 : index
    %c0_63 = arith.constant 0 : index
    %215 = vector.load %arg17[%c48_62, %c0_63] : memref<72x32xf32, #tpu.memory_space<vmem>>, vector<8x32xf32>
    tpu.vector_store %arg17[%c48_62, %c0_63], %214 {strides = array<i32>} : memref<72x32xf32, #tpu.memory_space<vmem>>, vector<8x32xf32>,
    %c56_64 = arith.constant 56 : index
    %c0_65 = arith.constant 0 : index
    %216 = vector.load %arg17[%c56_64, %c0_65] : memref<72x32xf32, #tpu.memory_space<vmem>>, vector<16x32xf32>
    tpu.vector_store %arg17[%c56_64, %c0_65], %207 {strides = array<i32>} : memref<72x32xf32, #tpu.memory_space<vmem>>, vector<16x32xf32>,
    %c0_66 = arith.constant 0 : index
    %c0_67 = arith.constant 0 : index
    %217 = vector.load %arg17[%c0_66, %c0_67] : memref<72x32xf32, #tpu.memory_space<vmem>>, vector<72x32xf32>
    %c0_68 = arith.constant 0 : index
    %c0_69 = arith.constant 0 : index
    %218 = vector.load %arg9[%c0_68, %c0_69] : memref<16x72xf32, #tpu.memory_space<vmem>>, vector<16x72xf32>
    %cst_70 = arith.constant dense<0.000000e+00> : vector<16x32xf32>
    %219 = tpu.matmul %218, %217, %cst_70 {dimension_numbers = #tpu.dot_dimension_numbers<[1], [0], [0], [1], [0, 0, 1, 1], [], []>} : vector<16x72xf32>, vector<72x32xf32>, vector<16x32xf32> -> vector<16x32xf32>
    %c0_71 = arith.constant 0 : index
    %c0_72 = arith.constant 0 : index
    %220 = vector.load %arg10[%c0_71, %c0_72] : memref<32x32xf32, #tpu.memory_space<vmem>>, vector<32x32xf32>
    %cst_73 = arith.constant dense<0.000000e+00> : vector<16x32xf32>
    %221 = tpu.matmul %219, %220, %cst_73 {dimension_numbers = #tpu.dot_dimension_numbers<[1], [0], [0], [1], [0, 0, 1, 1], [], []>} : vector<16x32xf32>, vector<32x32xf32>, vector<16x32xf32> -> vector<16x32xf32>
    %c0_74 = arith.constant 0 : index
    %c0_75 = arith.constant 0 : index
    %222 = vector.load %arg11[%c0_74, %c0_75] : memref<1x32xf32, #tpu.memory_space<vmem>>, vector<1x32xf32>
    %223 = vector.broadcast %222 : vector<1x32xf32> to vector<16x32xf32>
    %224 = arith.addf %221, %223 : vector<16x32xf32>
    %cst_76 = arith.constant 0.000000e+00 : f32
    %225 = vector.broadcast %cst_76 : f32 to vector<16x32xf32>
    %226 = arith.maximumf %224, %225 : vector<16x32xf32>
    %c0_77 = arith.constant 0 : index
    %c0_78 = arith.constant 0 : index
    %227 = vector.load %arg12[%c0_77, %c0_78] : memref<32x32xf32, #tpu.memory_space<vmem>>, vector<32x32xf32>
    %cst_79 = arith.constant dense<0.000000e+00> : vector<16x32xf32>
    %228 = tpu.matmul %226, %227, %cst_79 {dimension_numbers = #tpu.dot_dimension_numbers<[1], [0], [0], [1], [0, 0, 1, 1], [], []>} : vector<16x32xf32>, vector<32x32xf32>, vector<16x32xf32> -> vector<16x32xf32>
    %c0_80 = arith.constant 0 : index
    %c0_81 = arith.constant 0 : index
    %229 = vector.load %arg13[%c0_80, %c0_81] : memref<1x32xf32, #tpu.memory_space<vmem>>, vector<1x32xf32>
    %230 = vector.broadcast %229 : vector<1x32xf32> to vector<16x32xf32>
    %231 = arith.addf %228, %230 : vector<16x32xf32>
    %cst_82 = arith.constant 0.000000e+00 : f32
    %232 = vector.broadcast %cst_82 : f32 to vector<16x32xf32>
    %233 = arith.maximumf %231, %232 : vector<16x32xf32>
    %c0_83 = arith.constant 0 : index
    %c0_84 = arith.constant 0 : index
    %234 = vector.load %arg14[%c0_83, %c0_84] : memref<32x32xf32, #tpu.memory_space<vmem>>, vector<32x32xf32>
    %cst_85 = arith.constant dense<0.000000e+00> : vector<16x32xf32>
    %235 = tpu.matmul %233, %234, %cst_85 {dimension_numbers = #tpu.dot_dimension_numbers<[1], [0], [0], [1], [0, 0, 1, 1], [], []>} : vector<16x32xf32>, vector<32x32xf32>, vector<16x32xf32> -> vector<16x32xf32>
    %c0_86 = arith.constant 0 : index
    %c0_87 = arith.constant 0 : index
    %236 = vector.load %arg15[%c0_86, %c0_87] : memref<1x32xf32, #tpu.memory_space<vmem>>, vector<1x32xf32>
    %237 = vector.broadcast %236 : vector<1x32xf32> to vector<16x32xf32>
    %238 = arith.addf %235, %237 : vector<16x32xf32>
    %cst_88 = arith.constant 0.000000e+00 : f32
    %239 = vector.broadcast %cst_88 : f32 to vector<16x32xf32>
    %240 = arith.maximumf %238, %239 : vector<16x32xf32>
    %cst_89 = arith.constant dense<0.000000e+00> : vector<16x16xf32>
    %241 = tpu.matmul %240, %240, %cst_89 {dimension_numbers = #tpu.dot_dimension_numbers<[1], [1], [0], [0], [0, 0, 1, 0], [], []>} : vector<16x32xf32>, vector<16x32xf32>, vector<16x16xf32> -> vector<16x16xf32>
    %cst_90 = arith.constant 2.000000e+00 : f32
    %242 = vector.broadcast %cst_90 : f32 to vector<16x16xf32>
    %243 = arith.mulf %241, %242 : vector<16x16xf32>
    %244 = tpu.iota {dimensions = array<i32: 0>} : vector<16x16xi32>
    %245 = tpu.iota {dimensions = array<i32: 1>} : vector<16x16xi32>
    %246 = arith.cmpi eq, %244, %245 : vector<16x16xi32>
    %cst_91 = arith.constant 1.000000e+09 : f32
    %cst_92 = arith.constant 0.000000e+00 : f32
    %247 = vector.broadcast %cst_91 : f32 to vector<16x16xf32>
    %248 = vector.broadcast %cst_92 : f32 to vector<16x16xf32>
    %249 = arith.select %246, %247, %248 : vector<16x16xi1>, vector<16x16xf32>
    %250 = arith.subf %243, %249 : vector<16x16xf32>
    %cst_93 = arith.constant dense<0xFF800000> : vector<16xf32>
    %251 = vector.multi_reduction <maximumf>, %250, %cst_93 [1] : vector<16x16xf32> to vector<16xf32>
    %252 = vector.shape_cast %251 : vector<16xf32> to vector<16x1xf32>
    %253 = vector.broadcast %252 : vector<16x1xf32> to vector<16x16xf32>
    %254 = arith.subf %250, %253 : vector<16x16xf32>
    %255 = math.exp %254 : vector<16x16xf32>
    %cst_94 = arith.constant dense<0.000000e+00> : vector<16xf32>
    %256 = vector.multi_reduction <add>, %255, %cst_94 [1] : vector<16x16xf32> to vector<16xf32>
    %257 = vector.shape_cast %256 : vector<16xf32> to vector<16x1xf32>
    %258 = math.log %257 : vector<16x1xf32>
    %259 = arith.addf %252, %258 : vector<16x1xf32>
    %c8_i32 = arith.constant 8 : i32
    %260 = vector.broadcast %c8_i32 : i32 to vector<16x16xi32>
    %261 = arith.cmpi slt, %244, %260 : vector<16x16xi32>
    %c8_i32_95 = arith.constant 8 : i32
    %262 = vector.broadcast %c8_i32_95 : i32 to vector<16x16xi32>
    %263 = arith.addi %244, %262 : vector<16x16xi32>
    %c8_i32_96 = arith.constant 8 : i32
    %264 = vector.broadcast %c8_i32_96 : i32 to vector<16x16xi32>
    %265 = arith.subi %244, %264 : vector<16x16xi32>
    %266 = arith.select %261, %263, %265 : vector<16x16xi1>, vector<16x16xi32>
    %267 = arith.cmpi eq, %245, %266 : vector<16x16xi32>
    %cst_97 = arith.constant 0.000000e+00 : f32
    %268 = vector.broadcast %cst_97 : f32 to vector<16x16xf32>
    %269 = arith.select %267, %243, %268 : vector<16x16xi1>, vector<16x16xf32>
    %cst_98 = arith.constant dense<0.000000e+00> : vector<16xf32>
    %270 = vector.multi_reduction <add>, %269, %cst_98 [1] : vector<16x16xf32> to vector<16xf32>
    %271 = vector.shape_cast %270 : vector<16xf32> to vector<16x1xf32>
    %272 = arith.subf %259, %271 : vector<16x1xf32>
    %cst_99 = arith.constant dense<0.000000e+00> : vector<1xf32>
    %273 = vector.multi_reduction <add>, %272, %cst_99 [0] : vector<16x1xf32> to vector<1xf32>
    %274 = vector.shape_cast %273 : vector<1xf32> to vector<1x1xf32>
    %cst_100 = arith.constant 8.000000e+00 : f32
    %275 = vector.broadcast %cst_100 : f32 to vector<1x1xf32>
    %276 = arith.divf %274, %275 : vector<1x1xf32>
    %c0_101 = arith.constant 0 : index
    %c0_102 = arith.constant 0 : index
    %277 = vector.load %arg16[%c0_101, %c0_102] : memref<1x1xf32, #tpu.memory_space<vmem>>, vector<1x1xf32>
    tpu.vector_store %arg16[%c0_101, %c0_102], %276 {strides = array<i32>} : memref<1x1xf32, #tpu.memory_space<vmem>>, vector<1x1xf32>,
    return
  }
}

</mosaic_0001>

<llo_original>
// kernel: solograph_contrastive_forward.1
$region0: #{solograph_contrastive_forward.1}
  #allocation0 [shape = 'u32[]', space=smem, size = 0x4, offset = 0x4, fixed_abs, tag = 'smem constant byte address 0x4 - core index']
  #allocation1 [shape = 'u32[144,128]{1,0:T(1,128)}', space=vmem, size = 0x12000, scoped, tag = 'internal scratch']
  #allocation2 [shape = 'f32[72,32]{1,0:T(8,128)}', space=vmem, size = 0x9000, scoped, tag = 'scratch operand']
  #allocation3 [shape = 'f32[128,128]{1,0:T(8,128)}', space=vmem, size = 0x10000, scoped, tag = 'scratch operand']
  %s0 = inlined_call_operand.vmem [shape: bf16[128,768], index: 0, kind: input, shape index: {}]
  %s1 = inlined_call_operand.vmem [shape: bf16[768,256], index: 1, kind: input, shape index: {}]
  %s2 = inlined_call_operand.vmem [shape: f32[1,128], index: 2, kind: input, shape index: {}]
  %s3 = inlined_call_operand.vmem [shape: f32[1,128], index: 3, kind: input, shape index: {}]
  %s4 = inlined_call_operand.vmem [shape: f32[32,256], index: 4, kind: input, shape index: {}]
  %s5 = inlined_call_operand.vmem [shape: f32[16,32], index: 5, kind: input, shape index: {}]
  %s6 = inlined_call_operand.vmem [shape: f32[16,32], index: 6, kind: input, shape index: {}]
  %s7 = inlined_call_operand.vmem [shape: f32[16,32], index: 7, kind: input, shape index: {}]
  %s8 = inlined_call_operand.vmem [shape: f32[8,32], index: 8, kind: input, shape index: {}]
  %s9 = inlined_call_operand.vmem [shape: f32[16,72], index: 9, kind: input, shape index: {}]
  %s10 = inlined_call_operand.vmem [shape: f32[32,32], index: 10, kind: input, shape index: {}]
  %s11 = inlined_call_operand.vmem [shape: f32[1,32], index: 11, kind: input, shape index: {}]
  %s12 = inlined_call_operand.vmem [shape: f32[32,32], index: 12, kind: input, shape index: {}]
  %s13 = inlined_call_operand.vmem [shape: f32[1,32], index: 13, kind: input, shape index: {}]
  %s14 = inlined_call_operand.vmem [shape: f32[32,32], index: 14, kind: input, shape index: {}]
  %s15 = inlined_call_operand.vmem [shape: f32[1,32], index: 15, kind: input, shape index: {}]
  %s16 = inlined_call_operand.hbm [shape: f32[1,1], index: 16, kind: output, shape index: {}]
  %s17 = sld [smem:[#allocation0]]
  $region74: #{solograph_contrastive_forward.1} parent=0
    _
  %s19 = ssub.s32 1, %s17
  %s20 = scalar_select 0, %s19, %s17
  $region1: #{solograph_contrastive_forward.1} parent=0
    #allocation4 [shape = 'u8[512]{0}', space=vmem, size = 0x400, scoped, tag = 'output window, operand 0, single buffered']
    #allocation5 [shape = 's32[1]{0}', space=sflag, size = 0x4, scoped, tag = 'scoped memory for solograph_contrastive_forward.1']
    %21 = vsyncpa [#allocation5], 0
    // Predicated region
    $region2: #{solograph_contrastive_forward.1} parent=1 // pred_check
      _
    $region3: #{solograph_contrastive_forward.1} parent=1 // pred_check_branch
      %23 = sbr.rel (0) target = $region5
    $region4: #{solograph_contrastive_forward.1} parent=1 // pred_region
      _
    $region5: #{solograph_contrastive_forward.1} parent=1 // pred_fallthru
      _
    // Predicated region
    $region6: #{solograph_contrastive_forward.1} parent=1 // pred_check
      _
    $region7: #{solograph_contrastive_forward.1} parent=1 // pred_check_branch
      %25 = sbr.rel (0) target = $region9
    $region8: #{solograph_contrastive_forward.1} parent=1 // pred_region
      _
    $region9: #{solograph_contrastive_forward.1} parent=1 // pred_fallthru
      _
    // Predicated region
    $region10: #{solograph_contrastive_forward.1} parent=1 // pred_check
      _
    $region11: #{solograph_contrastive_forward.1} parent=1 // pred_check_branch
      %27 = sbr.rel (0) target = $region13
    $region12: #{solograph_contrastive_forward.1} parent=1 // pred_region
      _
    $region13: #{solograph_contrastive_forward.1} parent=1 // pred_fallthru
      _
    // Predicated region
    $region14: #{solograph_contrastive_forward.1} parent=1 // pred_check
      _
    $region15: #{solograph_contrastive_forward.1} parent=1 // pred_check_branch
      %29 = sbr.rel (0) target = $region17
    $region16: #{solograph_contrastive_forward.1} parent=1 // pred_region
      _
    $region17: #{solograph_contrastive_forward.1} parent=1 // pred_fallthru
      _
    // Predicated region
    $region18: #{solograph_contrastive_forward.1} parent=1 // pred_check
      _
    $region19: #{solograph_contrastive_forward.1} parent=1 // pred_check_branch
      %31 = sbr.rel (0) target = $region21
    $region20: #{solograph_contrastive_forward.1} parent=1 // pred_region
      _
    $region21: #{solograph_contrastive_forward.1} parent=1 // pred_fallthru
      _
    // Predicated region
    $region22: #{solograph_contrastive_forward.1} parent=1 // pred_check
      _
    $region23: #{solograph_contrastive_forward.1} parent=1 // pred_check_branch
      %33 = sbr.rel (0) target = $region25
    $region24: #{solograph_contrastive_forward.1} parent=1 // pred_region
      _
    $region25: #{solograph_contrastive_forward.1} parent=1 // pred_fallthru
      _
    // Predicated region
    $region26: #{solograph_contrastive_forward.1} parent=1 // pred_check
      _
    $region27: #{solograph_contrastive_forward.1} parent=1 // pred_check_branch
      %35 = sbr.rel (0) target = $region29
    $region28: #{solograph_contrastive_forward.1} parent=1 // pred_region
      _
    $region29: #{solograph_contrastive_forward.1} parent=1 // pred_fallthru
      _
    // Predicated region
    $region30: #{solograph_contrastive_forward.1} parent=1 // pred_check
      _
    $region31: #{solograph_contrastive_forward.1} parent=1 // pred_check_branch
      %37 = sbr.rel (0) target = $region33
    $region32: #{solograph_contrastive_forward.1} parent=1 // pred_region
      _
    $region33: #{solograph_contrastive_forward.1} parent=1 // pred_fallthru
      _
    // Predicated region
    $region34: #{solograph_contrastive_forward.1} parent=1 // pred_check
      _
    $region35: #{solograph_contrastive_forward.1} parent=1 // pred_check_branch
      %39 = sbr.rel (0) target = $region37
    $region36: #{solograph_contrastive_forward.1} parent=1 // pred_region
      _
    $region37: #{solograph_contrastive_forward.1} parent=1 // pred_fallthru
      _
    // Predicated region
    $region38: #{solograph_contrastive_forward.1} parent=1 // pred_check
      _
    $region39: #{solograph_contrastive_forward.1} parent=1 // pred_check_branch
      %41 = sbr.rel (0) target = $region41
    $region40: #{solograph_contrastive_forward.1} parent=1 // pred_region
      _
    $region41: #{solograph_contrastive_forward.1} parent=1 // pred_fallthru
      _
    // Predicated region
    $region42: #{solograph_contrastive_forward.1} parent=1 // pred_check
      _
    $region43: #{solograph_contrastive_forward.1} parent=1 // pred_check_branch
      %43 = sbr.rel (0) target = $region45
    $region44: #{solograph_contrastive_forward.1} parent=1 // pred_region
      _
    $region45: #{solograph_contrastive_forward.1} parent=1 // pred_fallthru
      _
    // Predicated region
    $region46: #{solograph_contrastive_forward.1} parent=1 // pred_check
      _
    $region47: #{solograph_contrastive_forward.1} parent=1 // pred_check_branch
      %45 = sbr.rel (0) target = $region49
    $region48: #{solograph_contrastive_forward.1} parent=1 // pred_region
      _
    $region49: #{solograph_contrastive_forward.1} parent=1 // pred_fallthru
      _
    // Predicated region
    $region50: #{solograph_contrastive_forward.1} parent=1 // pred_check
      _
    $region51: #{solograph_contrastive_forward.1} parent=1 // pred_check_branch
      %47 = sbr.rel (0) target = $region53
    $region52: #{solograph_contrastive_forward.1} parent=1 // pred_region
      _
    $region53: #{solograph_contrastive_forward.1} parent=1 // pred_fallthru
      _
    // Predicated region
    $region54: #{solograph_contrastive_forward.1} parent=1 // pred_check
      _
    $region55: #{solograph_contrastive_forward.1} parent=1 // pred_check_branch
      %49 = sbr.rel (0) target = $region57
    $region56: #{solograph_contrastive_forward.1} parent=1 // pred_region
      _
    $region57: #{solograph_contrastive_forward.1} parent=1 // pred_fallthru
      _
    // Predicated region
    $region58: #{solograph_contrastive_forward.1} parent=1 // pred_check
      _
    $region59: #{solograph_contrastive_forward.1} parent=1 // pred_check_branch
      %51 = sbr.rel (0) target = $region61
    $region60: #{solograph_contrastive_forward.1} parent=1 // pred_region
      _
    $region61: #{solograph_contrastive_forward.1} parent=1 // pred_fallthru
      _
    // Predicated region
    $region62: #{solograph_contrastive_forward.1} parent=1 // pred_check
      _
    $region63: #{solograph_contrastive_forward.1} parent=1 // pred_check_branch
      %53 = sbr.rel (0) target = $region65
    $region64: #{solograph_contrastive_forward.1} parent=1 // pred_region
      _
    $region65: #{solograph_contrastive_forward.1} parent=1 // pred_fallthru
      _
    %v54 = vld [vmem:[%s0] sm:$0xff]
    %v55 = vld [vmem:[%s0 + $0x8] sm:$0xff]
    %v56 = vld [vmem:[%s0 + $0x10] sm:$0xff]
    %v57 = vld [vmem:[%s0 + $0x18] sm:$0xff]
    %v58 = vld [vmem:[%s0 + $0x20] sm:$0xff]
    %v59 = vld [vmem:[%s0 + $0x28] sm:$0xff]
    %v60 = vld [vmem:[%s0 + $0x30] sm:$0xff]
    %v61 = vld [vmem:[%s0 + $0x38] sm:$0xff]
    %v62 = vld [vmem:[%s0 + $0x40] sm:$0xff]
    %v63 = vld [vmem:[%s0 + $0x48] sm:$0xff]
    %v64 = vld [vmem:[%s0 + $0x50] sm:$0xff]
    %v65 = vld [vmem:[%s0 + $0x58] sm:$0xff]
    %v66 = vld [vmem:[%s0 + $0x60] sm:$0xff]
    %v67 = vld [vmem:[%s0 + $0x68] sm:$0xff]
    %v68 = vld [vmem:[%s0 + $0x70] sm:$0xff]
    %v69 = vld [vmem:[%s0 + $0x78] sm:$0xff]
    %v70 = vld [vmem:[%s0 + $0x80] sm:$0xff]
    %v71 = vld [vmem:[%s0 + $0x88] sm:$0xff]
    %v72 = vld [vmem:[%s0 + $0x90] sm:$0xff]
    %v73 = vld [vmem:[%s0 + $0x98] sm:$0xff]
    %v74 = vld [vmem:[%s0 + $0xa0] sm:$0xff]
    %v75 = vld [vmem:[%s0 + $0xa8] sm:$0xff]
    %v76 = vld [vmem:[%s0 + $0xb0] sm:$0xff]
    %v77 = vld [vmem:[%s0 + $0xb8] sm:$0xff]
    %v78 = vld [vmem:[%s0 + $0xc0] sm:$0xff]
    %v79 = vld [vmem:[%s0 + $0xc8] sm:$0xff]
    %v80 = vld [vmem:[%s0 + $0xd0] sm:$0xff]
    %v81 = vld [vmem:[%s0 + $0xd8] sm:$0xff]
    %v82 = vld [vmem:[%s0 + $0xe0] sm:$0xff]
    %v83 = vld [vmem:[%s0 + $0xe8] sm:$0xff]
    %v84 = vld [vmem:[%s0 + $0xf0] sm:$0xff]
    %v85 = vld [vmem:[%s0 + $0xf8] sm:$0xff]
    %v86 = vld [vmem:[%s0 + $0x100] sm:$0xff]
    %v87 = vld [vmem:[%s0 + $0x108] sm:$0xff]
    %v88 = vld [vmem:[%s0 + $0x110] sm:$0xff]
    %v89 = vld [vmem:[%s0 + $0x118] sm:$0xff]
    %v90 = vld [vmem:[%s0 + $0x120] sm:$0xff]
    %v91 = vld [vmem:[%s0 + $0x128] sm:$0xff]
    %v92 = vld [vmem:[%s0 + $0x130] sm:$0xff]
    %v93 = vld [vmem:[%s0 + $0x138] sm:$0xff]
    %v94 = vld [vmem:[%s0 + $0x140] sm:$0xff]
    %v95 = vld [vmem:[%s0 + $0x148] sm:$0xff]
    %v96 = vld [vmem:[%s0 + $0x150] sm:$0xff]
    %v97 = vld [vmem:[%s0 + $0x158] sm:$0xff]
    %v98 = vld [vmem:[%s0 + $0x160] sm:$0xff]
    %v99 = vld [vmem:[%s0 + $0x168] sm:$0xff]
    %v100 = vld [vmem:[%s0 + $0x170] sm:$0xff]
    %v101 = vld [vmem:[%s0 + $0x178] sm:$0xff]
    %v102 = vld [vmem:[%s1] sm:$0xff]
    %v103 = vld [vmem:[%s1 + $0x8] sm:$0xff]
    %v104 = vld [vmem:[%s1 + $0x10] sm:$0xff]
    %v105 = vld [vmem:[%s1 + $0x18] sm:$0xff]
    %v106 = vld [vmem:[%s1 + $0x20] sm:$0xff]
    %v107 = vld [vmem:[%s1 + $0x28] sm:$0xff]
    %v108 = vld [vmem:[%s1 + $0x30] sm:$0xff]
    %v109 = vld [vmem:[%s1 + $0x38] sm:$0xff]
    %v110 = vld [vmem:[%s1 + $0x40] sm:$0xff]
    %v111 = vld [vmem:[%s1 + $0x48] sm:$0xff]
    %v112 = vld [vmem:[%s1 + $0x50] sm:$0xff]
    %v113 = vld [vmem:[%s1 + $0x58] sm:$0xff]
    %v114 = vld [vmem:[%s1 + $0x60] sm:$0xff]
    %v115 = vld [vmem:[%s1 + $0x68] sm:$0xff]
    %v116 = vld [vmem:[%s1 + $0x70] sm:$0xff]
    %v117 = vld [vmem:[%s1 + $0x78] sm:$0xff]
    %v118 = vld [vmem:[%s1 + $0x80] sm:$0xff]
    %v119 = vld [vmem:[%s1 + $0x88] sm:$0xff]
    %v120 = vld [vmem:[%s1 + $0x90] sm:$0xff]
    %v121 = vld [vmem:[%s1 + $0x98] sm:$0xff]
    %v122 = vld [vmem:[%s1 + $0xa0] sm:$0xff]
    %v123 = vld [vmem:[%s1 + $0xa8] sm:$0xff]
    %v124 = vld [vmem:[%s1 + $0xb0] sm:$0xff]
    %v125 = vld [vmem:[%s1 + $0xb8] sm:$0xff]
    %v126 = vld [vmem:[%s1 + $0xc0] sm:$0xff]
    %v127 = vld [vmem:[%s1 + $0xc8] sm:$0xff]
    %v128 = vld [vmem:[%s1 + $0xd0] sm:$0xff]
    %v129 = vld [vmem:[%s1 + $0xd8] sm:$0xff]
    %v130 = vld [vmem:[%s1 + $0xe0] sm:$0xff]
    %v131 = vld [vmem:[%s1 + $0xe8] sm:$0xff]
    %v132 = vld [vmem:[%s1 + $0xf0] sm:$0xff]
    %v133 = vld [vmem:[%s1 + $0xf8] sm:$0xff]
    %v134 = vld [vmem:[%s1 + $0x100] sm:$0xff]
    %v135 = vld [vmem:[%s1 + $0x108] sm:$0xff]
    %v136 = vld [vmem:[%s1 + $0x110] sm:$0xff]
    %v137 = vld [vmem:[%s1 + $0x118] sm:$0xff]
    %v138 = vld [vmem:[%s1 + $0x120] sm:$0xff]
    %v139 = vld [vmem:[%s1 + $0x128] sm:$0xff]
    %v140 = vld [vmem:[%s1 + $0x130] sm:$0xff]
    %v141 = vld [vmem:[%s1 + $0x138] sm:$0xff]
    %v142 = vld [vmem:[%s1 + $0x140] sm:$0xff]
    %v143 = vld [vmem:[%s1 + $0x148] sm:$0xff]
    %v144 = vld [vmem:[%s1 + $0x150] sm:$0xff]
    %v145 = vld [vmem:[%s1 + $0x158] sm:$0xff]
    %v146 = vld [vmem:[%s1 + $0x160] sm:$0xff]
    %v147 = vld [vmem:[%s1 + $0x168] sm:$0xff]
    %v148 = vld [vmem:[%s1 + $0x170] sm:$0xff]
    %v149 = vld [vmem:[%s1 + $0x178] sm:$0xff]
    %v150 = vld [vmem:[%s1 + $0x180] sm:$0xff]
    %v151 = vld [vmem:[%s1 + $0x188] sm:$0xff]
    %v152 = vld [vmem:[%s1 + $0x190] sm:$0xff]
    %v153 = vld [vmem:[%s1 + $0x198] sm:$0xff]
    %v154 = vld [vmem:[%s1 + $0x1a0] sm:$0xff]
    %v155 = vld [vmem:[%s1 + $0x1a8] sm:$0xff]
    %v156 = vld [vmem:[%s1 + $0x1b0] sm:$0xff]
    %v157 = vld [vmem:[%s1 + $0x1b8] sm:$0xff]
    %v158 = vld [vmem:[%s1 + $0x1c0] sm:$0xff]
    %v159 = vld [vmem:[%s1 + $0x1c8] sm:$0xff]
    %v160 = vld [vmem:[%s1 + $0x1d0] sm:$0xff]
    %v161 = vld [vmem:[%s1 + $0x1d8] sm:$0xff]
    %v162 = vld [vmem:[%s1 + $0x1e0] sm:$0xff]
    %v163 = vld [vmem:[%s1 + $0x1e8] sm:$0xff]
    %v164 = vld [vmem:[%s1 + $0x1f0] sm:$0xff]
    %v165 = vld [vmem:[%s1 + $0x1f8] sm:$0xff]
    %v166 = vld [vmem:[%s1 + $0x200] sm:$0xff]
    %v167 = vld [vmem:[%s1 + $0x208] sm:$0xff]
    %v168 = vld [vmem:[%s1 + $0x210] sm:$0xff]
    %v169 = vld [vmem:[%s1 + $0x218] sm:$0xff]
    %v170 = vld [vmem:[%s1 + $0x220] sm:$0xff]
    %v171 = vld [vmem:[%s1 + $0x228] sm:$0xff]
    %v172 = vld [vmem:[%s1 + $0x230] sm:$0xff]
    %v173 = vld [vmem:[%s1 + $0x238] sm:$0xff]
    %v174 = vld [vmem:[%s1 + $0x240] sm:$0xff]
    %v175 = vld [vmem:[%s1 + $0x248] sm:$0xff]
    %v176 = vld [vmem:[%s1 + $0x250] sm:$0xff]
    %v177 = vld [vmem:[%s1 + $0x258] sm:$0xff]
    %v178 = vld [vmem:[%s1 + $0x260] sm:$0xff]
    %v179 = vld [vmem:[%s1 + $0x268] sm:$0xff]
    %v180 = vld [vmem:[%s1 + $0x270] sm:$0xff]
    %v181 = vld [vmem:[%s1 + $0x278] sm:$0xff]
    %v182 = vld [vmem:[%s1 + $0x280] sm:$0xff]
    %v183 = vld [vmem:[%s1 + $0x288] sm:$0xff]
    %v184 = vld [vmem:[%s1 + $0x290] sm:$0xff]
    %v185 = vld [vmem:[%s1 + $0x298] sm:$0xff]
    %v186 = vld [vmem:[%s1 + $0x2a0] sm:$0xff]
    %v187 = vld [vmem:[%s1 + $0x2a8] sm:$0xff]
    %v188 = vld [vmem:[%s1 + $0x2b0] sm:$0xff]
    %v189 = vld [vmem:[%s1 + $0x2b8] sm:$0xff]
    %v190 = vld [vmem:[%s1 + $0x2c0] sm:$0xff]
    %v191 = vld [vmem:[%s1 + $0x2c8] sm:$0xff]
    %v192 = vld [vmem:[%s1 + $0x2d0] sm:$0xff]
    %v193 = vld [vmem:[%s1 + $0x2d8] sm:$0xff]
    %v194 = vld [vmem:[%s1 + $0x2e0] sm:$0xff]
    %v195 = vld [vmem:[%s1 + $0x2e8] sm:$0xff]
    %v196 = vld [vmem:[%s1 + $0x2f0] sm:$0xff]
    %v197 = vld [vmem:[%s1 + $0x2f8] sm:$0xff]
    %v246 = vunpack.c.l.b16 %v54
    %v247 = vunpack.c.h.b16 %v54
    %v248 = vunpack.c.l.b16 %v55
    %v249 = vunpack.c.h.b16 %v55
    %v250 = vunpack.c.l.b16 %v56
    %v251 = vunpack.c.h.b16 %v56
    %v252 = vunpack.c.l.b16 %v57
    %v253 = vunpack.c.h.b16 %v57
    %v254 = vunpack.c.l.b16 %v58
    %v255 = vunpack.c.h.b16 %v58
    %v256 = vunpack.c.l.b16 %v59
    %v257 = vunpack.c.h.b16 %v59
    %v258 = vunpack.c.l.b16 %v60
    %v259 = vunpack.c.h.b16 %v60
    %v260 = vunpack.c.l.b16 %v61
    %v261 = vunpack.c.h.b16 %v61
    %v262 = vunpack.c.l.b16 %v62
    %v263 = vunpack.c.h.b16 %v62
    %v264 = vunpack.c.l.b16 %v63
    %v265 = vunpack.c.h.b16 %v63
    %v266 = vunpack.c.l.b16 %v64
    %v267 = vunpack.c.h.b16 %v64
    %v268 = vunpack.c.l.b16 %v65
    %v269 = vunpack.c.h.b16 %v65
    %v270 = vunpack.c.l.b16 %v66
    %v271 = vunpack.c.h.b16 %v66
    %v272 = vunpack.c.l.b16 %v67
    %v273 = vunpack.c.h.b16 %v67
    %v274 = vunpack.c.l.b16 %v68
    %v275 = vunpack.c.h.b16 %v68
    %v276 = vunpack.c.l.b16 %v69
    %v277 = vunpack.c.h.b16 %v69
    %v278 = vunpack.c.l.b16 %v70
    %v279 = vunpack.c.h.b16 %v70
    %v280 = vunpack.c.l.b16 %v71
    %v281 = vunpack.c.h.b16 %v71
    %v282 = vunpack.c.l.b16 %v72
    %v283 = vunpack.c.h.b16 %v72
    %v284 = vunpack.c.l.b16 %v73
    %v285 = vunpack.c.h.b16 %v73
    %v286 = vunpack.c.l.b16 %v74
    %v287 = vunpack.c.h.b16 %v74
    %v288 = vunpack.c.l.b16 %v75
    %v289 = vunpack.c.h.b16 %v75
    %v290 = vunpack.c.l.b16 %v76
    %v291 = vunpack.c.h.b16 %v76
    %v292 = vunpack.c.l.b16 %v77
    %v293 = vunpack.c.h.b16 %v77
    %v294 = vunpack.c.l.b16 %v78
    %v295 = vunpack.c.h.b16 %v78
    %v296 = vunpack.c.l.b16 %v79
    %v297 = vunpack.c.h.b16 %v79
    %v298 = vunpack.c.l.b16 %v80
    %v299 = vunpack.c.h.b16 %v80
    %v300 = vunpack.c.l.b16 %v81
    %v301 = vunpack.c.h.b16 %v81
    %v302 = vunpack.c.l.b16 %v82
    %v303 = vunpack.c.h.b16 %v82
    %v304 = vunpack.c.l.b16 %v83
    %v305 = vunpack.c.h.b16 %v83
    %v306 = vunpack.c.l.b16 %v84
    %v307 = vunpack.c.h.b16 %v84
    %v308 = vunpack.c.l.b16 %v85
    %v309 = vunpack.c.h.b16 %v85
    %v310 = vunpack.c.l.b16 %v86
    %v311 = vunpack.c.h.b16 %v86
    %v312 = vunpack.c.l.b16 %v87
    %v313 = vunpack.c.h.b16 %v87
    %v314 = vunpack.c.l.b16 %v88
    %v315 = vunpack.c.h.b16 %v88
    %v316 = vunpack.c.l.b16 %v89
    %v317 = vunpack.c.h.b16 %v89
    %v318 = vunpack.c.l.b16 %v90
    %v319 = vunpack.c.h.b16 %v90
    %v320 = vunpack.c.l.b16 %v91
    %v321 = vunpack.c.h.b16 %v91
    %v322 = vunpack.c.l.b16 %v92
    %v323 = vunpack.c.h.b16 %v92
    %v324 = vunpack.c.l.b16 %v93
    %v325 = vunpack.c.h.b16 %v93
    %v326 = vunpack.c.l.b16 %v94
    %v327 = vunpack.c.h.b16 %v94
    %v328 = vunpack.c.l.b16 %v95
    %v329 = vunpack.c.h.b16 %v95
    %v330 = vunpack.c.l.b16 %v96
    %v331 = vunpack.c.h.b16 %v96
    %v332 = vunpack.c.l.b16 %v97
    %v333 = vunpack.c.h.b16 %v97
    %v334 = vunpack.c.l.b16 %v98
    %v335 = vunpack.c.h.b16 %v98
    %v336 = vunpack.c.l.b16 %v99
    %v337 = vunpack.c.h.b16 %v99
    %v338 = vunpack.c.l.b16 %v100
    %v339 = vunpack.c.h.b16 %v100
    %v340 = vunpack.c.l.b16 %v101
    %v341 = vunpack.c.h.b16 %v101
    %v342 = vpack.c.b16 %v252, %v246
    %v343 = vpack.c.b16 %v253, %v247
    %v344 = vpack.c.b16 %v254, %v248
    %v345 = vpack.c.b16 %v255, %v249
    %v346 = vpack.c.b16 %v256, %v250
    %v347 = vpack.c.b16 %v257, %v251
    %v348 = vpack.c.b16 %v264, %v258
    %v349 = vpack.c.b16 %v265, %v259
    %v350 = vpack.c.b16 %v266, %v260
    %v351 = vpack.c.b16 %v267, %v261
    %v352 = vpack.c.b16 %v268, %v262
    %v353 = vpack.c.b16 %v269, %v263
    %v354 = vpack.c.b16 %v276, %v270
    %v355 = vpack.c.b16 %v277, %v271
    %v356 = vpack.c.b16 %v278, %v272
    %v357 = vpack.c.b16 %v279, %v273
    %v358 = vpack.c.b16 %v280, %v274
    %v359 = vpack.c.b16 %v281, %v275
    %v360 = vpack.c.b16 %v288, %v282
    %v361 = vpack.c.b16 %v289, %v283
    %v362 = vpack.c.b16 %v290, %v284
    %v363 = vpack.c.b16 %v291, %v285
    %v364 = vpack.c.b16 %v292, %v286
    %v365 = vpack.c.b16 %v293, %v287
    %v366 = vpack.c.b16 %v300, %v294
    %v367 = vpack.c.b16 %v301, %v295
    %v368 = vpack.c.b16 %v302, %v296
    %v369 = vpack.c.b16 %v303, %v297
    %v370 = vpack.c.b16 %v304, %v298
    %v371 = vpack.c.b16 %v305, %v299
    %v372 = vpack.c.b16 %v312, %v306
    %v373 = vpack.c.b16 %v313, %v307
    %v374 = vpack.c.b16 %v314, %v308
    %v375 = vpack.c.b16 %v315, %v309
    %v376 = vpack.c.b16 %v316, %v310
    %v377 = vpack.c.b16 %v317, %v311
    %v378 = vpack.c.b16 %v324, %v318
    %v379 = vpack.c.b16 %v325, %v319
    %v380 = vpack.c.b16 %v326, %v320
    %v381 = vpack.c.b16 %v327, %v321
    %v382 = vpack.c.b16 %v328, %v322
    %v383 = vpack.c.b16 %v329, %v323
    %v384 = vpack.c.b16 %v336, %v330
    %v385 = vpack.c.b16 %v337, %v331
    %v386 = vpack.c.b16 %v338, %v332
    %v387 = vpack.c.b16 %v339, %v333
    %v388 = vpack.c.b16 %v340, %v334
    %v389 = vpack.c.b16 %v341, %v335
    %v534 = vunpack.c.l.b16 %v102
    %v535 = vunpack.c.h.b16 %v102
    %v536 = vunpack.c.l.b16 %v103
    %v537 = vunpack.c.h.b16 %v103
    %v538 = vunpack.c.l.b16 %v104
    %v539 = vunpack.c.h.b16 %v104
    %v540 = vunpack.c.l.b16 %v105
    %v541 = vunpack.c.h.b16 %v105
    %v542 = vunpack.c.l.b16 %v106
    %v543 = vunpack.c.h.b16 %v106
    %v544 = vunpack.c.l.b16 %v107
    %v545 = vunpack.c.h.b16 %v107
    %v546 = vunpack.c.l.b16 %v108
    %v547 = vunpack.c.h.b16 %v108
    %v548 = vunpack.c.l.b16 %v109
    %v549 = vunpack.c.h.b16 %v109
    %v550 = vunpack.c.l.b16 %v110
    %v551 = vunpack.c.h.b16 %v110
    %v552 = vunpack.c.l.b16 %v111
    %v553 = vunpack.c.h.b16 %v111
    %v554 = vunpack.c.l.b16 %v112
    %v555 = vunpack.c.h.b16 %v112
    %v556 = vunpack.c.l.b16 %v113
    %v557 = vunpack.c.h.b16 %v113
    %v558 = vunpack.c.l.b16 %v114
    %v559 = vunpack.c.h.b16 %v114
    %v560 = vunpack.c.l.b16 %v115
    %v561 = vunpack.c.h.b16 %v115
    %v562 = vunpack.c.l.b16 %v116
    %v563 = vunpack.c.h.b16 %v116
    %v564 = vunpack.c.l.b16 %v117
    %v565 = vunpack.c.h.b16 %v117
    %v566 = vunpack.c.l.b16 %v118
    %v567 = vunpack.c.h.b16 %v118
    %v568 = vunpack.c.l.b16 %v119
    %v569 = vunpack.c.h.b16 %v119
    %v570 = vunpack.c.l.b16 %v120
    %v571 = vunpack.c.h.b16 %v120
    %v572 = vunpack.c.l.b16 %v121
    %v573 = vunpack.c.h.b16 %v121
    %v574 = vunpack.c.l.b16 %v122
    %v575 = vunpack.c.h.b16 %v122
    %v576 = vunpack.c.l.b16 %v123
    %v577 = vunpack.c.h.b16 %v123
    %v578 = vunpack.c.l.b16 %v124
    %v579 = vunpack.c.h.b16 %v124
    %v580 = vunpack.c.l.b16 %v125
    %v581 = vunpack.c.h.b16 %v125
    %v582 = vunpack.c.l.b16 %v126
    %v583 = vunpack.c.h.b16 %v126
    %v584 = vunpack.c.l.b16 %v127
    %v585 = vunpack.c.h.b16 %v127
    %v586 = vunpack.c.l.b16 %v128
    %v587 = vunpack.c.h.b16 %v128
    %v588 = vunpack.c.l.b16 %v129
    %v589 = vunpack.c.h.b16 %v129
    %v590 = vunpack.c.l.b16 %v130
    %v591 = vunpack.c.h.b16 %v130
    %v592 = vunpack.c.l.b16 %v131
    %v593 = vunpack.c.h.b16 %v131
    %v594 = vunpack.c.l.b16 %v132
    %v595 = vunpack.c.h.b16 %v132
    %v596 = vunpack.c.l.b16 %v133
    %v597 = vunpack.c.h.b16 %v133
    %v598 = vunpack.c.l.b16 %v134
    %v599 = vunpack.c.h.b16 %v134
    %v600 = vunpack.c.l.b16 %v135
    %v601 = vunpack.c.h.b16 %v135
    %v602 = vunpack.c.l.b16 %v136
    %v603 = vunpack.c.h.b16 %v136
    %v604 = vunpack.c.l.b16 %v137
    %v605 = vunpack.c.h.b16 %v137
    %v606 = vunpack.c.l.b16 %v138
    %v607 = vunpack.c.h.b16 %v138
    %v608 = vunpack.c.l.b16 %v139
    %v609 = vunpack.c.h.b16 %v139
    %v610 = vunpack.c.l.b16 %v140
    %v611 = vunpack.c.h.b16 %v140
    %v612 = vunpack.c.l.b16 %v141
    %v613 = vunpack.c.h.b16 %v141
    %v614 = vunpack.c.l.b16 %v142
    %v615 = vunpack.c.h.b16 %v142
    %v616 = vunpack.c.l.b16 %v143
    %v617 = vunpack.c.h.b16 %v143
    %v618 = vunpack.c.l.b16 %v144
    %v619 = vunpack.c.h.b16 %v144
    %v620 = vunpack.c.l.b16 %v145
    %v621 = vunpack.c.h.b16 %v145
    %v622 = vunpack.c.l.b16 %v146
    %v623 = vunpack.c.h.b16 %v146
    %v624 = vunpack.c.l.b16 %v147
    %v625 = vunpack.c.h.b16 %v147
    %v626 = vunpack.c.l.b16 %v148
    %v627 = vunpack.c.h.b16 %v148
    %v628 = vunpack.c.l.b16 %v149
    %v629 = vunpack.c.h.b16 %v149
    %v630 = vunpack.c.l.b16 %v150
    %v631 = vunpack.c.h.b16 %v150
    %v632 = vunpack.c.l.b16 %v151
    %v633 = vunpack.c.h.b16 %v151
    %v634 = vunpack.c.l.b16 %v152
    %v635 = vunpack.c.h.b16 %v152
    %v636 = vunpack.c.l.b16 %v153
    %v637 = vunpack.c.h.b16 %v153
    %v638 = vunpack.c.l.b16 %v154
    %v639 = vunpack.c.h.b16 %v154
    %v640 = vunpack.c.l.b16 %v155
    %v641 = vunpack.c.h.b16 %v155
    %v642 = vunpack.c.l.b16 %v156
    %v643 = vunpack.c.h.b16 %v156
    %v644 = vunpack.c.l.b16 %v157
    %v645 = vunpack.c.h.b16 %v157
    %v646 = vunpack.c.l.b16 %v158
    %v647 = vunpack.c.h.b16 %v158
    %v648 = vunpack.c.l.b16 %v159
    %v649 = vunpack.c.h.b16 %v159
    %v650 = vunpack.c.l.b16 %v160
    %v651 = vunpack.c.h.b16 %v160
    %v652 = vunpack.c.l.b16 %v161
    %v653 = vunpack.c.h.b16 %v161
    %v654 = vunpack.c.l.b16 %v162
    %v655 = vunpack.c.h.b16 %v162
    %v656 = vunpack.c.l.b16 %v163
    %v657 = vunpack.c.h.b16 %v163
    %v658 = vunpack.c.l.b16 %v164
    %v659 = vunpack.c.h.b16 %v164
    %v660 = vunpack.c.l.b16 %v165
    %v661 = vunpack.c.h.b16 %v165
    %v662 = vunpack.c.l.b16 %v166
    %v663 = vunpack.c.h.b16 %v166
    %v664 = vunpack.c.l.b16 %v167
    %v665 = vunpack.c.h.b16 %v167
    %v666 = vunpack.c.l.b16 %v168
    %v667 = vunpack.c.h.b16 %v168
    %v668 = vunpack.c.l.b16 %v169
    %v669 = vunpack.c.h.b16 %v169
    %v670 = vunpack.c.l.b16 %v170
    %v671 = vunpack.c.h.b16 %v170
    %v672 = vunpack.c.l.b16 %v171
    %v673 = vunpack.c.h.b16 %v171
    %v674 = vunpack.c.l.b16 %v172
    %v675 = vunpack.c.h.b16 %v172
    %v676 = vunpack.c.l.b16 %v173
    %v677 = vunpack.c.h.b16 %v173
    %v678 = vunpack.c.l.b16 %v174
    %v679 = vunpack.c.h.b16 %v174
    %v680 = vunpack.c.l.b16 %v175
    %v681 = vunpack.c.h.b16 %v175
    %v682 = vunpack.c.l.b16 %v176
    %v683 = vunpack.c.h.b16 %v176
    %v684 = vunpack.c.l.b16 %v177
    %v685 = vunpack.c.h.b16 %v177
    %v686 = vunpack.c.l.b16 %v178
    %v687 = vunpack.c.h.b16 %v178
    %v688 = vunpack.c.l.b16 %v179
    %v689 = vunpack.c.h.b16 %v179
    %v690 = vunpack.c.l.b16 %v180
    %v691 = vunpack.c.h.b16 %v180
    %v692 = vunpack.c.l.b16 %v181
    %v693 = vunpack.c.h.b16 %v181
    %v694 = vunpack.c.l.b16 %v182
    %v695 = vunpack.c.h.b16 %v182
    %v696 = vunpack.c.l.b16 %v183
    %v697 = vunpack.c.h.b16 %v183
    %v698 = vunpack.c.l.b16 %v184
    %v699 = vunpack.c.h.b16 %v184
    %v700 = vunpack.c.l.b16 %v185
    %v701 = vunpack.c.h.b16 %v185
    %v702 = vunpack.c.l.b16 %v186
    %v703 = vunpack.c.h.b16 %v186
    %v704 = vunpack.c.l.b16 %v187
    %v705 = vunpack.c.h.b16 %v187
    %v706 = vunpack.c.l.b16 %v188
    %v707 = vunpack.c.h.b16 %v188
    %v708 = vunpack.c.l.b16 %v189
    %v709 = vunpack.c.h.b16 %v189
    %v710 = vunpack.c.l.b16 %v190
    %v711 = vunpack.c.h.b16 %v190
    %v712 = vunpack.c.l.b16 %v191
    %v713 = vunpack.c.h.b16 %v191
    %v714 = vunpack.c.l.b16 %v192
    %v715 = vunpack.c.h.b16 %v192
    %v716 = vunpack.c.l.b16 %v193
    %v717 = vunpack.c.h.b16 %v193
    %v718 = vunpack.c.l.b16 %v194
    %v719 = vunpack.c.h.b16 %v194
    %v720 = vunpack.c.l.b16 %v195
    %v721 = vunpack.c.h.b16 %v195
    %v722 = vunpack.c.l.b16 %v196
    %v723 = vunpack.c.h.b16 %v196
    %v724 = vunpack.c.l.b16 %v197
    %v725 = vunpack.c.h.b16 %v197
    %v726 = vpack.c.b16 %v536, %v534
    %v727 = vpack.c.b16 %v537, %v535
    %v728 = vpack.c.b16 %v540, %v538
    %v729 = vpack.c.b16 %v541, %v539
    %v730 = vpack.c.b16 %v544, %v542
    %v731 = vpack.c.b16 %v545, %v543
    %v732 = vpack.c.b16 %v548, %v546
    %v733 = vpack.c.b16 %v549, %v547
    %v734 = vpack.c.b16 %v552, %v550
    %v735 = vpack.c.b16 %v553, %v551
    %v736 = vpack.c.b16 %v556, %v554
    %v737 = vpack.c.b16 %v557, %v555
    %v738 = vpack.c.b16 %v560, %v558
    %v739 = vpack.c.b16 %v561, %v559
    %v740 = vpack.c.b16 %v564, %v562
    %v741 = vpack.c.b16 %v565, %v563
    %v742 = vpack.c.b16 %v568, %v566
    %v743 = vpack.c.b16 %v569, %v567
    %v744 = vpack.c.b16 %v572, %v570
    %v745 = vpack.c.b16 %v573, %v571
    %v746 = vpack.c.b16 %v576, %v574
    %v747 = vpack.c.b16 %v577, %v575
    %v748 = vpack.c.b16 %v580, %v578
    %v749 = vpack.c.b16 %v581, %v579
    %v750 = vpack.c.b16 %v584, %v582
    %v751 = vpack.c.b16 %v585, %v583
    %v752 = vpack.c.b16 %v588, %v586
    %v753 = vpack.c.b16 %v589, %v587
    %v754 = vpack.c.b16 %v592, %v590
    %v755 = vpack.c.b16 %v593, %v591
    %v756 = vpack.c.b16 %v596, %v594
    %v757 = vpack.c.b16 %v597, %v595
    %v758 = vpack.c.b16 %v600, %v598
    %v759 = vpack.c.b16 %v601, %v599
    %v760 = vpack.c.b16 %v604, %v602
    %v761 = vpack.c.b16 %v605, %v603
    %v762 = vpack.c.b16 %v608, %v606
    %v763 = vpack.c.b16 %v609, %v607
    %v764 = vpack.c.b16 %v612, %v610
    %v765 = vpack.c.b16 %v613, %v611
    %v766 = vpack.c.b16 %v616, %v614
    %v767 = vpack.c.b16 %v617, %v615
    %v768 = vpack.c.b16 %v620, %v618
    %v769 = vpack.c.b16 %v621, %v619
    %v770 = vpack.c.b16 %v624, %v622
    %v771 = vpack.c.b16 %v625, %v623
    %v772 = vpack.c.b16 %v628, %v626
    %v773 = vpack.c.b16 %v629, %v627
    %v774 = vpack.c.b16 %v632, %v630
    %v775 = vpack.c.b16 %v633, %v631
    %v776 = vpack.c.b16 %v636, %v634
    %v777 = vpack.c.b16 %v637, %v635
    %v778 = vpack.c.b16 %v640, %v638
    %v779 = vpack.c.b16 %v641, %v639
    %v780 = vpack.c.b16 %v644, %v642
    %v781 = vpack.c.b16 %v645, %v643
    %v782 = vpack.c.b16 %v648, %v646
    %v783 = vpack.c.b16 %v649, %v647
    %v784 = vpack.c.b16 %v652, %v650
    %v785 = vpack.c.b16 %v653, %v651
    %v786 = vpack.c.b16 %v656, %v654
    %v787 = vpack.c.b16 %v657, %v655
    %v788 = vpack.c.b16 %v660, %v658
    %v789 = vpack.c.b16 %v661, %v659
    %v790 = vpack.c.b16 %v664, %v662
    %v791 = vpack.c.b16 %v665, %v663
    %v792 = vpack.c.b16 %v668, %v666
    %v793 = vpack.c.b16 %v669, %v667
    %v794 = vpack.c.b16 %v672, %v670
    %v795 = vpack.c.b16 %v673, %v671
    %v796 = vpack.c.b16 %v676, %v674
    %v797 = vpack.c.b16 %v677, %v675
    %v798 = vpack.c.b16 %v680, %v678
    %v799 = vpack.c.b16 %v681, %v679
    %v800 = vpack.c.b16 %v684, %v682
    %v801 = vpack.c.b16 %v685, %v683
    %v802 = vpack.c.b16 %v688, %v686
    %v803 = vpack.c.b16 %v689, %v687
    %v804 = vpack.c.b16 %v692, %v690
    %v805 = vpack.c.b16 %v693, %v691
    %v806 = vpack.c.b16 %v696, %v694
    %v807 = vpack.c.b16 %v697, %v695
    %v808 = vpack.c.b16 %v700, %v698
    %v809 = vpack.c.b16 %v701, %v699
    %v810 = vpack.c.b16 %v704, %v702
    %v811 = vpack.c.b16 %v705, %v703
    %v812 = vpack.c.b16 %v708, %v706
    %v813 = vpack.c.b16 %v709, %v707
    %v814 = vpack.c.b16 %v712, %v710
    %v815 = vpack.c.b16 %v713, %v711
    %v816 = vpack.c.b16 %v716, %v714
    %v817 = vpack.c.b16 %v717, %v715
    %v818 = vpack.c.b16 %v720, %v718
    %v819 = vpack.c.b16 %v721, %v719
    %v820 = vpack.c.b16 %v724, %v722
    %v821 = vpack.c.b16 %v725, %v723
    %918 = vmatprep.subr.bf16.mxu0 %v727
    %919 = vmatpush1.bf16.msra.mxu0 %v726
    %920 = vmatprep.subr.bf16.mxu0 %v729
    %921 = vmatpush1.bf16.msra.mxu0 %v728
    %922 = vmatprep.subr.bf16.mxu0 %v731
    %923 = vmatpush1.bf16.msra.mxu0 %v730
    %924 = vmatprep.subr.bf16.mxu0 %v733
    %925 = vmatpush1.bf16.msra.mxu0 %v732
    %926 = vmatprep.subr.bf16.mxu0 %v735
    %927 = vmatpush1.bf16.msra.mxu0 %v734
    %928 = vmatprep.subr.bf16.mxu0 %v737
    %929 = vmatpush1.bf16.msra.mxu0 %v736
    %930 = vmatprep.subr.bf16.mxu0 %v739
    %931 = vmatpush1.bf16.msra.mxu0 %v738
    %932 = vmatprep.subr.bf16.mxu0 %v741
    %933 = vmatpush1.bf16.msra.mxu0 %v740
    %934 = vmatprep.subr.bf16.mxu0 %v743
    %935 = vmatpush1.bf16.msra.mxu0 %v742
    %936 = vmatprep.subr.bf16.mxu0 %v745
    %937 = vmatpush1.bf16.msra.mxu0 %v744
    %938 = vmatprep.subr.bf16.mxu0 %v747
    %939 = vmatpush1.bf16.msra.mxu0 %v746
    %940 = vmatprep.subr.bf16.mxu0 %v749
    %941 = vmatpush1.bf16.msra.mxu0 %v748
    %942 = vmatprep.subr.bf16.mxu0 %v751
    %943 = vmatpush1.bf16.msra.mxu0 %v750
    %944 = vmatprep.subr.bf16.mxu0 %v753
    %945 = vmatpush1.bf16.msra.mxu0 %v752
    %946 = vmatprep.subr.bf16.mxu0 %v755
    %947 = vmatpush1.bf16.msra.mxu0 %v754
    %948 = vmatprep.subr.bf16.mxu0 %v757
    %949 = vmatpush1.bf16.msra.mxu0 %v756
    %950 = vmatprep.mubr.bf16.mxu0 %v343
    %951 = vmatmul.mubr.bf16.gmra.mrb[0].mxu0 %v342
    %v952 = vpop.f32.mrb[0].mxu0
    %v953 = vadd.f32 0.0, %v952
    %v954 = vpop.f32.mrb[0].mxu0
    %v955 = vpop.f32.mrb[0].mxu0
    %v956 = vadd.f32 0.0, %v955
    %v957 = vpop.f32.mrb[0].mxu0
    %958 = vmatprep.mubr.bf16.mxu0 %v349
    %959 = vmatmul.mubr.bf16.gmra.mrb[0].mxu0 %v348
    %v960 = vpop.f32.mrb[0].mxu0
    %v961 = vadd.f32 0.0, %v960
    %v962 = vpop.f32.mrb[0].mxu0
    %v963 = vpop.f32.mrb[0].mxu0
    %v964 = vadd.f32 0.0, %v963
    %v965 = vpop.f32.mrb[0].mxu0
    %966 = vmatprep.mubr.bf16.mxu0 %v355
    %967 = vmatmul.mubr.bf16.gmra.mrb[0].mxu0 %v354
    %v968 = vpop.f32.mrb[0].mxu0
    %v969 = vadd.f32 0.0, %v968
    %v970 = vpop.f32.mrb[0].mxu0
    %v971 = vpop.f32.mrb[0].mxu0
    %v972 = vadd.f32 0.0, %v971
    %v973 = vpop.f32.mrb[0].mxu0
    %974 = vmatprep.mubr.bf16.mxu0 %v361
    %975 = vmatmul.mubr.bf16.gmra.mrb[0].mxu0 %v360
    %v976 = vpop.f32.mrb[0].mxu0
    %v977 = vadd.f32 0.0, %v976
    %v978 = vpop.f32.mrb[0].mxu0
    %v979 = vpop.f32.mrb[0].mxu0
    %v980 = vadd.f32 0.0, %v979
    %v981 = vpop.f32.mrb[0].mxu0
    %982 = vmatprep.mubr.bf16.mxu0 %v367
    %983 = vmatmul.mubr.bf16.gmra.mrb[0].mxu0 %v366
    %v984 = vpop.f32.mrb[0].mxu0
    %v985 = vpop.f32.mrb[0].mxu0
    %v986 = vadd.f32 0.0, %v985
    %v987 = vpop.f32.mrb[0].mxu0
    %v988 = vpop.f32.mrb[0].mxu0
    %v989 = vadd.f32 0.0, %v988
    %990 = vmatprep.mubr.bf16.mxu0 %v373
    %991 = vmatmul.mubr.bf16.gmra.mrb[0].mxu0 %v372
    %v992 = vpop.f32.mrb[0].mxu0
    %v993 = vpop.f32.mrb[0].mxu0
    %v994 = vadd.f32 0.0, %v993
    %v995 = vpop.f32.mrb[0].mxu0
    %v996 = vpop.f32.mrb[0].mxu0
    %v997 = vadd.f32 0.0, %v996
    %998 = vmatprep.mubr.bf16.mxu0 %v379
    %999 = vmatmul.mubr.bf16.gmra.mrb[0].mxu0 %v378
    %v1000 = vpop.f32.mrb[0].mxu0
    %v1001 = vpop.f32.mrb[0].mxu0
    %v1002 = vadd.f32 0.0, %v1001
    %v1003 = vpop.f32.mrb[0].mxu0
    %v1004 = vpop.f32.mrb[0].mxu0
    %v1005 = vadd.f32 0.0, %v1004
    %1006 = vmatprep.mubr.bf16.mxu0 %v385
    %1007 = vmatmul.mubr.bf16.gmra.mrb[0].mxu0 %v384
    %v1008 = vpop.f32.mrb[0].mxu0
    %v1009 = vpop.f32.mrb[0].mxu0
    %v1010 = vadd.f32 0.0, %v1009
    %v1011 = vpop.f32.mrb[0].mxu0
    %v1012 = vpop.f32.mrb[0].mxu0
    %v1013 = vadd.f32 0.0, %v1012
    %1014 = vdwg.mxu0
    %1015 = vmatprep.subr.bf16.mxu0 %v759
    %1016 = vmatpush1.bf16.msra.mxu0 %v758
    %1017 = vmatprep.subr.bf16.mxu0 %v761
    %1018 = vmatpush1.bf16.msra.mxu0 %v760
    %1019 = vmatprep.subr.bf16.mxu0 %v763
    %1020 = vmatpush1.bf16.msra.mxu0 %v762
    %1021 = vmatprep.subr.bf16.mxu0 %v765
    %1022 = vmatpush1.bf16.msra.mxu0 %v764
    %1023 = vmatprep.subr.bf16.mxu0 %v767
    %1024 = vmatpush1.bf16.msra.mxu0 %v766
    %1025 = vmatprep.subr.bf16.mxu0 %v769
    %1026 = vmatpush1.bf16.msra.mxu0 %v768
    %1027 = vmatprep.subr.bf16.mxu0 %v771
    %1028 = vmatpush1.bf16.msra.mxu0 %v770
    %1029 = vmatprep.subr.bf16.mxu0 %v773
    %1030 = vmatpush1.bf16.msra.mxu0 %v772
    %1031 = vmatprep.subr.bf16.mxu0 %v775
    %1032 = vmatpush1.bf16.msra.mxu0 %v774
    %1033 = vmatprep.subr.bf16.mxu0 %v777
    %1034 = vmatpush1.bf16.msra.mxu0 %v776
    %1035 = vmatprep.subr.bf16.mxu0 %v779
    %1036 = vmatpush1.bf16.msra.mxu0 %v778
    %1037 = vmatprep.subr.bf16.mxu0 %v781
    %1038 = vmatpush1.bf16.msra.mxu0 %v780
    %1039 = vmatprep.subr.bf16.mxu0 %v783
    %1040 = vmatpush1.bf16.msra.mxu0 %v782
    %1041 = vmatprep.subr.bf16.mxu0 %v785
    %1042 = vmatpush1.bf16.msra.mxu0 %v784
    %1043 = vmatprep.subr.bf16.mxu0 %v787
    %1044 = vmatpush1.bf16.msra.mxu0 %v786
    %1045 = vmatprep.subr.bf16.mxu0 %v789
    %1046 = vmatpush1.bf16.msra.mxu0 %v788
    %1047 = vmatprep.mubr.bf16.mxu0 %v345
    %1048 = vmatmul.mubr.bf16.gmra.mrb[0].mxu0 %v344
    %v1049 = vpop.f32.mrb[0].mxu0
    %v1050 = vadd.f32 %v953, %v1049
    %v1051 = vpop.f32.mrb[0].mxu0
    %v1052 = vpop.f32.mrb[0].mxu0
    %v1053 = vadd.f32 %v956, %v1052
    %v1054 = vpop.f32.mrb[0].mxu0
    %1055 = vmatprep.mubr.bf16.mxu0 %v351
    %1056 = vmatmul.mubr.bf16.gmra.mrb[0].mxu0 %v350
    %v1057 = vpop.f32.mrb[0].mxu0
    %v1058 = vadd.f32 %v961, %v1057
    %v1059 = vpop.f32.mrb[0].mxu0
    %v1060 = vpop.f32.mrb[0].mxu0
    %v1061 = vadd.f32 %v964, %v1060
    %v1062 = vpop.f32.mrb[0].mxu0
    %1063 = vmatprep.mubr.bf16.mxu0 %v357
    %1064 = vmatmul.mubr.bf16.gmra.mrb[0].mxu0 %v356
    %v1065 = vpop.f32.mrb[0].mxu0
    %v1066 = vadd.f32 %v969, %v1065
    %v1067 = vpop.f32.mrb[0].mxu0
    %v1068 = vpop.f32.mrb[0].mxu0
    %v1069 = vadd.f32 %v972, %v1068
    %v1070 = vpop.f32.mrb[0].mxu0
    %1071 = vmatprep.mubr.bf16.mxu0 %v363
    %1072 = vmatmul.mubr.bf16.gmra.mrb[0].mxu0 %v362
    %v1073 = vpop.f32.mrb[0].mxu0
    %v1074 = vadd.f32 %v977, %v1073
    %v1075 = vpop.f32.mrb[0].mxu0
    %v1076 = vpop.f32.mrb[0].mxu0
    %v1077 = vadd.f32 %v980, %v1076
    %v1078 = vpop.f32.mrb[0].mxu0
    %1079 = vmatprep.mubr.bf16.mxu0 %v369
    %1080 = vmatmul.mubr.bf16.gmra.mrb[0].mxu0 %v368
    %v1081 = vpop.f32.mrb[0].mxu0
    %v1082 = vpop.f32.mrb[0].mxu0
    %v1083 = vadd.f32 %v986, %v1082
    %v1084 = vpop.f32.mrb[0].mxu0
    %v1085 = vpop.f32.mrb[0].mxu0
    %v1086 = vadd.f32 %v989, %v1085
    %1087 = vmatprep.mubr.bf16.mxu0 %v375
    %1088 = vmatmul.mubr.bf16.gmra.mrb[0].mxu0 %v374
    %v1089 = vpop.f32.mrb[0].mxu0
    %v1090 = vpop.f32.mrb[0].mxu0
    %v1091 = vadd.f32 %v994, %v1090
    %v1092 = vpop.f32.mrb[0].mxu0
    %v1093 = vpop.f32.mrb[0].mxu0
    %v1094 = vadd.f32 %v997, %v1093
    %1095 = vmatprep.mubr.bf16.mxu0 %v381
    %1096 = vmatmul.mubr.bf16.gmra.mrb[0].mxu0 %v380
    %v1097 = vpop.f32.mrb[0].mxu0
    %v1098 = vpop.f32.mrb[0].mxu0
    %v1099 = vadd.f32 %v1002, %v1098
    %v1100 = vpop.f32.mrb[0].mxu0
    %v1101 = vpop.f32.mrb[0].mxu0
    %v1102 = vadd.f32 %v1005, %v1101
    %1103 = vmatprep.mubr.bf16.mxu0 %v387
    %1104 = vmatmul.mubr.bf16.gmra.mrb[0].mxu0 %v386
    %v1105 = vpop.f32.mrb[0].mxu0
    %v1106 = vpop.f32.mrb[0].mxu0
    %v1107 = vadd.f32 %v1010, %v1106
    %v1108 = vpop.f32.mrb[0].mxu0
    %v1109 = vpop.f32.mrb[0].mxu0
    %v1110 = vadd.f32 %v1013, %v1109
    %1111 = vdwg.mxu0
    %1112 = vmatprep.subr.bf16.mxu0 %v791
    %1113 = vmatpush1.bf16.msra.mxu0 %v790
    %1114 = vmatprep.subr.bf16.mxu0 %v793
    %1115 = vmatpush1.bf16.msra.mxu0 %v792
    %1116 = vmatprep.subr.bf16.mxu0 %v795
    %1117 = vmatpush1.bf16.msra.mxu0 %v794
    %1118 = vmatprep.subr.bf16.mxu0 %v797
    %1119 = vmatpush1.bf16.msra.mxu0 %v796
    %1120 = vmatprep.subr.bf16.mxu0 %v799
    %1121 = vmatpush1.bf16.msra.mxu0 %v798
    %1122 = vmatprep.subr.bf16.mxu0 %v801
    %1123 = vmatpush1.bf16.msra.mxu0 %v800
    %1124 = vmatprep.subr.bf16.mxu0 %v803
    %1125 = vmatpush1.bf16.msra.mxu0 %v802
    %1126 = vmatprep.subr.bf16.mxu0 %v805
    %1127 = vmatpush1.bf16.msra.mxu0 %v804
    %1128 = vmatprep.subr.bf16.mxu0 %v807
    %1129 = vmatpush1.bf16.msra.mxu0 %v806
    %1130 = vmatprep.subr.bf16.mxu0 %v809
    %1131 = vmatpush1.bf16.msra.mxu0 %v808
    %1132 = vmatprep.subr.bf16.mxu0 %v811
    %1133 = vmatpush1.bf16.msra.mxu0 %v810
    %1134 = vmatprep.subr.bf16.mxu0 %v813
    %1135 = vmatpush1.bf16.msra.mxu0 %v812
    %1136 = vmatprep.subr.bf16.mxu0 %v815
    %1137 = vmatpush1.bf16.msra.mxu0 %v814
    %1138 = vmatprep.subr.bf16.mxu0 %v817
    %1139 = vmatpush1.bf16.msra.mxu0 %v816
    %1140 = vmatprep.subr.bf16.mxu0 %v819
    %1141 = vmatpush1.bf16.msra.mxu0 %v818
    %1142 = vmatprep.subr.bf16.mxu0 %v821
    %1143 = vmatpush1.bf16.msra.mxu0 %v820
    %1144 = vmatprep.mubr.bf16.mxu0 %v347
    %1145 = vmatmul.mubr.bf16.gmra.mrb[0].mxu0 %v346
    %v1146 = vpop.f32.mrb[0].mxu0
    %v1147 = vadd.f32 %v1050, %v1146
    %v1148 = vpop.f32.mrb[0].mxu0
    %v1149 = vpop.f32.mrb[0].mxu0
    %v1150 = vadd.f32 %v1053, %v1149
    %v1151 = vpop.f32.mrb[0].mxu0
    %1152 = vmatprep.mubr.bf16.mxu0 %v353
    %1153 = vmatmul.mubr.bf16.gmra.mrb[0].mxu0 %v352
    %v1154 = vpop.f32.mrb[0].mxu0
    %v1155 = vadd.f32 %v1058, %v1154
    %v1156 = vpop.f32.mrb[0].mxu0
    %v1157 = vpop.f32.mrb[0].mxu0
    %v1158 = vadd.f32 %v1061, %v1157
    %v1159 = vpop.f32.mrb[0].mxu0
    %1160 = vmatprep.mubr.bf16.mxu0 %v359
    %1161 = vmatmul.mubr.bf16.gmra.mrb[0].mxu0 %v358
    %v1162 = vpop.f32.mrb[0].mxu0
    %v1163 = vadd.f32 %v1066, %v1162
    %v1164 = vpop.f32.mrb[0].mxu0
    %v1165 = vpop.f32.mrb[0].mxu0
    %v1166 = vadd.f32 %v1069, %v1165
    %v1167 = vpop.f32.mrb[0].mxu0
    %1168 = vmatprep.mubr.bf16.mxu0 %v365
    %1169 = vmatmul.mubr.bf16.gmra.mrb[0].mxu0 %v364
    %v1170 = vpop.f32.mrb[0].mxu0
    %v1171 = vadd.f32 %v1074, %v1170
    %v1172 = vpop.f32.mrb[0].mxu0
    %v1173 = vpop.f32.mrb[0].mxu0
    %v1174 = vadd.f32 %v1077, %v1173
    %v1175 = vpop.f32.mrb[0].mxu0
    %1176 = vmatprep.mubr.bf16.mxu0 %v371
    %1177 = vmatmul.mubr.bf16.gmra.mrb[0].mxu0 %v370
    %v1178 = vpop.f32.mrb[0].mxu0
    %v1179 = vpop.f32.mrb[0].mxu0
    %v1180 = vadd.f32 %v1083, %v1179
    %v1181 = vpop.f32.mrb[0].mxu0
    %v1182 = vpop.f32.mrb[0].mxu0
    %v1183 = vadd.f32 %v1086, %v1182
    %1184 = vmatprep.mubr.bf16.mxu0 %v377
    %1185 = vmatmul.mubr.bf16.gmra.mrb[0].mxu0 %v376
    %v1186 = vpop.f32.mrb[0].mxu0
    %v1187 = vpop.f32.mrb[0].mxu0
    %v1188 = vadd.f32 %v1091, %v1187
    %v1189 = vpop.f32.mrb[0].mxu0
    %v1190 = vpop.f32.mrb[0].mxu0
    %v1191 = vadd.f32 %v1094, %v1190
    %1192 = vmatprep.mubr.bf16.mxu0 %v383
    %1193 = vmatmul.mubr.bf16.gmra.mrb[0].mxu0 %v382
    %v1194 = vpop.f32.mrb[0].mxu0
    %v1195 = vpop.f32.mrb[0].mxu0
    %v1196 = vadd.f32 %v1099, %v1195
    %v1197 = vpop.f32.mrb[0].mxu0
    %v1198 = vpop.f32.mrb[0].mxu0
    %v1199 = vadd.f32 %v1102, %v1198
    %1200 = vmatprep.mubr.bf16.mxu0 %v389
    %1201 = vmatmul.mubr.bf16.gmra.mrb[0].mxu0 %v388
    %v1202 = vpop.f32.mrb[0].mxu0
    %v1203 = vpop.f32.mrb[0].mxu0
    %v1204 = vadd.f32 %v1107, %v1203
    %v1205 = vpop.f32.mrb[0].mxu0
    %v1206 = vpop.f32.mrb[0].mxu0
    %v1207 = vadd.f32 %v1110, %v1206
    %1208 = vdwg.mxu0
    %v1209 = vld [vmem:[%s2] sm:$0x1]
    %v1211 = vlaneseq
    %v1212 = vshrl.u32 %v1211, 7
    %v1213 = vsub.s32 0, %v1212
    %v1214 = vrot.slane %v1209, %v1213
    %v1216 = vadd.f32 %v1147, %v1214
    %v1217 = vadd.f32 %v1150, %v1214
    %v1218 = vadd.f32 %v1155, %v1214
    %v1219 = vadd.f32 %v1158, %v1214
    %v1220 = vadd.f32 %v1163, %v1214
    %v1221 = vadd.f32 %v1166, %v1214
    %v1222 = vadd.f32 %v1171, %v1214
    %v1223 = vadd.f32 %v1174, %v1214
    %1224 = vst [vmem:[#allocation3] sm:$0xff] %v1216
    %1225 = vst [vmem:[#allocation3 + $0x8] sm:$0xff] %v1217
    %1226 = vst [vmem:[#allocation3 + $0x10] sm:$0xff] %v1218
    %1227 = vst [vmem:[#allocation3 + $0x18] sm:$0xff] %v1219
    %1228 = vst [vmem:[#allocation3 + $0x20] sm:$0xff] %v1220
    %1229 = vst [vmem:[#allocation3 + $0x28] sm:$0xff] %v1221
    %1230 = vst [vmem:[#allocation3 + $0x30] sm:$0xff] %v1222
    %1231 = vst [vmem:[#allocation3 + $0x38] sm:$0xff] %v1223
    %v1232 = vld [vmem:[%s3] sm:$0x1]
    %v1234 = vlaneseq
    %v1235 = vshrl.u32 %v1234, 7
    %v1236 = vsub.s32 0, %v1235
    %v1237 = vrot.slane %v1232, %v1236
    %v1239 = vadd.f32 %v1180, %v1237
    %v1240 = vadd.f32 %v1183, %v1237
    %v1241 = vadd.f32 %v1188, %v1237
    %v1242 = vadd.f32 %v1191, %v1237
    %v1243 = vadd.f32 %v1196, %v1237
    %v1244 = vadd.f32 %v1199, %v1237
    %v1245 = vadd.f32 %v1204, %v1237
    %v1246 = vadd.f32 %v1207, %v1237
    %1247 = vst [vmem:[#allocation3 + $0x40] sm:$0xff] %v1239
    %1248 = vst [vmem:[#allocation3 + $0x48] sm:$0xff] %v1240
    %1249 = vst [vmem:[#allocation3 + $0x50] sm:$0xff] %v1241
    %1250 = vst [vmem:[#allocation3 + $0x58] sm:$0xff] %v1242
    %1251 = vst [vmem:[#allocation3 + $0x60] sm:$0xff] %v1243
    %1252 = vst [vmem:[#allocation3 + $0x68] sm:$0xff] %v1244
    %1253 = vst [vmem:[#allocation3 + $0x70] sm:$0xff] %v1245
    %1254 = vst [vmem:[#allocation3 + $0x78] sm:$0xff] %v1246
    %v1255 = vld [vmem:[%s4] sm:$0xff]
    %v1256 = vld [vmem:[%s4 + $0x8] sm:$0xff]
    %v1257 = vld [vmem:[%s4 + $0x10] sm:$0xff]
    %v1258 = vld [vmem:[%s4 + $0x18] sm:$0xff]
    %v1259 = vld [vmem:[%s4 + $0x20] sm:$0xff]
    %v1260 = vld [vmem:[%s4 + $0x28] sm:$0xff]
    %v1261 = vld [vmem:[%s4 + $0x30] sm:$0xff]
    %v1262 = vld [vmem:[%s4 + $0x38] sm:$0xff]
    %vm1263 = vcmask 261120
    %v1265 = vsel %vm1263, 0.0, 0
    %1267 = vmatprep.subr.mxu0 %v1256
    %1268 = vmatpush1.msra.mxu0 %v1255
    %1269 = vmatprep.subr.mxu0 %v1258
    %1270 = vmatpush1.msra.mxu0 %v1257
    %1271 = vmatprep.subr.mxu0 %v1260
    %1272 = vmatpush1.msra.mxu0 %v1259
    %1273 = vmatprep.subr.mxu0 %v1262
    %1274 = vmatpush1.msra.mxu0 %v1261
    %1275 = vmatprep.subr.mxu0 0.0
    %1276 = vmatpush1.msra.mxu0 0.0
    %1277 = vmatprep.subr.mxu0 0.0
    %1278 = vmatpush1.msra.mxu0 0.0
    %1279 = vmatprep.subr.mxu0 0.0
    %1280 = vmatpush1.msra.mxu0 0.0
    %1281 = vmatprep.subr.mxu0 0.0
    %1282 = vmatpush1.msra.mxu0 0.0
    %1283 = vmatprep.subr.mxu0 0.0
    %1284 = vmatpush1.msra.mxu0 0.0
    %1285 = vmatprep.subr.mxu0 0.0
    %1286 = vmatpush1.msra.mxu0 0.0
    %1287 = vmatprep.subr.mxu0 0.0
    %1288 = vmatpush1.msra.mxu0 0.0
    %1289 = vmatprep.subr.mxu0 0.0
    %1290 = vmatpush1.msra.mxu0 0.0
    %1291 = vmatprep.subr.mxu0 0.0
    %1292 = vmatpush1.msra.mxu0 0.0
    %1293 = vmatprep.subr.mxu0 0.0
    %1294 = vmatpush1.msra.mxu0 0.0
    %1295 = vmatprep.subr.mxu0 0.0
    %1296 = vmatpush1.msra.mxu0 0.0
    %1297 = vmatprep.subr.mxu0 0.0
    %1298 = vmatpush1.msra.mxu0 0.0
    %1299 = vmatprep.subr.mxu0 0.0
    %1300 = vmatpush1.msra.mxu0 0.0
    %1301 = vmatprep.subr.mxu0 0.0
    %1302 = vmatpush1.msra.mxu0 0.0
    %1303 = vmatprep.subr.mxu0 0.0
    %1304 = vmatpush1.msra.mxu0 0.0
    %1305 = vmatprep.subr.mxu0 0.0
    %1306 = vmatpush1.msra.mxu0 0.0
    %1307 = vmatprep.subr.mxu0 0.0
    %1308 = vmatpush1.msra.mxu0 0.0
    %1309 = vmatprep.subr.mxu0 0.0
    %1310 = vmatpush1.msra.mxu0 0.0
    %1311 = vmatprep.subr.mxu0 0.0
    %1312 = vmatpush1.msra.mxu0 0.0
    %1313 = vmatprep.subr.mxu0 0.0
    %1314 = vmatpush1.msra.mxu0 0.0
    %1315 = vmatprep.subr.mxu0 0.0
    %1316 = vmatpush1.msra.mxu0 0.0
    %1317 = vmatprep.subr.mxu0 0.0
    %1318 = vmatpush1.msra.mxu0 0.0
    %1319 = vmatprep.subr.mxu0 0.0
    %1320 = vmatpush1.msra.mxu0 0.0
    %1321 = vmatprep.subr.mxu0 0.0
    %1322 = vmatpush1.msra.mxu0 0.0
    %1323 = vmatprep.subr.mxu0 0.0
    %1324 = vmatpush1.msra.mxu0 0.0
    %1325 = vmatprep.subr.mxu0 0.0
    %1326 = vmatpush1.msra.mxu0 0.0
    %1327 = vmatprep.subr.mxu0 0.0
    %1328 = vmatpush1.msra.mxu0 0.0
    %1329 = vmatprep.subr.mxu0 0.0
    %1330 = vmatpush1.msra.mxu0 0.0
    %1331 = vmatprep.mubr.f32.mxu0 0.0
    %1332 = vmatmul.mubr.f32.gmra.mrb[0].mxu0 %v1265
    %v1333 = vpop.f32.mrb[0].mxu0
    %v1334 = vadd.f32 0.0, %v1333
    %v1335 = vpop.f32.mrb[0].mxu0
    %1336 = vmatprep.mubr.f32.mxu0 0.0
    %1337 = vmatmul.mubr.f32.gmra.mrb[0].mxu0 %v1265
    %v1338 = vpop.f32.mrb[0].mxu0
    %v1339 = vpop.f32.mrb[0].mxu0
    %v1340 = vadd.f32 0.0, %v1339
    %1341 = vdwg.mxu0
    %v1342 = vld [vmem:[#allocation3] sm:$0xff]
    %v1343 = vadd.f32 %v1342, %v1334
    %v1344 = vld [vmem:[#allocation3 + $0x40] sm:$0xff]
    %v1345 = vadd.f32 %v1344, %v1340
    %v1346 = vxor.u32 %v1343, 2147483648
    %v1347 = vxor.u32 %v1345, 2147483648
    %v1348 = vmul.f32 %v1346, 1.442695
    %v1349 = vpow.pop %v1348
    %v1350 = vmul.f32 %v1347, 1.442695
    %v1351 = vpow.pop %v1350
    %v1352 = vadd.f32 %v1349, 1.0
    %v1353 = vadd.f32 %v1351, 1.0
    %v1354 = vrcp.pop %v1352
    %v1355 = vmul.f32 1.0, %v1354
    %v1356 = vrcp.pop %v1353
    %v1357 = vmul.f32 1.0, %v1356
    %v1358 = vtanh.pop %v1343
    %v1359 = vtanh.pop %v1345
    %v1360 = vmul.f32 %v1355, 0.0
    %v1361 = vmul.f32 %v1357, 0.0
    %1364 = vrot.lane.b32.xlu0 %v1358, 32
    %v1365 = vpop.permute.xlu0 %1364
    %1366 = vrot.lane.b32.xlu0 %v1359, 32
    %v1367 = vpop.permute.xlu0 %1366
    %v1370 = vmul.f32 %v1355, %v1365
    %v1371 = vmul.f32 %v1357, %v1367
    %1374 = vrot.lane.b32.xlu0 %v1370, 32
    %v1375 = vpop.permute.xlu0 %1374
    %1376 = vrot.lane.b32.xlu0 %v1371, 32
    %v1377 = vpop.permute.xlu0 %1376
    %v1380 = vadd.f32 %v1360, %v1375
    %v1381 = vadd.f32 %v1361, %v1377
    %v1382 = vtanh.pop %v1380
    %v1383 = vtanh.pop %v1381
    %1386 = vrot.lane.b32.xlu0 %v1382, 32
    %v1387 = vpop.permute.xlu0 %1386
    %1388 = vrot.lane.b32.xlu0 %v1383, 32
    %v1389 = vpop.permute.xlu0 %1388
    %v1392 = vmul.f32 %v1355, %v1387
    %v1393 = vmul.f32 %v1357, %v1389
    %1396 = vrot.lane.b32.xlu0 %v1392, 64
    %v1397 = vpop.permute.xlu0 %1396
    %1398 = vrot.lane.b32.xlu0 %v1393, 64
    %v1399 = vpop.permute.xlu0 %1398
    %v1400 = vsel %vm1263, %v1397, 0
    %v1402 = vsel %vm1263, %v1399, 0
    %1404 = vmatprep.subr.mxu0 %v1256
    %1405 = vmatpush1.msra.mxu0 %v1255
    %1406 = vmatprep.subr.mxu0 %v1258
    %1407 = vmatpush1.msra.mxu0 %v1257
    %1408 = vmatprep.subr.mxu0 %v1260
    %1409 = vmatpush1.msra.mxu0 %v1259
    %1410 = vmatprep.subr.mxu0 %v1262
    %1411 = vmatpush1.msra.mxu0 %v1261
    %1412 = vmatprep.subr.mxu0 0.0
    %1413 = vmatpush1.msra.mxu0 0.0
    %1414 = vmatprep.subr.mxu0 0.0
    %1415 = vmatpush1.msra.mxu0 0.0
    %1416 = vmatprep.subr.mxu0 0.0
    %1417 = vmatpush1.msra.mxu0 0.0
    %1418 = vmatprep.subr.mxu0 0.0
    %1419 = vmatpush1.msra.mxu0 0.0
    %1420 = vmatprep.subr.mxu0 0.0
    %1421 = vmatpush1.msra.mxu0 0.0
    %1422 = vmatprep.subr.mxu0 0.0
    %1423 = vmatpush1.msra.mxu0 0.0
    %1424 = vmatprep.subr.mxu0 0.0
    %1425 = vmatpush1.msra.mxu0 0.0
    %1426 = vmatprep.subr.mxu0 0.0
    %1427 = vmatpush1.msra.mxu0 0.0
    %1428 = vmatprep.subr.mxu0 0.0
    %1429 = vmatpush1.msra.mxu0 0.0
    %1430 = vmatprep.subr.mxu0 0.0
    %1431 = vmatpush1.msra.mxu0 0.0
    %1432 = vmatprep.subr.mxu0 0.0
    %1433 = vmatpush1.msra.mxu0 0.0
    %1434 = vmatprep.subr.mxu0 0.0
    %1435 = vmatpush1.msra.mxu0 0.0
    %1436 = vmatprep.subr.mxu0 0.0
    %1437 = vmatpush1.msra.mxu0 0.0
    %1438 = vmatprep.subr.mxu0 0.0
    %1439 = vmatpush1.msra.mxu0 0.0
    %1440 = vmatprep.subr.mxu0 0.0
    %1441 = vmatpush1.msra.mxu0 0.0
    %1442 = vmatprep.subr.mxu0 0.0
    %1443 = vmatpush1.msra.mxu0 0.0
    %1444 = vmatprep.subr.mxu0 0.0
    %1445 = vmatpush1.msra.mxu0 0.0
    %1446 = vmatprep.subr.mxu0 0.0
    %1447 = vmatpush1.msra.mxu0 0.0
    %1448 = vmatprep.subr.mxu0 0.0
    %1449 = vmatpush1.msra.mxu0 0.0
    %1450 = vmatprep.subr.mxu0 0.0
    %1451 = vmatpush1.msra.mxu0 0.0
    %1452 = vmatprep.subr.mxu0 0.0
    %1453 = vmatpush1.msra.mxu0 0.0
    %1454 = vmatprep.subr.mxu0 0.0
    %1455 = vmatpush1.msra.mxu0 0.0
    %1456 = vmatprep.subr.mxu0 0.0
    %1457 = vmatpush1.msra.mxu0 0.0
    %1458 = vmatprep.subr.mxu0 0.0
    %1459 = vmatpush1.msra.mxu0 0.0
    %1460 = vmatprep.subr.mxu0 0.0
    %1461 = vmatpush1.msra.mxu0 0.0
    %1462 = vmatprep.subr.mxu0 0.0
    %1463 = vmatpush1.msra.mxu0 0.0
    %1464 = vmatprep.subr.mxu0 0.0
    %1465 = vmatpush1.msra.mxu0 0.0
    %1466 = vmatprep.subr.mxu0 0.0
    %1467 = vmatpush1.msra.mxu0 0.0
    %1468 = vmatprep.mubr.f32.mxu0 0.0
    %1469 = vmatmul.mubr.f32.gmra.mrb[0].mxu0 %v1400
    %v1470 = vpop.f32.mrb[0].mxu0
    %v1471 = vadd.f32 0.0, %v1470
    %v1472 = vpop.f32.mrb[0].mxu0
    %1473 = vmatprep.mubr.f32.mxu0 0.0
    %1474 = vmatmul.mubr.f32.gmra.mrb[0].mxu0 %v1402
    %v1475 = vpop.f32.mrb[0].mxu0
    %v1476 = vpop.f32.mrb[0].mxu0
    %v1477 = vadd.f32 0.0, %v1476
    %1478 = vdwg.mxu0
    %v1479 = vld [vmem:[#allocation3 + $0x8] sm:$0xff]
    %v1480 = vadd.f32 %v1479, %v1471
    %v1481 = vld [vmem:[#allocation3 + $0x48] sm:$0xff]
    %v1482 = vadd.f32 %v1481, %v1477
    %v1483 = vxor.u32 %v1480, 2147483648
    %v1484 = vxor.u32 %v1482, 2147483648
    %v1485 = vmul.f32 %v1483, 1.442695
    %v1486 = vpow.pop %v1485
    %v1487 = vmul.f32 %v1484, 1.442695
    %v1488 = vpow.pop %v1487
    %v1489 = vadd.f32 %v1486, 1.0
    %v1490 = vadd.f32 %v1488, 1.0
    %v1491 = vrcp.pop %v1489
    %v1492 = vmul.f32 1.0, %v1491
    %v1493 = vrcp.pop %v1490
    %v1494 = vmul.f32 1.0, %v1493
    %v1495 = vtanh.pop %v1480
    %v1496 = vtanh.pop %v1482
    %v1497 = vmul.f32 %v1492, %v1380
    %v1498 = vmul.f32 %v1494, %v1381
    %1501 = vrot.lane.b32.xlu0 %v1495, 32
    %v1502 = vpop.permute.xlu0 %1501
    %1503 = vrot.lane.b32.xlu0 %v1496, 32
    %v1504 = vpop.permute.xlu0 %1503
    %v1507 = vmul.f32 %v1492, %v1502
    %v1508 = vmul.f32 %v1494, %v1504
    %1511 = vrot.lane.b32.xlu0 %v1507, 32
    %v1512 = vpop.permute.xlu0 %1511
    %1513 = vrot.lane.b32.xlu0 %v1508, 32
    %v1514 = vpop.permute.xlu0 %1513
    %v1517 = vadd.f32 %v1497, %v1512
    %v1518 = vadd.f32 %v1498, %v1514
    %v1519 = vtanh.pop %v1517
    %v1520 = vtanh.pop %v1518
    %1523 = vrot.lane.b32.xlu0 %v1519, 32
    %v1524 = vpop.permute.xlu0 %1523
    %1525 = vrot.lane.b32.xlu0 %v1520, 32
    %v1526 = vpop.permute.xlu0 %1525
    %v1529 = vmul.f32 %v1492, %v1524
    %v1530 = vmul.f32 %v1494, %v1526
    %1533 = vrot.lane.b32.xlu0 %v1529, 64
    %v1534 = vpop.permute.xlu0 %1533
    %1535 = vrot.lane.b32.xlu0 %v1530, 64
    %v1536 = vpop.permute.xlu0 %1535
    %v1537 = vsel %vm1263, %v1534, 0
    %v1539 = vsel %vm1263, %v1536, 0
    %1541 = vmatprep.subr.mxu0 %v1256
    %1542 = vmatpush1.msra.mxu0 %v1255
    %1543 = vmatprep.subr.mxu0 %v1258
    %1544 = vmatpush1.msra.mxu0 %v1257
    %1545 = vmatprep.subr.mxu0 %v1260
    %1546 = vmatpush1.msra.mxu0 %v1259
    %1547 = vmatprep.subr.mxu0 %v1262
    %1548 = vmatpush1.msra.mxu0 %v1261
    %1549 = vmatprep.subr.mxu0 0.0
    %1550 = vmatpush1.msra.mxu0 0.0
    %1551 = vmatprep.subr.mxu0 0.0
    %1552 = vmatpush1.msra.mxu0 0.0
    %1553 = vmatprep.subr.mxu0 0.0
    %1554 = vmatpush1.msra.mxu0 0.0
    %1555 = vmatprep.subr.mxu0 0.0
    %1556 = vmatpush1.msra.mxu0 0.0
    %1557 = vmatprep.subr.mxu0 0.0
    %1558 = vmatpush1.msra.mxu0 0.0
    %1559 = vmatprep.subr.mxu0 0.0
    %1560 = vmatpush1.msra.mxu0 0.0
    %1561 = vmatprep.subr.mxu0 0.0
    %1562 = vmatpush1.msra.mxu0 0.0
    %1563 = vmatprep.subr.mxu0 0.0
    %1564 = vmatpush1.msra.mxu0 0.0
    %1565 = vmatprep.subr.mxu0 0.0
    %1566 = vmatpush1.msra.mxu0 0.0
    %1567 = vmatprep.subr.mxu0 0.0
    %1568 = vmatpush1.msra.mxu0 0.0
    %1569 = vmatprep.subr.mxu0 0.0
    %1570 = vmatpush1.msra.mxu0 0.0
    %1571 = vmatprep.subr.mxu0 0.0
    %1572 = vmatpush1.msra.mxu0 0.0
    %1573 = vmatprep.subr.mxu0 0.0
    %1574 = vmatpush1.msra.mxu0 0.0
    %1575 = vmatprep.subr.mxu0 0.0
    %1576 = vmatpush1.msra.mxu0 0.0
    %1577 = vmatprep.subr.mxu0 0.0
    %1578 = vmatpush1.msra.mxu0 0.0
    %1579 = vmatprep.subr.mxu0 0.0
    %1580 = vmatpush1.msra.mxu0 0.0
    %1581 = vmatprep.subr.mxu0 0.0
    %1582 = vmatpush1.msra.mxu0 0.0
    %1583 = vmatprep.subr.mxu0 0.0
    %1584 = vmatpush1.msra.mxu0 0.0
    %1585 = vmatprep.subr.mxu0 0.0
    %1586 = vmatpush1.msra.mxu0 0.0
    %1587 = vmatprep.subr.mxu0 0.0
    %1588 = vmatpush1.msra.mxu0 0.0
    %1589 = vmatprep.subr.mxu0 0.0
    %1590 = vmatpush1.msra.mxu0 0.0
    %1591 = vmatprep.subr.mxu0 0.0
    %1592 = vmatpush1.msra.mxu0 0.0
    %1593 = vmatprep.subr.mxu0 0.0
    %1594 = vmatpush1.msra.mxu0 0.0
    %1595 = vmatprep.subr.mxu0 0.0
    %1596 = vmatpush1.msra.mxu0 0.0
    %1597 = vmatprep.subr.mxu0 0.0
    %1598 = vmatpush1.msra.mxu0 0.0
    %1599 = vmatprep.subr.mxu0 0.0
    %1600 = vmatpush1.msra.mxu0 0.0
    %1601 = vmatprep.subr.mxu0 0.0
    %1602 = vmatpush1.msra.mxu0 0.0
    %1603 = vmatprep.subr.mxu0 0.0
    %1604 = vmatpush1.msra.mxu0 0.0
    %1605 = vmatprep.mubr.f32.mxu0 0.0
    %1606 = vmatmul.mubr.f32.gmra.mrb[0].mxu0 %v1537
    %v1607 = vpop.f32.mrb[0].mxu0
    %v1608 = vadd.f32 0.0, %v1607
    %v1609 = vpop.f32.mrb[0].mxu0
    %1610 = vmatprep.mubr.f32.mxu0 0.0
    %1611 = vmatmul.mubr.f32.gmra.mrb[0].mxu0 %v1539
    %v1612 = vpop.f32.mrb[0].mxu0
    %v1613 = vpop.f32.mrb[0].mxu0
    %v1614 = vadd.f32 0.0, %v1613
    %1615 = vdwg.mxu0
    %v1616 = vld [vmem:[#allocation3 + $0x10] sm:$0xff]
    %v1617 = vadd.f32 %v1616, %v1608
    %v1618 = vld [vmem:[#allocation3 + $0x50] sm:$0xff]
    %v1619 = vadd.f32 %v1618, %v1614
    %v1620 = vxor.u32 %v1617, 2147483648
    %v1621 = vxor.u32 %v1619, 2147483648
    %v1622 = vmul.f32 %v1620, 1.442695
    %v1623 = vpow.pop %v1622
    %v1624 = vmul.f32 %v1621, 1.442695
    %v1625 = vpow.pop %v1624
    %v1626 = vadd.f32 %v1623, 1.0
    %v1627 = vadd.f32 %v1625, 1.0
    %v1628 = vrcp.pop %v1626
    %v1629 = vmul.f32 1.0, %v1628
    %v1630 = vrcp.pop %v1627
    %v1631 = vmul.f32 1.0, %v1630
    %v1632 = vtanh.pop %v1617
    %v1633 = vtanh.pop %v1619
    %v1634 = vmul.f32 %v1629, %v1517
    %v1635 = vmul.f32 %v1631, %v1518
    %1638 = vrot.lane.b32.xlu0 %v1632, 32
    %v1639 = vpop.permute.xlu0 %1638
    %1640 = vrot.lane.b32.xlu0 %v1633, 32
    %v1641 = vpop.permute.xlu0 %1640
    %v1644 = vmul.f32 %v1629, %v1639
    %v1645 = vmul.f32 %v1631, %v1641
    %1648 = vrot.lane.b32.xlu0 %v1644, 32
    %v1649 = vpop.permute.xlu0 %1648
    %1650 = vrot.lane.b32.xlu0 %v1645, 32
    %v1651 = vpop.permute.xlu0 %1650
    %v1654 = vadd.f32 %v1634, %v1649
    %v1655 = vadd.f32 %v1635, %v1651
    %v1656 = vtanh.pop %v1654
    %v1657 = vtanh.pop %v1655
    %1660 = vrot.lane.b32.xlu0 %v1656, 32
    %v1661 = vpop.permute.xlu0 %1660
    %1662 = vrot.lane.b32.xlu0 %v1657, 32
    %v1663 = vpop.permute.xlu0 %1662
    %v1666 = vmul.f32 %v1629, %v1661
    %v1667 = vmul.f32 %v1631, %v1663
    %1670 = vrot.lane.b32.xlu0 %v1666, 64
    %v1671 = vpop.permute.xlu0 %1670
    %1672 = vrot.lane.b32.xlu0 %v1667, 64
    %v1673 = vpop.permute.xlu0 %1672
    %v1674 = vsel %vm1263, %v1671, 0
    %v1676 = vsel %vm1263, %v1673, 0
    %1678 = vmatprep.subr.mxu0 %v1256
    %1679 = vmatpush1.msra.mxu0 %v1255
    %1680 = vmatprep.subr.mxu0 %v1258
    %1681 = vmatpush1.msra.mxu0 %v1257
    %1682 = vmatprep.subr.mxu0 %v1260
    %1683 = vmatpush1.msra.mxu0 %v1259
    %1684 = vmatprep.subr.mxu0 %v1262
    %1685 = vmatpush1.msra.mxu0 %v1261
    %1686 = vmatprep.subr.mxu0 0.0
    %1687 = vmatpush1.msra.mxu0 0.0
    %1688 = vmatprep.subr.mxu0 0.0
    %1689 = vmatpush1.msra.mxu0 0.0
    %1690 = vmatprep.subr.mxu0 0.0
    %1691 = vmatpush1.msra.mxu0 0.0
    %1692 = vmatprep.subr.mxu0 0.0
    %1693 = vmatpush1.msra.mxu0 0.0
    %1694 = vmatprep.subr.mxu0 0.0
    %1695 = vmatpush1.msra.mxu0 0.0
    %1696 = vmatprep.subr.mxu0 0.0
    %1697 = vmatpush1.msra.mxu0 0.0
    %1698 = vmatprep.subr.mxu0 0.0
    %1699 = vmatpush1.msra.mxu0 0.0
    %1700 = vmatprep.subr.mxu0 0.0
    %1701 = vmatpush1.msra.mxu0 0.0
    %1702 = vmatprep.subr.mxu0 0.0
    %1703 = vmatpush1.msra.mxu0 0.0
    %1704 = vmatprep.subr.mxu0 0.0
    %1705 = vmatpush1.msra.mxu0 0.0
    %1706 = vmatprep.subr.mxu0 0.0
    %1707 = vmatpush1.msra.mxu0 0.0
    %1708 = vmatprep.subr.mxu0 0.0
    %1709 = vmatpush1.msra.mxu0 0.0
    %1710 = vmatprep.subr.mxu0 0.0
    %1711 = vmatpush1.msra.mxu0 0.0
    %1712 = vmatprep.subr.mxu0 0.0
    %1713 = vmatpush1.msra.mxu0 0.0
    %1714 = vmatprep.subr.mxu0 0.0
    %1715 = vmatpush1.msra.mxu0 0.0
    %1716 = vmatprep.subr.mxu0 0.0
    %1717 = vmatpush1.msra.mxu0 0.0
    %1718 = vmatprep.subr.mxu0 0.0
    %1719 = vmatpush1.msra.mxu0 0.0
    %1720 = vmatprep.subr.mxu0 0.0
    %1721 = vmatpush1.msra.mxu0 0.0
    %1722 = vmatprep.subr.mxu0 0.0
    %1723 = vmatpush1.msra.mxu0 0.0
    %1724 = vmatprep.subr.mxu0 0.0
    %1725 = vmatpush1.msra.mxu0 0.0
    %1726 = vmatprep.subr.mxu0 0.0
    %1727 = vmatpush1.msra.mxu0 0.0
    %1728 = vmatprep.subr.mxu0 0.0
    %1729 = vmatpush1.msra.mxu0 0.0
    %1730 = vmatprep.subr.mxu0 0.0
    %1731 = vmatpush1.msra.mxu0 0.0
    %1732 = vmatprep.subr.mxu0 0.0
    %1733 = vmatpush1.msra.mxu0 0.0
    %1734 = vmatprep.subr.mxu0 0.0
    %1735 = vmatpush1.msra.mxu0 0.0
    %1736 = vmatprep.subr.mxu0 0.0
    %1737 = vmatpush1.msra.mxu0 0.0
    %1738 = vmatprep.subr.mxu0 0.0
    %1739 = vmatpush1.msra.mxu0 0.0
    %1740 = vmatprep.subr.mxu0 0.0
    %1741 = vmatpush1.msra.mxu0 0.0
    %1742 = vmatprep.mubr.f32.mxu0 0.0
    %1743 = vmatmul.mubr.f32.gmra.mrb[0].mxu0 %v1674
    %v1744 = vpop.f32.mrb[0].mxu0
    %v1745 = vadd.f32 0.0, %v1744
    %v1746 = vpop.f32.mrb[0].mxu0
    %1747 = vmatprep.mubr.f32.mxu0 0.0
    %1748 = vmatmul.mubr.f32.gmra.mrb[0].mxu0 %v1676
    %v1749 = vpop.f32.mrb[0].mxu0
    %v1750 = vpop.f32.mrb[0].mxu0
    %v1751 = vadd.f32 0.0, %v1750
    %1752 = vdwg.mxu0
    %v1753 = vld [vmem:[#allocation3 + $0x18] sm:$0xff]
    %v1754 = vadd.f32 %v1753, %v1745
    %v1755 = vld [vmem:[#allocation3 + $0x58] sm:$0xff]
    %v1756 = vadd.f32 %v1755, %v1751
    %v1757 = vxor.u32 %v1754, 2147483648
    %v1758 = vxor.u32 %v1756, 2147483648
    %v1759 = vmul.f32 %v1757, 1.442695
    %v1760 = vpow.pop %v1759
    %v1761 = vmul.f32 %v1758, 1.442695
    %v1762 = vpow.pop %v1761
    %v1763 = vadd.f32 %v1760, 1.0
    %v1764 = vadd.f32 %v1762, 1.0
    %v1765 = vrcp.pop %v1763
    %v1766 = vmul.f32 1.0, %v1765
    %v1767 = vrcp.pop %v1764
    %v1768 = vmul.f32 1.0, %v1767
    %v1769 = vtanh.pop %v1754
    %v1770 = vtanh.pop %v1756
    %v1771 = vmul.f32 %v1766, %v1654
    %v1772 = vmul.f32 %v1768, %v1655
    %1775 = vrot.lane.b32.xlu0 %v1769, 32
    %v1776 = vpop.permute.xlu0 %1775
    %1777 = vrot.lane.b32.xlu0 %v1770, 32
    %v1778 = vpop.permute.xlu0 %1777
    %v1781 = vmul.f32 %v1766, %v1776
    %v1782 = vmul.f32 %v1768, %v1778
    %1785 = vrot.lane.b32.xlu0 %v1781, 32
    %v1786 = vpop.permute.xlu0 %1785
    %1787 = vrot.lane.b32.xlu0 %v1782, 32
    %v1788 = vpop.permute.xlu0 %1787
    %v1791 = vadd.f32 %v1771, %v1786
    %v1792 = vadd.f32 %v1772, %v1788
    %v1793 = vtanh.pop %v1791
    %v1794 = vtanh.pop %v1792
    %1797 = vrot.lane.b32.xlu0 %v1793, 32
    %v1798 = vpop.permute.xlu0 %1797
    %1799 = vrot.lane.b32.xlu0 %v1794, 32
    %v1800 = vpop.permute.xlu0 %1799
    %v1803 = vmul.f32 %v1766, %v1798
    %v1804 = vmul.f32 %v1768, %v1800
    %1807 = vrot.lane.b32.xlu0 %v1803, 64
    %v1808 = vpop.permute.xlu0 %1807
    %1809 = vrot.lane.b32.xlu0 %v1804, 64
    %v1810 = vpop.permute.xlu0 %1809
    %v1811 = vsel %vm1263, %v1808, 0
    %v1813 = vsel %vm1263, %v1810, 0
    %1815 = vmatprep.subr.mxu0 %v1256
    %1816 = vmatpush1.msra.mxu0 %v1255
    %1817 = vmatprep.subr.mxu0 %v1258
    %1818 = vmatpush1.msra.mxu0 %v1257
    %1819 = vmatprep.subr.mxu0 %v1260
    %1820 = vmatpush1.msra.mxu0 %v1259
    %1821 = vmatprep.subr.mxu0 %v1262
    %1822 = vmatpush1.msra.mxu0 %v1261
    %1823 = vmatprep.subr.mxu0 0.0
    %1824 = vmatpush1.msra.mxu0 0.0
    %1825 = vmatprep.subr.mxu0 0.0
    %1826 = vmatpush1.msra.mxu0 0.0
    %1827 = vmatprep.subr.mxu0 0.0
    %1828 = vmatpush1.msra.mxu0 0.0
    %1829 = vmatprep.subr.mxu0 0.0
    %1830 = vmatpush1.msra.mxu0 0.0
    %1831 = vmatprep.subr.mxu0 0.0
    %1832 = vmatpush1.msra.mxu0 0.0
    %1833 = vmatprep.subr.mxu0 0.0
    %1834 = vmatpush1.msra.mxu0 0.0
    %1835 = vmatprep.subr.mxu0 0.0
    %1836 = vmatpush1.msra.mxu0 0.0
    %1837 = vmatprep.subr.mxu0 0.0
    %1838 = vmatpush1.msra.mxu0 0.0
    %1839 = vmatprep.subr.mxu0 0.0
    %1840 = vmatpush1.msra.mxu0 0.0
    %1841 = vmatprep.subr.mxu0 0.0
    %1842 = vmatpush1.msra.mxu0 0.0
    %1843 = vmatprep.subr.mxu0 0.0
    %1844 = vmatpush1.msra.mxu0 0.0
    %1845 = vmatprep.subr.mxu0 0.0
    %1846 = vmatpush1.msra.mxu0 0.0
    %1847 = vmatprep.subr.mxu0 0.0
    %1848 = vmatpush1.msra.mxu0 0.0
    %1849 = vmatprep.subr.mxu0 0.0
    %1850 = vmatpush1.msra.mxu0 0.0
    %1851 = vmatprep.subr.mxu0 0.0
    %1852 = vmatpush1.msra.mxu0 0.0
    %1853 = vmatprep.subr.mxu0 0.0
    %1854 = vmatpush1.msra.mxu0 0.0
    %1855 = vmatprep.subr.mxu0 0.0
    %1856 = vmatpush1.msra.mxu0 0.0
    %1857 = vmatprep.subr.mxu0 0.0
    %1858 = vmatpush1.msra.mxu0 0.0
    %1859 = vmatprep.subr.mxu0 0.0
    %1860 = vmatpush1.msra.mxu0 0.0
    %1861 = vmatprep.subr.mxu0 0.0
    %1862 = vmatpush1.msra.mxu0 0.0
    %1863 = vmatprep.subr.mxu0 0.0
    %1864 = vmatpush1.msra.mxu0 0.0
    %1865 = vmatprep.subr.mxu0 0.0
    %1866 = vmatpush1.msra.mxu0 0.0
    %1867 = vmatprep.subr.mxu0 0.0
    %1868 = vmatpush1.msra.mxu0 0.0
    %1869 = vmatprep.subr.mxu0 0.0
    %1870 = vmatpush1.msra.mxu0 0.0
    %1871 = vmatprep.subr.mxu0 0.0
    %1872 = vmatpush1.msra.mxu0 0.0
    %1873 = vmatprep.subr.mxu0 0.0
    %1874 = vmatpush1.msra.mxu0 0.0
    %1875 = vmatprep.subr.mxu0 0.0
    %1876 = vmatpush1.msra.mxu0 0.0
    %1877 = vmatprep.subr.mxu0 0.0
    %1878 = vmatpush1.msra.mxu0 0.0
    %1879 = vmatprep.mubr.f32.mxu0 0.0
    %1880 = vmatmul.mubr.f32.gmra.mrb[0].mxu0 %v1811
    %v1881 = vpop.f32.mrb[0].mxu0
    %v1882 = vadd.f32 0.0, %v1881
    %v1883 = vpop.f32.mrb[0].mxu0
    %1884 = vmatprep.mubr.f32.mxu0 0.0
    %1885 = vmatmul.mubr.f32.gmra.mrb[0].mxu0 %v1813
    %v1886 = vpop.f32.mrb[0].mxu0
    %v1887 = vpop.f32.mrb[0].mxu0
    %v1888 = vadd.f32 0.0, %v1887
    %1889 = vdwg.mxu0
    %v1890 = vld [vmem:[#allocation3 + $0x20] sm:$0xff]
    %v1891 = vadd.f32 %v1890, %v1882
    %v1892 = vld [vmem:[#allocation3 + $0x60] sm:$0xff]
    %v1893 = vadd.f32 %v1892, %v1888
    %v1894 = vxor.u32 %v1891, 2147483648
    %v1895 = vxor.u32 %v1893, 2147483648
    %v1896 = vmul.f32 %v1894, 1.442695
    %v1897 = vpow.pop %v1896
    %v1898 = vmul.f32 %v1895, 1.442695
    %v1899 = vpow.pop %v1898
    %v1900 = vadd.f32 %v1897, 1.0
    %v1901 = vadd.f32 %v1899, 1.0
    %v1902 = vrcp.pop %v1900
    %v1903 = vmul.f32 1.0, %v1902
    %v1904 = vrcp.pop %v1901
    %v1905 = vmul.f32 1.0, %v1904
    %v1906 = vtanh.pop %v1891
    %v1907 = vtanh.pop %v1893
    %v1908 = vmul.f32 %v1903, %v1791
    %v1909 = vmul.f32 %v1905, %v1792
    %1912 = vrot.lane.b32.xlu0 %v1906, 32
    %v1913 = vpop.permute.xlu0 %1912
    %1914 = vrot.lane.b32.xlu0 %v1907, 32
    %v1915 = vpop.permute.xlu0 %1914
    %v1918 = vmul.f32 %v1903, %v1913
    %v1919 = vmul.f32 %v1905, %v1915
    %1922 = vrot.lane.b32.xlu0 %v1918, 32
    %v1923 = vpop.permute.xlu0 %1922
    %1924 = vrot.lane.b32.xlu0 %v1919, 32
    %v1925 = vpop.permute.xlu0 %1924
    %v1928 = vadd.f32 %v1908, %v1923
    %v1929 = vadd.f32 %v1909, %v1925
    %v1930 = vtanh.pop %v1928
    %v1931 = vtanh.pop %v1929
    %1934 = vrot.lane.b32.xlu0 %v1930, 32
    %v1935 = vpop.permute.xlu0 %1934
    %1936 = vrot.lane.b32.xlu0 %v1931, 32
    %v1937 = vpop.permute.xlu0 %1936
    %v1940 = vmul.f32 %v1903, %v1935
    %v1941 = vmul.f32 %v1905, %v1937
    %1944 = vrot.lane.b32.xlu0 %v1940, 64
    %v1945 = vpop.permute.xlu0 %1944
    %1946 = vrot.lane.b32.xlu0 %v1941, 64
    %v1947 = vpop.permute.xlu0 %1946
    %v1948 = vsel %vm1263, %v1945, 0
    %v1950 = vsel %vm1263, %v1947, 0
    %1952 = vmatprep.subr.mxu0 %v1256
    %1953 = vmatpush1.msra.mxu0 %v1255
    %1954 = vmatprep.subr.mxu0 %v1258
    %1955 = vmatpush1.msra.mxu0 %v1257
    %1956 = vmatprep.subr.mxu0 %v1260
    %1957 = vmatpush1.msra.mxu0 %v1259
    %1958 = vmatprep.subr.mxu0 %v1262
    %1959 = vmatpush1.msra.mxu0 %v1261
    %1960 = vmatprep.subr.mxu0 0.0
    %1961 = vmatpush1.msra.mxu0 0.0
    %1962 = vmatprep.subr.mxu0 0.0
    %1963 = vmatpush1.msra.mxu0 0.0
    %1964 = vmatprep.subr.mxu0 0.0
    %1965 = vmatpush1.msra.mxu0 0.0
    %1966 = vmatprep.subr.mxu0 0.0
    %1967 = vmatpush1.msra.mxu0 0.0
    %1968 = vmatprep.subr.mxu0 0.0
    %1969 = vmatpush1.msra.mxu0 0.0
    %1970 = vmatprep.subr.mxu0 0.0
    %1971 = vmatpush1.msra.mxu0 0.0
    %1972 = vmatprep.subr.mxu0 0.0
    %1973 = vmatpush1.msra.mxu0 0.0
    %1974 = vmatprep.subr.mxu0 0.0
    %1975 = vmatpush1.msra.mxu0 0.0
    %1976 = vmatprep.subr.mxu0 0.0
    %1977 = vmatpush1.msra.mxu0 0.0
    %1978 = vmatprep.subr.mxu0 0.0
    %1979 = vmatpush1.msra.mxu0 0.0
    %1980 = vmatprep.subr.mxu0 0.0
    %1981 = vmatpush1.msra.mxu0 0.0
    %1982 = vmatprep.subr.mxu0 0.0
    %1983 = vmatpush1.msra.mxu0 0.0
    %1984 = vmatprep.subr.mxu0 0.0
    %1985 = vmatpush1.msra.mxu0 0.0
    %1986 = vmatprep.subr.mxu0 0.0
    %1987 = vmatpush1.msra.mxu0 0.0
    %1988 = vmatprep.subr.mxu0 0.0
    %1989 = vmatpush1.msra.mxu0 0.0
    %1990 = vmatprep.subr.mxu0 0.0
    %1991 = vmatpush1.msra.mxu0 0.0
    %1992 = vmatprep.subr.mxu0 0.0
    %1993 = vmatpush1.msra.mxu0 0.0
    %1994 = vmatprep.subr.mxu0 0.0
    %1995 = vmatpush1.msra.mxu0 0.0
    %1996 = vmatprep.subr.mxu0 0.0
    %1997 = vmatpush1.msra.mxu0 0.0
    %1998 = vmatprep.subr.mxu0 0.0
    %1999 = vmatpush1.msra.mxu0 0.0
    %2000 = vmatprep.subr.mxu0 0.0
    %2001 = vmatpush1.msra.mxu0 0.0
    %2002 = vmatprep.subr.mxu0 0.0
    %2003 = vmatpush1.msra.mxu0 0.0
    %2004 = vmatprep.subr.mxu0 0.0
    %2005 = vmatpush1.msra.mxu0 0.0
    %2006 = vmatprep.subr.mxu0 0.0
    %2007 = vmatpush1.msra.mxu0 0.0
    %2008 = vmatprep.subr.mxu0 0.0
    %2009 = vmatpush1.msra.mxu0 0.0
    %2010 = vmatprep.subr.mxu0 0.0
    %2011 = vmatpush1.msra.mxu0 0.0
    %2012 = vmatprep.subr.mxu0 0.0
    %2013 = vmatpush1.msra.mxu0 0.0
    %2014 = vmatprep.subr.mxu0 0.0
    %2015 = vmatpush1.msra.mxu0 0.0
    %2016 = vmatprep.mubr.f32.mxu0 0.0
    %2017 = vmatmul.mubr.f32.gmra.mrb[0].mxu0 %v1948
    %v2018 = vpop.f32.mrb[0].mxu0
    %v2019 = vadd.f32 0.0, %v2018
    %v2020 = vpop.f32.mrb[0].mxu0
    %2021 = vmatprep.mubr.f32.mxu0 0.0
    %2022 = vmatmul.mubr.f32.gmra.mrb[0].mxu0 %v1950
    %v2023 = vpop.f32.mrb[0].mxu0
    %v2024 = vpop.f32.mrb[0].mxu0
    %v2025 = vadd.f32 0.0, %v2024
    %2026 = vdwg.mxu0
    %v2027 = vld [vmem:[#allocation3 + $0x28] sm:$0xff]
    %v2028 = vadd.f32 %v2027, %v2019
    %v2029 = vld [vmem:[#allocation3 + $0x68] sm:$0xff]
    %v2030 = vadd.f32 %v2029, %v2025
    %v2031 = vxor.u32 %v2028, 2147483648
    %v2032 = vxor.u32 %v2030, 2147483648
    %v2033 = vmul.f32 %v2031, 1.442695
    %v2034 = vpow.pop %v2033
    %v2035 = vmul.f32 %v2032, 1.442695
    %v2036 = vpow.pop %v2035
    %v2037 = vadd.f32 %v2034, 1.0
    %v2038 = vadd.f32 %v2036, 1.0
    %v2039 = vrcp.pop %v2037
    %v2040 = vmul.f32 1.0, %v2039
    %v2041 = vrcp.pop %v2038
    %v2042 = vmul.f32 1.0, %v2041
    %v2043 = vtanh.pop %v2028
    %v2044 = vtanh.pop %v2030
    %v2045 = vmul.f32 %v2040, %v1928
    %v2046 = vmul.f32 %v2042, %v1929
    %2049 = vrot.lane.b32.xlu0 %v2043, 32
    %v2050 = vpop.permute.xlu0 %2049
    %2051 = vrot.lane.b32.xlu0 %v2044, 32
    %v2052 = vpop.permute.xlu0 %2051
    %v2055 = vmul.f32 %v2040, %v2050
    %v2056 = vmul.f32 %v2042, %v2052
    %2059 = vrot.lane.b32.xlu0 %v2055, 32
    %v2060 = vpop.permute.xlu0 %2059
    %2061 = vrot.lane.b32.xlu0 %v2056, 32
    %v2062 = vpop.permute.xlu0 %2061
    %v2065 = vadd.f32 %v2045, %v2060
    %v2066 = vadd.f32 %v2046, %v2062
    %v2067 = vtanh.pop %v2065
    %v2068 = vtanh.pop %v2066
    %2071 = vrot.lane.b32.xlu0 %v2067, 32
    %v2072 = vpop.permute.xlu0 %2071
    %2073 = vrot.lane.b32.xlu0 %v2068, 32
    %v2074 = vpop.permute.xlu0 %2073
    %v2077 = vmul.f32 %v2040, %v2072
    %v2078 = vmul.f32 %v2042, %v2074
    %2081 = vrot.lane.b32.xlu0 %v2077, 64
    %v2082 = vpop.permute.xlu0 %2081
    %2083 = vrot.lane.b32.xlu0 %v2078, 64
    %v2084 = vpop.permute.xlu0 %2083
    %v2085 = vsel %vm1263, %v2082, 0
    %v2087 = vsel %vm1263, %v2084, 0
    %2089 = vmatprep.subr.mxu0 %v1256
    %2090 = vmatpush1.msra.mxu0 %v1255
    %2091 = vmatprep.subr.mxu0 %v1258
    %2092 = vmatpush1.msra.mxu0 %v1257
    %2093 = vmatprep.subr.mxu0 %v1260
    %2094 = vmatpush1.msra.mxu0 %v1259
    %2095 = vmatprep.subr.mxu0 %v1262
    %2096 = vmatpush1.msra.mxu0 %v1261
    %2097 = vmatprep.subr.mxu0 0.0
    %2098 = vmatpush1.msra.mxu0 0.0
    %2099 = vmatprep.subr.mxu0 0.0
    %2100 = vmatpush1.msra.mxu0 0.0
    %2101 = vmatprep.subr.mxu0 0.0
    %2102 = vmatpush1.msra.mxu0 0.0
    %2103 = vmatprep.subr.mxu0 0.0
    %2104 = vmatpush1.msra.mxu0 0.0
    %2105 = vmatprep.subr.mxu0 0.0
    %2106 = vmatpush1.msra.mxu0 0.0
    %2107 = vmatprep.subr.mxu0 0.0
    %2108 = vmatpush1.msra.mxu0 0.0
    %2109 = vmatprep.subr.mxu0 0.0
    %2110 = vmatpush1.msra.mxu0 0.0
    %2111 = vmatprep.subr.mxu0 0.0
    %2112 = vmatpush1.msra.mxu0 0.0
    %2113 = vmatprep.subr.mxu0 0.0
    %2114 = vmatpush1.msra.mxu0 0.0
    %2115 = vmatprep.subr.mxu0 0.0
    %2116 = vmatpush1.msra.mxu0 0.0
    %2117 = vmatprep.subr.mxu0 0.0
    %2118 = vmatpush1.msra.mxu0 0.0
    %2119 = vmatprep.subr.mxu0 0.0
    %2120 = vmatpush1.msra.mxu0 0.0
    %2121 = vmatprep.subr.mxu0 0.0
    %2122 = vmatpush1.msra.mxu0 0.0
    %2123 = vmatprep.subr.mxu0 0.0
    %2124 = vmatpush1.msra.mxu0 0.0
    %2125 = vmatprep.subr.mxu0 0.0
    %2126 = vmatpush1.msra.mxu0 0.0
    %2127 = vmatprep.subr.mxu0 0.0
    %2128 = vmatpush1.msra.mxu0 0.0
    %2129 = vmatprep.subr.mxu0 0.0
    %2130 = vmatpush1.msra.mxu0 0.0
    %2131 = vmatprep.subr.mxu0 0.0
    %2132 = vmatpush1.msra.mxu0 0.0
    %2133 = vmatprep.subr.mxu0 0.0
    %2134 = vmatpush1.msra.mxu0 0.0
    %2135 = vmatprep.subr.mxu0 0.0
    %2136 = vmatpush1.msra.mxu0 0.0
    %2137 = vmatprep.subr.mxu0 0.0
    %2138 = vmatpush1.msra.mxu0 0.0
    %2139 = vmatprep.subr.mxu0 0.0
    %2140 = vmatpush1.msra.mxu0 0.0
    %2141 = vmatprep.subr.mxu0 0.0
    %2142 = vmatpush1.msra.mxu0 0.0
    %2143 = vmatprep.subr.mxu0 0.0
    %2144 = vmatpush1.msra.mxu0 0.0
    %2145 = vmatprep.subr.mxu0 0.0
    %2146 = vmatpush1.msra.mxu0 0.0
    %2147 = vmatprep.subr.mxu0 0.0
    %2148 = vmatpush1.msra.mxu0 0.0
    %2149 = vmatprep.subr.mxu0 0.0
    %2150 = vmatpush1.msra.mxu0 0.0
    %2151 = vmatprep.subr.mxu0 0.0
    %2152 = vmatpush1.msra.mxu0 0.0
    %2153 = vmatprep.mubr.f32.mxu0 0.0
    %2154 = vmatmul.mubr.f32.gmra.mrb[0].mxu0 %v2085
    %v2155 = vpop.f32.mrb[0].mxu0
    %v2156 = vadd.f32 0.0, %v2155
    %v2157 = vpop.f32.mrb[0].mxu0
    %2158 = vmatprep.mubr.f32.mxu0 0.0
    %2159 = vmatmul.mubr.f32.gmra.mrb[0].mxu0 %v2087
    %v2160 = vpop.f32.mrb[0].mxu0
    %v2161 = vpop.f32.mrb[0].mxu0
    %v2162 = vadd.f32 0.0, %v2161
    %2163 = vdwg.mxu0
    %v2164 = vld [vmem:[#allocation3 + $0x30] sm:$0xff]
    %v2165 = vadd.f32 %v2164, %v2156
    %v2166 = vld [vmem:[#allocation3 + $0x70] sm:$0xff]
    %v2167 = vadd.f32 %v2166, %v2162
    %v2168 = vxor.u32 %v2165, 2147483648
    %v2169 = vxor.u32 %v2167, 2147483648
    %v2170 = vmul.f32 %v2168, 1.442695
    %v2171 = vpow.pop %v2170
    %v2172 = vmul.f32 %v2169, 1.442695
    %v2173 = vpow.pop %v2172
    %v2174 = vadd.f32 %v2171, 1.0
    %v2175 = vadd.f32 %v2173, 1.0
    %v2176 = vrcp.pop %v2174
    %v2177 = vmul.f32 1.0, %v2176
    %v2178 = vrcp.pop %v2175
    %v2179 = vmul.f32 1.0, %v2178
    %v2180 = vtanh.pop %v2165
    %v2181 = vtanh.pop %v2167
    %v2182 = vmul.f32 %v2177, %v2065
    %v2183 = vmul.f32 %v2179, %v2066
    %2186 = vrot.lane.b32.xlu0 %v2180, 32
    %v2187 = vpop.permute.xlu0 %2186
    %2188 = vrot.lane.b32.xlu0 %v2181, 32
    %v2189 = vpop.permute.xlu0 %2188
    %v2192 = vmul.f32 %v2177, %v2187
    %v2193 = vmul.f32 %v2179, %v2189
    %2196 = vrot.lane.b32.xlu0 %v2192, 32
    %v2197 = vpop.permute.xlu0 %2196
    %2198 = vrot.lane.b32.xlu0 %v2193, 32
    %v2199 = vpop.permute.xlu0 %2198
    %v2202 = vadd.f32 %v2182, %v2197
    %v2203 = vadd.f32 %v2183, %v2199
    %v2204 = vtanh.pop %v2202
    %v2205 = vtanh.pop %v2203
    %2208 = vrot.lane.b32.xlu0 %v2204, 32
    %v2209 = vpop.permute.xlu0 %2208
    %2210 = vrot.lane.b32.xlu0 %v2205, 32
    %v2211 = vpop.permute.xlu0 %2210
    %v2214 = vmul.f32 %v2177, %v2209
    %v2215 = vmul.f32 %v2179, %v2211
    %2218 = vrot.lane.b32.xlu0 %v2214, 64
    %v2219 = vpop.permute.xlu0 %2218
    %2220 = vrot.lane.b32.xlu0 %v2215, 64
    %v2221 = vpop.permute.xlu0 %2220
    %v2222 = vsel %vm1263, %v2219, 0
    %v2224 = vsel %vm1263, %v2221, 0
    %2226 = vmatprep.subr.mxu0 %v1256
    %2227 = vmatpush1.msra.mxu0 %v1255
    %2228 = vmatprep.subr.mxu0 %v1258
    %2229 = vmatpush1.msra.mxu0 %v1257
    %2230 = vmatprep.subr.mxu0 %v1260
    %2231 = vmatpush1.msra.mxu0 %v1259
    %2232 = vmatprep.subr.mxu0 %v1262
    %2233 = vmatpush1.msra.mxu0 %v1261
    %2234 = vmatprep.subr.mxu0 0.0
    %2235 = vmatpush1.msra.mxu0 0.0
    %2236 = vmatprep.subr.mxu0 0.0
    %2237 = vmatpush1.msra.mxu0 0.0
    %2238 = vmatprep.subr.mxu0 0.0
    %2239 = vmatpush1.msra.mxu0 0.0
    %2240 = vmatprep.subr.mxu0 0.0
    %2241 = vmatpush1.msra.mxu0 0.0
    %2242 = vmatprep.subr.mxu0 0.0
    %2243 = vmatpush1.msra.mxu0 0.0
    %2244 = vmatprep.subr.mxu0 0.0
    %2245 = vmatpush1.msra.mxu0 0.0
    %2246 = vmatprep.subr.mxu0 0.0
    %2247 = vmatpush1.msra.mxu0 0.0
    %2248 = vmatprep.subr.mxu0 0.0
    %2249 = vmatpush1.msra.mxu0 0.0
    %2250 = vmatprep.subr.mxu0 0.0
    %2251 = vmatpush1.msra.mxu0 0.0
    %2252 = vmatprep.subr.mxu0 0.0
    %2253 = vmatpush1.msra.mxu0 0.0
    %2254 = vmatprep.subr.mxu0 0.0
    %2255 = vmatpush1.msra.mxu0 0.0
    %2256 = vmatprep.subr.mxu0 0.0
    %2257 = vmatpush1.msra.mxu0 0.0
    %2258 = vmatprep.subr.mxu0 0.0
    %2259 = vmatpush1.msra.mxu0 0.0
    %2260 = vmatprep.subr.mxu0 0.0
    %2261 = vmatpush1.msra.mxu0 0.0
    %2262 = vmatprep.subr.mxu0 0.0
    %2263 = vmatpush1.msra.mxu0 0.0
    %2264 = vmatprep.subr.mxu0 0.0
    %2265 = vmatpush1.msra.mxu0 0.0
    %2266 = vmatprep.subr.mxu0 0.0
    %2267 = vmatpush1.msra.mxu0 0.0
    %2268 = vmatprep.subr.mxu0 0.0
    %2269 = vmatpush1.msra.mxu0 0.0
    %2270 = vmatprep.subr.mxu0 0.0
    %2271 = vmatpush1.msra.mxu0 0.0
    %2272 = vmatprep.subr.mxu0 0.0
    %2273 = vmatpush1.msra.mxu0 0.0
    %2274 = vmatprep.subr.mxu0 0.0
    %2275 = vmatpush1.msra.mxu0 0.0
    %2276 = vmatprep.subr.mxu0 0.0
    %2277 = vmatpush1.msra.mxu0 0.0
    %2278 = vmatprep.subr.mxu0 0.0
    %2279 = vmatpush1.msra.mxu0 0.0
    %2280 = vmatprep.subr.mxu0 0.0
    %2281 = vmatpush1.msra.mxu0 0.0
    %2282 = vmatprep.subr.mxu0 0.0
    %2283 = vmatpush1.msra.mxu0 0.0
    %2284 = vmatprep.subr.mxu0 0.0
    %2285 = vmatpush1.msra.mxu0 0.0
    %2286 = vmatprep.subr.mxu0 0.0
    %2287 = vmatpush1.msra.mxu0 0.0
    %2288 = vmatprep.subr.mxu0 0.0
    %2289 = vmatpush1.msra.mxu0 0.0
    %2290 = vmatprep.mubr.f32.mxu0 0.0
    %2291 = vmatmul.mubr.f32.gmra.mrb[0].mxu0 %v2222
    %v2292 = vpop.f32.mrb[0].mxu0
    %v2293 = vadd.f32 0.0, %v2292
    %v2294 = vpop.f32.mrb[0].mxu0
    %2295 = vmatprep.mubr.f32.mxu0 0.0
    %2296 = vmatmul.mubr.f32.gmra.mrb[0].mxu0 %v2224
    %v2297 = vpop.f32.mrb[0].mxu0
    %v2298 = vpop.f32.mrb[0].mxu0
    %v2299 = vadd.f32 0.0, %v2298
    %2300 = vdwg.mxu0
    %v2301 = vld [vmem:[#allocation3 + $0x38] sm:$0xff]
    %v2302 = vadd.f32 %v2301, %v2293
    %v2303 = vld [vmem:[#allocation3 + $0x78] sm:$0xff]
    %v2304 = vadd.f32 %v2303, %v2299
    %v2305 = vxor.u32 %v2302, 2147483648
    %v2306 = vxor.u32 %v2304, 2147483648
    %v2307 = vmul.f32 %v2305, 1.442695
    %v2308 = vpow.pop %v2307
    %v2309 = vmul.f32 %v2306, 1.442695
    %v2310 = vpow.pop %v2309
    %v2311 = vadd.f32 %v2308, 1.0
    %v2312 = vadd.f32 %v2310, 1.0
    %v2313 = vrcp.pop %v2311
    %v2314 = vmul.f32 1.0, %v2313
    %v2315 = vrcp.pop %v2312
    %v2316 = vmul.f32 1.0, %v2315
    %v2317 = vtanh.pop %v2302
    %v2318 = vtanh.pop %v2304
    %v2319 = vmul.f32 %v2314, %v2202
    %v2320 = vmul.f32 %v2316, %v2203
    %2323 = vrot.lane.b32.xlu0 %v2317, 32
    %v2324 = vpop.permute.xlu0 %2323
    %2325 = vrot.lane.b32.xlu0 %v2318, 32
    %v2326 = vpop.permute.xlu0 %2325
    %v2329 = vmul.f32 %v2314, %v2324
    %v2330 = vmul.f32 %v2316, %v2326
    %2333 = vrot.lane.b32.xlu0 %v2329, 32
    %v2334 = vpop.permute.xlu0 %2333
    %2335 = vrot.lane.b32.xlu0 %v2330, 32
    %v2336 = vpop.permute.xlu0 %2335
    %v2339 = vadd.f32 %v2319, %v2334
    %v2340 = vadd.f32 %v2320, %v2336
    %v2341 = vtanh.pop %v2339
    %v2342 = vtanh.pop %v2340
    %2345 = vrot.lane.b32.xlu0 %v2341, 32
    %v2346 = vpop.permute.xlu0 %2345
    %2347 = vrot.lane.b32.xlu0 %v2342, 32
    %v2348 = vpop.permute.xlu0 %2347
    %v2351 = vmul.f32 %v2314, %v2346
    %v2352 = vmul.f32 %v2316, %v2348
    %v2353 = vld [vmem:[%s5] sm:$0xff]
    %v2354 = vld [vmem:[%s5 + $0x8] sm:$0xff]
    %2355 = vst.msk [vmem:[#allocation2] sm:$0xff] %vm1263, %v2353
    %2356 = vst.msk [vmem:[#allocation2 + $0x8] sm:$0xff] %vm1263, %v2354
    %v2357 = vld [vmem:[%s6] sm:$0xff]
    %v2358 = vld [vmem:[%s6 + $0x8] sm:$0xff]
    %2359 = vst.msk [vmem:[#allocation2 + $0x10] sm:$0xff] %vm1263, %v2357
    %2360 = vst.msk [vmem:[#allocation2 + $0x18] sm:$0xff] %vm1263, %v2358
    %v2361 = vld [vmem:[%s7] sm:$0xff]
    %v2362 = vld [vmem:[%s7 + $0x8] sm:$0xff]
    %2363 = vst.msk [vmem:[#allocation2 + $0x20] sm:$0xff] %vm1263, %v2361
    %2364 = vst.msk [vmem:[#allocation2 + $0x28] sm:$0xff] %vm1263, %v2362
    %v2365 = vld [vmem:[%s8] sm:$0xff]
    %2366 = vst.msk [vmem:[#allocation2 + $0x30] sm:$0xff] %vm1263, %v2365
    %2369 = vrot.lane.b32.xlu0 %v2351, 64
    %v2370 = vpop.permute.xlu0 %2369
    %2371 = vrot.lane.b32.xlu0 %v2352, 64
    %v2372 = vpop.permute.xlu0 %2371
    %2375 = vst.msk [vmem:[#allocation2 + $0x38] sm:$0xff] %vm1263, %v2370
    %2376 = vst.msk [vmem:[#allocation2 + $0x40] sm:$0xff] %vm1263, %v2372
    %v2377 = vld [vmem:[#allocation2] sm:$0xff]
    %v2378 = vld [vmem:[#allocation2 + $0x8] sm:$0xff]
    %v2379 = vld [vmem:[#allocation2 + $0x10] sm:$0xff]
    %v2380 = vld [vmem:[#allocation2 + $0x18] sm:$0xff]
    %v2381 = vld [vmem:[#allocation2 + $0x20] sm:$0xff]
    %v2382 = vld [vmem:[#allocation2 + $0x28] sm:$0xff]
    %v2383 = vld [vmem:[#allocation2 + $0x30] sm:$0xff]
    %v2384 = vld [vmem:[#allocation2 + $0x38] sm:$0xff]
    %v2385 = vld [vmem:[#allocation2 + $0x40] sm:$0xff]
    %v2386 = vld [vmem:[%s9] sm:$0xff]
    %v2387 = vld [vmem:[%s9 + $0x8] sm:$0xff]
    %vm2388 = vcmask 588800
    %v2390 = vsel %vm2388, %v2386, 0
    %v2393 = vsel %vm2388, %v2387, 0
    %2395 = vmatprep.subr.mxu0 0.0
    %2396 = vmatpush1.msra.mxu0 %v2377
    %2397 = vmatprep.subr.mxu0 0.0
    %2398 = vmatpush1.msra.mxu0 %v2378
    %2399 = vmatprep.subr.mxu0 0.0
    %2400 = vmatpush1.msra.mxu0 %v2379
    %2401 = vmatprep.subr.mxu0 0.0
    %2402 = vmatpush1.msra.mxu0 %v2380
    %2403 = vmatprep.subr.mxu0 0.0
    %2404 = vmatpush1.msra.mxu0 %v2381
    %2405 = vmatprep.subr.mxu0 0.0
    %2406 = vmatpush1.msra.mxu0 %v2382
    %2407 = vmatprep.subr.mxu0 0.0
    %2408 = vmatpush1.msra.mxu0 %v2383
    %2409 = vmatprep.subr.mxu0 0.0
    %2410 = vmatpush1.msra.mxu0 %v2384
    %2411 = vmatprep.subr.mxu0 0.0
    %2412 = vmatpush1.msra.mxu0 %v2385
    %2413 = vmatprep.subr.mxu0 0.0
    %2414 = vmatpush1.msra.mxu0 0.0
    %2415 = vmatprep.subr.mxu0 0.0
    %2416 = vmatpush1.msra.mxu0 0.0
    %2417 = vmatprep.subr.mxu0 0.0
    %2418 = vmatpush1.msra.mxu0 0.0
    %2419 = vmatprep.subr.mxu0 0.0
    %2420 = vmatpush1.msra.mxu0 0.0
    %2421 = vmatprep.subr.mxu0 0.0
    %2422 = vmatpush1.msra.mxu0 0.0
    %2423 = vmatprep.subr.mxu0 0.0
    %2424 = vmatpush1.msra.mxu0 0.0
    %2425 = vmatprep.subr.mxu0 0.0
    %2426 = vmatpush1.msra.mxu0 0.0
    %2427 = vmatprep.subr.mxu0 0.0
    %2428 = vmatpush1.msra.mxu0 0.0
    %2429 = vmatprep.subr.mxu0 0.0
    %2430 = vmatpush1.msra.mxu0 0.0
    %2431 = vmatprep.subr.mxu0 0.0
    %2432 = vmatpush1.msra.mxu0 0.0
    %2433 = vmatprep.subr.mxu0 0.0
    %2434 = vmatpush1.msra.mxu0 0.0
    %2435 = vmatprep.subr.mxu0 0.0
    %2436 = vmatpush1.msra.mxu0 0.0
    %2437 = vmatprep.subr.mxu0 0.0
    %2438 = vmatpush1.msra.mxu0 0.0
    %2439 = vmatprep.subr.mxu0 0.0
    %2440 = vmatpush1.msra.mxu0 0.0
    %2441 = vmatprep.subr.mxu0 0.0
    %2442 = vmatpush1.msra.mxu0 0.0
    %2443 = vmatprep.subr.mxu0 0.0
    %2444 = vmatpush1.msra.mxu0 0.0
    %2445 = vmatprep.subr.mxu0 0.0
    %2446 = vmatpush1.msra.mxu0 0.0
    %2447 = vmatprep.subr.mxu0 0.0
    %2448 = vmatpush1.msra.mxu0 0.0
    %2449 = vmatprep.subr.mxu0 0.0
    %2450 = vmatpush1.msra.mxu0 0.0
    %2451 = vmatprep.subr.mxu0 0.0
    %2452 = vmatpush1.msra.mxu0 0.0
    %2453 = vmatprep.subr.mxu0 0.0
    %2454 = vmatpush1.msra.mxu0 0.0
    %2455 = vmatprep.subr.mxu0 0.0
    %2456 = vmatpush1.msra.mxu0 0.0
    %2457 = vmatprep.subr.mxu0 0.0
    %2458 = vmatpush1.msra.mxu0 0.0
    %2459 = vmatprep.mubr.f32.mxu0 0.0
    %2460 = vmatmul.mubr.f32.gmra.mrb[0].mxu0 %v2390
    %v2461 = vpop.f32.mrb[0].mxu0
    %v2462 = vadd.f32 0.0, %v2461
    %v2463 = vpop.f32.mrb[0].mxu0
    %2464 = vmatprep.mubr.f32.mxu0 0.0
    %2465 = vmatmul.mubr.f32.gmra.mrb[0].mxu0 %v2393
    %v2466 = vpop.f32.mrb[0].mxu0
    %v2467 = vadd.f32 0.0, %v2466
    %v2468 = vpop.f32.mrb[0].mxu0
    %2469 = vdwg.mxu0
    %v2470 = vld [vmem:[%s10] sm:$0xff]
    %v2471 = vld [vmem:[%s10 + $0x8] sm:$0xff]
    %v2472 = vld [vmem:[%s10 + $0x10] sm:$0xff]
    %v2473 = vld [vmem:[%s10 + $0x18] sm:$0xff]
    %v2474 = vld [vmem:[%s11] sm:$0x1]
    %v2476 = vlaneseq
    %v2477 = vshrl.u32 %v2476, 7
    %v2478 = vsub.s32 0, %v2477
    %v2479 = vrot.slane %v2474, %v2478
    %v2482 = vsel %vm1263, %v2462, 0
    %v2485 = vsel %vm1263, %v2467, 0
    %2487 = vmatprep.subr.mxu0 0.0
    %2488 = vmatpush1.msra.mxu0 %v2470
    %2489 = vmatprep.subr.mxu0 0.0
    %2490 = vmatpush1.msra.mxu0 %v2471
    %2491 = vmatprep.subr.mxu0 0.0
    %2492 = vmatpush1.msra.mxu0 %v2472
    %2493 = vmatprep.subr.mxu0 0.0
    %2494 = vmatpush1.msra.mxu0 %v2473
    %2495 = vmatprep.subr.mxu0 0.0
    %2496 = vmatpush1.msra.mxu0 0.0
    %2497 = vmatprep.subr.mxu0 0.0
    %2498 = vmatpush1.msra.mxu0 0.0
    %2499 = vmatprep.subr.mxu0 0.0
    %2500 = vmatpush1.msra.mxu0 0.0
    %2501 = vmatprep.subr.mxu0 0.0
    %2502 = vmatpush1.msra.mxu0 0.0
    %2503 = vmatprep.subr.mxu0 0.0
    %2504 = vmatpush1.msra.mxu0 0.0
    %2505 = vmatprep.subr.mxu0 0.0
    %2506 = vmatpush1.msra.mxu0 0.0
    %2507 = vmatprep.subr.mxu0 0.0
    %2508 = vmatpush1.msra.mxu0 0.0
    %2509 = vmatprep.subr.mxu0 0.0
    %2510 = vmatpush1.msra.mxu0 0.0
    %2511 = vmatprep.subr.mxu0 0.0
    %2512 = vmatpush1.msra.mxu0 0.0
    %2513 = vmatprep.subr.mxu0 0.0
    %2514 = vmatpush1.msra.mxu0 0.0
    %2515 = vmatprep.subr.mxu0 0.0
    %2516 = vmatpush1.msra.mxu0 0.0
    %2517 = vmatprep.subr.mxu0 0.0
    %2518 = vmatpush1.msra.mxu0 0.0
    %2519 = vmatprep.subr.mxu0 0.0
    %2520 = vmatpush1.msra.mxu0 0.0
    %2521 = vmatprep.subr.mxu0 0.0
    %2522 = vmatpush1.msra.mxu0 0.0
    %2523 = vmatprep.subr.mxu0 0.0
    %2524 = vmatpush1.msra.mxu0 0.0
    %2525 = vmatprep.subr.mxu0 0.0
    %2526 = vmatpush1.msra.mxu0 0.0
    %2527 = vmatprep.subr.mxu0 0.0
    %2528 = vmatpush1.msra.mxu0 0.0
    %2529 = vmatprep.subr.mxu0 0.0
    %2530 = vmatpush1.msra.mxu0 0.0
    %2531 = vmatprep.subr.mxu0 0.0
    %2532 = vmatpush1.msra.mxu0 0.0
    %2533 = vmatprep.subr.mxu0 0.0
    %2534 = vmatpush1.msra.mxu0 0.0
    %2535 = vmatprep.subr.mxu0 0.0
    %2536 = vmatpush1.msra.mxu0 0.0
    %2537 = vmatprep.subr.mxu0 0.0
    %2538 = vmatpush1.msra.mxu0 0.0
    %2539 = vmatprep.subr.mxu0 0.0
    %2540 = vmatpush1.msra.mxu0 0.0
    %2541 = vmatprep.subr.mxu0 0.0
    %2542 = vmatpush1.msra.mxu0 0.0
    %2543 = vmatprep.subr.mxu0 0.0
    %2544 = vmatpush1.msra.mxu0 0.0
    %2545 = vmatprep.subr.mxu0 0.0
    %2546 = vmatpush1.msra.mxu0 0.0
    %2547 = vmatprep.subr.mxu0 0.0
    %2548 = vmatpush1.msra.mxu0 0.0
    %2549 = vmatprep.subr.mxu0 0.0
    %2550 = vmatpush1.msra.mxu0 0.0
    %2551 = vmatprep.mubr.f32.mxu0 0.0
    %2552 = vmatmul.mubr.f32.gmra.mrb[0].mxu0 %v2482
    %v2553 = vpop.f32.mrb[0].mxu0
    %v2554 = vadd.f32 %v2479, %v2553
    %v2555 = vpop.f32.mrb[0].mxu0
    %2556 = vmatprep.mubr.f32.mxu0 0.0
    %2557 = vmatmul.mubr.f32.gmra.mrb[0].mxu0 %v2485
    %v2558 = vpop.f32.mrb[0].mxu0
    %v2559 = vadd.f32 %v2479, %v2558
    %v2560 = vpop.f32.mrb[0].mxu0
    %2561 = vdwg.mxu0
    %v2562 = vmax.f32 %v2554, 0.0
    %v2563 = vmax.f32 %v2559, 0.0
    %v2564 = vld [vmem:[%s12] sm:$0xff]
    %v2565 = vld [vmem:[%s12 + $0x8] sm:$0xff]
    %v2566 = vld [vmem:[%s12 + $0x10] sm:$0xff]
    %v2567 = vld [vmem:[%s12 + $0x18] sm:$0xff]
    %v2568 = vld [vmem:[%s13] sm:$0x1]
    %v2570 = vlaneseq
    %v2571 = vshrl.u32 %v2570, 7
    %v2572 = vsub.s32 0, %v2571
    %v2573 = vrot.slane %v2568, %v2572
    %v2576 = vsel %vm1263, %v2562, 0
    %v2579 = vsel %vm1263, %v2563, 0
    %2581 = vmatprep.subr.mxu0 0.0
    %2582 = vmatpush1.msra.mxu0 %v2564
    %2583 = vmatprep.subr.mxu0 0.0
    %2584 = vmatpush1.msra.mxu0 %v2565
    %2585 = vmatprep.subr.mxu0 0.0
    %2586 = vmatpush1.msra.mxu0 %v2566
    %2587 = vmatprep.subr.mxu0 0.0
    %2588 = vmatpush1.msra.mxu0 %v2567
    %2589 = vmatprep.subr.mxu0 0.0
    %2590 = vmatpush1.msra.mxu0 0.0
    %2591 = vmatprep.subr.mxu0 0.0
    %2592 = vmatpush1.msra.mxu0 0.0
    %2593 = vmatprep.subr.mxu0 0.0
    %2594 = vmatpush1.msra.mxu0 0.0
    %2595 = vmatprep.subr.mxu0 0.0
    %2596 = vmatpush1.msra.mxu0 0.0
    %2597 = vmatprep.subr.mxu0 0.0
    %2598 = vmatpush1.msra.mxu0 0.0
    %2599 = vmatprep.subr.mxu0 0.0
    %2600 = vmatpush1.msra.mxu0 0.0
    %2601 = vmatprep.subr.mxu0 0.0
    %2602 = vmatpush1.msra.mxu0 0.0
    %2603 = vmatprep.subr.mxu0 0.0
    %2604 = vmatpush1.msra.mxu0 0.0
    %2605 = vmatprep.subr.mxu0 0.0
    %2606 = vmatpush1.msra.mxu0 0.0
    %2607 = vmatprep.subr.mxu0 0.0
    %2608 = vmatpush1.msra.mxu0 0.0
    %2609 = vmatprep.subr.mxu0 0.0
    %2610 = vmatpush1.msra.mxu0 0.0
    %2611 = vmatprep.subr.mxu0 0.0
    %2612 = vmatpush1.msra.mxu0 0.0
    %2613 = vmatprep.subr.mxu0 0.0
    %2614 = vmatpush1.msra.mxu0 0.0
    %2615 = vmatprep.subr.mxu0 0.0
    %2616 = vmatpush1.msra.mxu0 0.0
    %2617 = vmatprep.subr.mxu0 0.0
    %2618 = vmatpush1.msra.mxu0 0.0
    %2619 = vmatprep.subr.mxu0 0.0
    %2620 = vmatpush1.msra.mxu0 0.0
    %2621 = vmatprep.subr.mxu0 0.0
    %2622 = vmatpush1.msra.mxu0 0.0
    %2623 = vmatprep.subr.mxu0 0.0
    %2624 = vmatpush1.msra.mxu0 0.0
    %2625 = vmatprep.subr.mxu0 0.0
    %2626 = vmatpush1.msra.mxu0 0.0
    %2627 = vmatprep.subr.mxu0 0.0
    %2628 = vmatpush1.msra.mxu0 0.0
    %2629 = vmatprep.subr.mxu0 0.0
    %2630 = vmatpush1.msra.mxu0 0.0
    %2631 = vmatprep.subr.mxu0 0.0
    %2632 = vmatpush1.msra.mxu0 0.0
    %2633 = vmatprep.subr.mxu0 0.0
    %2634 = vmatpush1.msra.mxu0 0.0
    %2635 = vmatprep.subr.mxu0 0.0
    %2636 = vmatpush1.msra.mxu0 0.0
    %2637 = vmatprep.subr.mxu0 0.0
    %2638 = vmatpush1.msra.mxu0 0.0
    %2639 = vmatprep.subr.mxu0 0.0
    %2640 = vmatpush1.msra.mxu0 0.0
    %2641 = vmatprep.subr.mxu0 0.0
    %2642 = vmatpush1.msra.mxu0 0.0
    %2643 = vmatprep.subr.mxu0 0.0
    %2644 = vmatpush1.msra.mxu0 0.0
    %2645 = vmatprep.mubr.f32.mxu0 0.0
    %2646 = vmatmul.mubr.f32.gmra.mrb[0].mxu0 %v2576
    %v2647 = vpop.f32.mrb[0].mxu0
    %v2648 = vadd.f32 %v2573, %v2647
    %v2649 = vpop.f32.mrb[0].mxu0
    %2650 = vmatprep.mubr.f32.mxu0 0.0
    %2651 = vmatmul.mubr.f32.gmra.mrb[0].mxu0 %v2579
    %v2652 = vpop.f32.mrb[0].mxu0
    %v2653 = vadd.f32 %v2573, %v2652
    %v2654 = vpop.f32.mrb[0].mxu0
    %2655 = vdwg.mxu0
    %v2656 = vmax.f32 %v2648, 0.0
    %v2657 = vmax.f32 %v2653, 0.0
    %v2658 = vld [vmem:[%s14] sm:$0xff]
    %v2659 = vld [vmem:[%s14 + $0x8] sm:$0xff]
    %v2660 = vld [vmem:[%s14 + $0x10] sm:$0xff]
    %v2661 = vld [vmem:[%s14 + $0x18] sm:$0xff]
    %v2662 = vld [vmem:[%s15] sm:$0x1]
    %v2664 = vlaneseq
    %v2665 = vshrl.u32 %v2664, 7
    %v2666 = vsub.s32 0, %v2665
    %v2667 = vrot.slane %v2662, %v2666
    %v2670 = vsel %vm1263, %v2656, 0
    %v2673 = vsel %vm1263, %v2657, 0
    %2675 = vmatprep.subr.mxu0 0.0
    %2676 = vmatpush1.msra.mxu0 %v2658
    %2677 = vmatprep.subr.mxu0 0.0
    %2678 = vmatpush1.msra.mxu0 %v2659
    %2679 = vmatprep.subr.mxu0 0.0
    %2680 = vmatpush1.msra.mxu0 %v2660
    %2681 = vmatprep.subr.mxu0 0.0
    %2682 = vmatpush1.msra.mxu0 %v2661
    %2683 = vmatprep.subr.mxu0 0.0
    %2684 = vmatpush1.msra.mxu0 0.0
    %2685 = vmatprep.subr.mxu0 0.0
    %2686 = vmatpush1.msra.mxu0 0.0
    %2687 = vmatprep.subr.mxu0 0.0
    %2688 = vmatpush1.msra.mxu0 0.0
    %2689 = vmatprep.subr.mxu0 0.0
    %2690 = vmatpush1.msra.mxu0 0.0
    %2691 = vmatprep.subr.mxu0 0.0
    %2692 = vmatpush1.msra.mxu0 0.0
    %2693 = vmatprep.subr.mxu0 0.0
    %2694 = vmatpush1.msra.mxu0 0.0
    %2695 = vmatprep.subr.mxu0 0.0
    %2696 = vmatpush1.msra.mxu0 0.0
    %2697 = vmatprep.subr.mxu0 0.0
    %2698 = vmatpush1.msra.mxu0 0.0
    %2699 = vmatprep.subr.mxu0 0.0
    %2700 = vmatpush1.msra.mxu0 0.0
    %2701 = vmatprep.subr.mxu0 0.0
    %2702 = vmatpush1.msra.mxu0 0.0
    %2703 = vmatprep.subr.mxu0 0.0
    %2704 = vmatpush1.msra.mxu0 0.0
    %2705 = vmatprep.subr.mxu0 0.0
    %2706 = vmatpush1.msra.mxu0 0.0
    %2707 = vmatprep.subr.mxu0 0.0
    %2708 = vmatpush1.msra.mxu0 0.0
    %2709 = vmatprep.subr.mxu0 0.0
    %2710 = vmatpush1.msra.mxu0 0.0
    %2711 = vmatprep.subr.mxu0 0.0
    %2712 = vmatpush1.msra.mxu0 0.0
    %2713 = vmatprep.subr.mxu0 0.0
    %2714 = vmatpush1.msra.mxu0 0.0
    %2715 = vmatprep.subr.mxu0 0.0
    %2716 = vmatpush1.msra.mxu0 0.0
    %2717 = vmatprep.subr.mxu0 0.0
    %2718 = vmatpush1.msra.mxu0 0.0
    %2719 = vmatprep.subr.mxu0 0.0
    %2720 = vmatpush1.msra.mxu0 0.0
    %2721 = vmatprep.subr.mxu0 0.0
    %2722 = vmatpush1.msra.mxu0 0.0
    %2723 = vmatprep.subr.mxu0 0.0
    %2724 = vmatpush1.msra.mxu0 0.0
    %2725 = vmatprep.subr.mxu0 0.0
    %2726 = vmatpush1.msra.mxu0 0.0
    %2727 = vmatprep.subr.mxu0 0.0
    %2728 = vmatpush1.msra.mxu0 0.0
    %2729 = vmatprep.subr.mxu0 0.0
    %2730 = vmatpush1.msra.mxu0 0.0
    %2731 = vmatprep.subr.mxu0 0.0
    %2732 = vmatpush1.msra.mxu0 0.0
    %2733 = vmatprep.subr.mxu0 0.0
    %2734 = vmatpush1.msra.mxu0 0.0
    %2735 = vmatprep.subr.mxu0 0.0
    %2736 = vmatpush1.msra.mxu0 0.0
    %2737 = vmatprep.subr.mxu0 0.0
    %2738 = vmatpush1.msra.mxu0 0.0
    %2739 = vmatprep.mubr.f32.mxu0 0.0
    %2740 = vmatmul.mubr.f32.gmra.mrb[0].mxu0 %v2670
    %v2741 = vpop.f32.mrb[0].mxu0
    %v2742 = vadd.f32 %v2667, %v2741
    %v2743 = vpop.f32.mrb[0].mxu0
    %2744 = vmatprep.mubr.f32.mxu0 0.0
    %2745 = vmatmul.mubr.f32.gmra.mrb[0].mxu0 %v2673
    %v2746 = vpop.f32.mrb[0].mxu0
    %v2747 = vadd.f32 %v2667, %v2746
    %v2748 = vpop.f32.mrb[0].mxu0
    %2749 = vdwg.mxu0
    %v2750 = vmax.f32 %v2742, 0.0
    %v2751 = vmax.f32 %v2747, 0.0
    %v2753 = vsel %vm1263, %v2750, 0
    %v2756 = vsel %vm1263, %v2751, 0
    %2758 = vmatprep.subr.mxu0 0.0
    %2759 = vmatpush1.xpose.msra.mxu0 %v2753
    %2760 = vmatprep.subr.mxu0 0.0
    %2761 = vmatpush1.xpose.msra.mxu0 %v2756
    %2762 = vmatprep.subr.mxu0 0.0
    %2763 = vmatpush1.xpose.msra.mxu0 0.0
    %2764 = vmatprep.subr.mxu0 0.0
    %2765 = vmatpush1.xpose.msra.mxu0 0.0
    %2766 = vmatprep.subr.mxu0 0.0
    %2767 = vmatpush1.xpose.msra.mxu0 0.0
    %2768 = vmatprep.subr.mxu0 0.0
    %2769 = vmatpush1.xpose.msra.mxu0 0.0
    %2770 = vmatprep.subr.mxu0 0.0
    %2771 = vmatpush1.xpose.msra.mxu0 0.0
    %2772 = vmatprep.subr.mxu0 0.0
    %2773 = vmatpush1.xpose.msra.mxu0 0.0
    %2774 = vmatprep.subr.mxu0 0.0
    %2775 = vmatpush1.xpose.msra.mxu0 0.0
    %2776 = vmatprep.subr.mxu0 0.0
    %2777 = vmatpush1.xpose.msra.mxu0 0.0
    %2778 = vmatprep.subr.mxu0 0.0
    %2779 = vmatpush1.xpose.msra.mxu0 0.0
    %2780 = vmatprep.subr.mxu0 0.0
    %2781 = vmatpush1.xpose.msra.mxu0 0.0
    %2782 = vmatprep.subr.mxu0 0.0
    %2783 = vmatpush1.xpose.msra.mxu0 0.0
    %2784 = vmatprep.subr.mxu0 0.0
    %2785 = vmatpush1.xpose.msra.mxu0 0.0
    %2786 = vmatprep.subr.mxu0 0.0
    %2787 = vmatpush1.xpose.msra.mxu0 0.0
    %2788 = vmatprep.subr.mxu0 0.0
    %2789 = vmatpush1.xpose.msra.mxu0 0.0
    %2790 = vmatprep.subr.mxu0 0.0
    %2791 = vmatpush1.xpose.msra.mxu0 0.0
    %2792 = vmatprep.subr.mxu0 0.0
    %2793 = vmatpush1.xpose.msra.mxu0 0.0
    %2794 = vmatprep.subr.mxu0 0.0
    %2795 = vmatpush1.xpose.msra.mxu0 0.0
    %2796 = vmatprep.subr.mxu0 0.0
    %2797 = vmatpush1.xpose.msra.mxu0 0.0
    %2798 = vmatprep.subr.mxu0 0.0
    %2799 = vmatpush1.xpose.msra.mxu0 0.0
    %2800 = vmatprep.subr.mxu0 0.0
    %2801 = vmatpush1.xpose.msra.mxu0 0.0
    %2802 = vmatprep.subr.mxu0 0.0
    %2803 = vmatpush1.xpose.msra.mxu0 0.0
    %2804 = vmatprep.subr.mxu0 0.0
    %2805 = vmatpush1.xpose.msra.mxu0 0.0
    %2806 = vmatprep.subr.mxu0 0.0
    %2807 = vmatpush1.xpose.msra.mxu0 0.0
    %2808 = vmatprep.subr.mxu0 0.0
    %2809 = vmatpush1.xpose.msra.mxu0 0.0
    %2810 = vmatprep.subr.mxu0 0.0
    %2811 = vmatpush1.xpose.msra.mxu0 0.0
    %2812 = vmatprep.subr.mxu0 0.0
    %2813 = vmatpush1.xpose.msra.mxu0 0.0
    %2814 = vmatprep.subr.mxu0 0.0
    %2815 = vmatpush1.xpose.msra.mxu0 0.0
    %2816 = vmatprep.subr.mxu0 0.0
    %2817 = vmatpush1.xpose.msra.mxu0 0.0
    %2818 = vmatprep.subr.mxu0 0.0
    %2819 = vmatpush1.xpose.msra.mxu0 0.0
    %2820 = vmatprep.subr.mxu0 0.0
    %2821 = vmatpush1.xpose.msra.mxu0 0.0
    %2822 = vmatprep.mubr.f32.mxu0 0.0
    %2823 = vmatmul.mubr.f32.gmra.mrb[0].mxu0 %v2753
    %v2824 = vpop.f32.mrb[0].mxu0
    %v2825 = vadd.f32 0.0, %v2824
    %v2826 = vpop.f32.mrb[0].mxu0
    %2827 = vmatprep.mubr.f32.mxu0 0.0
    %2828 = vmatmul.mubr.f32.gmra.mrb[0].mxu0 %v2756
    %v2829 = vpop.f32.mrb[0].mxu0
    %v2830 = vadd.f32 0.0, %v2829
    %v2831 = vpop.f32.mrb[0].mxu0
    %2832 = vdwg.mxu0
    %v2833 = vmul.f32 %v2825, 2.0
    %v2834 = vmul.f32 %v2830, 2.0
    %v2835 = vlaneseq
    %v2836 = vshrl.u32 %v2835, 7
    %v2837 = vadd.s32 %v2836, 8
    %v2838 = vlaneseq
    %v2839 = vand.u32 %v2838, 127
    %vm2840 = vcmp.eq.s32.totalorder %v2836, %v2839
    %vm2841 = vcmp.eq.s32.totalorder %v2837, %v2839
    %v2842 = vsel %vm2840, 1e+09, 0.0
    %v2843 = vsel %vm2841, 1e+09, 0.0
    %v2844 = vsub.f32 %v2833, %v2842
    %v2845 = vsub.f32 %v2834, %v2843
    %vm2846 = vcmask 130048
    %v2847 = vsel %vm2846, %v2844, -inf
    %2848 = vmax.xlane.f32.xlu0 %v2847
    %v2849 = vpop.xlane.xlu0 %2848
    %v2850 = vsel %vm2846, %v2845, -inf
    %2851 = vmax.xlane.f32.xlu0 %v2850
    %v2852 = vpop.xlane.xlu0 %2851
    %v2853 = vsub.f32 %v2844, %v2849
    %v2854 = vsub.f32 %v2845, %v2852
    %v2855 = vmul.f32 %v2853, 1.442695
    %v2856 = vpow.pop %v2855
    %v2857 = vmul.f32 %v2854, 1.442695
    %v2858 = vpow.pop %v2857
    %v2859 = vsel %vm2846, %v2856, 0.0
    %2860 = vadd.xlane.f32.xlu0 %v2859
    %v2861 = vpop.xlane.xlu0 %2860
    %v2862 = vsel %vm2846, %v2858, 0.0
    %2863 = vadd.xlane.f32.xlu0 %v2862
    %v2864 = vpop.xlane.xlu0 %2863
    %v2865 = vlog2.pop %v2861
    %v2866 = vmul.f32 %v2865, 0.6931472
    %v2867 = vlog2.pop %v2864
    %v2868 = vmul.f32 %v2867, 0.6931472
    %v2869 = vadd.f32 %v2849, %v2866
    %v2870 = vadd.f32 %v2852, %v2868
    %vm2871 = vcmp.lt.s32.totalorder %v2836, 8
    %vm2872 = vcmp.lt.s32.totalorder %v2837, 8
    %v2873 = vadd.s32 %v2837, 8
    %v2874 = vsub.s32 %v2836, 8
    %v2875 = vsel %vm2871, %v2837, %v2874
    %v2876 = vsel %vm2872, %v2873, %v2836
    %vm2877 = vcmp.eq.s32.totalorder %v2839, %v2875
    %vm2878 = vcmp.eq.s32.totalorder %v2839, %v2876
    %v2879 = vsel %vm2877, %v2833, 0.0
    %v2880 = vsel %vm2878, %v2834, 0.0
    %v2881 = vsel %vm2846, %v2879, 0.0
    %2882 = vadd.xlane.f32.xlu0 %v2881
    %v2883 = vpop.xlane.xlu0 %2882
    %v2884 = vsel %vm2846, %v2880, 0.0
    %2885 = vadd.xlane.f32.xlu0 %v2884
    %v2886 = vpop.xlane.xlu0 %2885
    %v2887 = vsub.f32 %v2869, %v2883
    %v2888 = vsub.f32 %v2870, %v2886
    %v2889 = vadd.f32 %v2887, %v2888
    %v2890 = vrot.slane %v2889, 4
    %v2891 = vadd.f32 %v2889, %v2890
    %v2892 = vrot.slane %v2891, 2
    %v2893 = vadd.f32 %v2891, %v2892
    %v2894 = vrot.slane %v2893, 1
    %v2895 = vadd.f32 %v2893, %v2894
    %v2896 = vrcp.pop 8.0
    %v2897 = vmul.f32 %v2895, %v2896
    %vm2898 = vcmask 0
    %2899 = vst.msk [vmem:[#allocation4] sm:$0x1] %vm2898, %v2897
    // Predicated region
    $region66: #{solograph_contrastive_forward.1} parent=1 // pred_check
      _
    $region67: #{solograph_contrastive_forward.1} parent=1 // pred_check_branch
      %2901 = sbr.rel (0) target = $region69
    $region68: #{solograph_contrastive_forward.1} parent=1 // pred_region
      %s2903 = ssub.s32 16, 16
      %2904 = vsyncadd [#allocation5], %s2903
      %s2906 = sshll.u32 [#allocation4], 4
      %s2907 = int_to_ptr.vmem [resolvable:$true] %s2906
      %2909 = dma.vmem_to_hbm [thread:$0]  %s2907, 16, %s16, [#allocation5]
    $region69: #{solograph_contrastive_forward.1} parent=1 // pred_fallthru
      _
    // Predicated region
    $region70: #{solograph_contrastive_forward.1} parent=1 // pred_check
      _
    $region71: #{solograph_contrastive_forward.1} parent=1 // pred_check_branch
      %2911 = sbr.rel (0) target = $region73
    $region72: #{solograph_contrastive_forward.1} parent=1 // pred_region
      %2912 = dma.done [#allocation5], 16
    $region73: #{solograph_contrastive_forward.1} parent=1 // pred_fallthru
      _
    %2913 = vsyncpa [#allocation5], 1

</llo_original>
